<compile_context>
chip_gen: v7x
topology: tpu7x:2x2x1
jax: 0.10.0
libtpu: 0.0.40
codegen_flags: <defaults>
</compile_context>

<pallas_src>
import functools

import jax
import jax.numpy as jnp
from jax.experimental import pallas as pl
from jax.experimental.pallas import tpu as pltpu

LN_EPS = 1e-5                 # nn.LayerNorm default eps
# TODO(synk): activation comes from cfg.nn.mlp.activation; ReLU assumed.  The padded
# LayerNorm trick below requires a zero-preserving activation (ReLU/GELU/SiLU ok).
ACT = jax.nn.relu

LANE = 128
SUBLANE_BF16 = 16             # bf16 vregs are (16, 128) -> 16-row batch granule


def _round_up(n, m):
    return (n + m - 1) // m * m


def _pad_last_dims(a, *tgt):
    """Zero-pad the trailing len(tgt) dims of `a` up to the given sizes."""
    pad = [(0, 0)] * (a.ndim - len(tgt))
    for dim, t in zip(a.shape[-len(tgt):], tgt):
        pad.append((0, t - dim))
    return jnp.pad(a, pad)


# --------------------------------------------------------------------------- kernels

def _layernorm(x, g, b, inv_hidden, n_pad):
    # Two-pass (centered) variance for numerical robustness.  Pad columns of x are
    # exactly zero, so each contributes exactly mu^2 to sum((x-mu)^2); subtract that
    # instead of masking.  Zero-padded gamma/beta keep the pad columns exactly zero.
    mu = jnp.sum(x, axis=-1, keepdims=True) * inv_hidden
    xc = x - mu
    var = (jnp.sum(xc * xc, axis=-1, keepdims=True) - n_pad * mu * mu) * inv_hidden
    return xc * jax.lax.rsqrt(var + LN_EPS) * g + b


def _residual_block(h, ln_g, ln_b, w1, b1, w2, b2, inv_hidden, n_pad):
    # x + W2(act(W1(LN(x))));  Dropout(0.0) == identity.
    y = _layernorm(h, ln_g, ln_b, inv_hidden, n_pad)
    y = ACT(jnp.dot(y.astype(jnp.bfloat16), w1, preferred_element_type=jnp.float32) + b1)
    y = jnp.dot(y.astype(jnp.bfloat16), w2, preferred_element_type=jnp.float32) + b2
    return h + y


def _resident_kernel(x_ref, w_in_ref, b_in_ref, ln_g_ref, ln_b_ref,
                     w1_ref, b1_ref, w2_ref, b2_ref, w_head_ref, b_head_ref,
                     out_ref, *, depth, inv_hidden, n_pad, unroll):
    """1-D batch grid; all weights resident in VMEM for the whole kernel."""
    h = ACT(jnp.dot(x_ref[...], w_in_ref[...],
                    preferred_element_type=jnp.float32) + b_in_ref[...])

    def block(d, h):
        return _residual_block(h, ln_g_ref[d], ln_b_ref[d], w1_ref[d], b1_ref[d],
                               w2_ref[d], b2_ref[d], inv_hidden, n_pad)

    if unroll:                       # small depth: full unroll (LLO sees everything)
        for d in range(depth):
            h = block(d, h)
    else:                            # large depth: compact body, bounded live ranges
        h = jax.lax.fori_loop(0, depth, block, h)

    out = jnp.dot(h.astype(jnp.bfloat16), w_head_ref[...],
                  preferred_element_type=jnp.float32) + b_head_ref[...]
    out_ref[...] = out.astype(out_ref.dtype)


def _streamed_kernel(x_ref, w_in_ref, b_in_ref, ln_g_ref, ln_b_ref,
                     w1_ref, b1_ref, w2_ref, b2_ref, w_head_ref, b_head_ref,
                     out_ref, h_ref, *, inv_hidden, n_pad):
    """(batch, depth) grid; per-block weights streamed (pipeline double-buffers them),
    running activation h kept in a per-core VMEM scratch accumulator."""
    d = pl.program_id(1)

    @pl.when(d == 0)
    def _():
        h_ref[...] = ACT(jnp.dot(x_ref[...], w_in_ref[...],
                                 preferred_element_type=jnp.float32) + b_in_ref[...])

    h = _residual_block(h_ref[...], ln_g_ref[0], ln_b_ref[0], w1_ref[0], b1_ref[0],
                        w2_ref[0], b2_ref[0], inv_hidden, n_pad)
    h_ref[...] = h

    @pl.when(d == pl.num_programs(1) - 1)
    def _():
        out = jnp.dot(h.astype(jnp.bfloat16), w_head_ref[...],
                      preferred_element_type=jnp.float32) + b_head_ref[...]
        out_ref[...] = out.astype(out_ref.dtype)


# --------------------------------------------------------------------------- wrapper

def prepare_params(params, depth):
    """Pad/cast parameters ONCE at setup (hoisted out of the per-forward hot path)."""
    input_dim, hidden = params["w_in"].shape
    expansion = params["w1"].shape[-1]
    out_dim = params["w_head"].shape[-1]
    in_p, h_p = _round_up(input_dim, LANE), _round_up(hidden, LANE)
    e_p, o_p = _round_up(expansion, LANE), _round_up(out_dim, LANE)
    bf16, f32 = jnp.bfloat16, jnp.float32
    # TODO(synk): on v7x, w1/w2 could be stored in fp8 (upcast at the MXU input) to
    # halve resident weight VMEM; not done here.
    prepped = dict(
        w_in=_pad_last_dims(params["w_in"].astype(bf16), in_p, h_p),
        b_in=_pad_last_dims(params["b_in"].astype(f32), 1, h_p),
        ln_g=_pad_last_dims(params["ln_g"].astype(f32), 1, h_p),   # zero-padded gamma
        ln_b=_pad_last_dims(params["ln_b"].astype(f32), 1, h_p),
        w1=_pad_last_dims(params["w1"].astype(bf16), h_p, e_p),
        b1=_pad_last_dims(params["b1"].astype(f32), 1, e_p),
        w2=_pad_last_dims(params["w2"].astype(bf16), e_p, h_p),
        b2=_pad_last_dims(params["b2"].astype(f32), 1, h_p),
        w_head=_pad_last_dims(params["w_head"].astype(bf16), h_p, o_p),
        b_head=_pad_last_dims(params["b_head"].astype(f32), 1, o_p),
    )
    meta = dict(depth=depth, input_dim=input_dim, hidden=hidden, expansion=expansion,
                out_dim=out_dim, in_p=in_p, h_p=h_p, e_p=e_p, o_p=o_p)
    return prepped, meta


def _vmem_cap_bytes():
    try:
        return int(pltpu.get_tpu_info().vmem_capacity_bytes)
    except Exception:
        return 64 << 20          # conservative: v7x has 64 MiB / TensorCore


def residual_mlp(x, prepped, meta, *, tb=None, out_dtype=jnp.float32, stream_depth=None):
    depth = meta["depth"]
    assert depth >= 1, "depth must be >= 1"
    in_p, h_p, e_p, o_p = meta["in_p"], meta["h_p"], meta["e_p"], meta["o_p"]
    B = x.shape[0]

    # Batch tile: bf16 sublane granule (16) and, when possible, >= 2 tiles so the
    # "parallel" batch axis can shard across both v7x TensorCores.
    if tb is None:
        if B > SUBLANE_BF16:
            tb = min(512, _round_up(pl.cdiv(B, 2), SUBLANE_BF16))
        else:
            tb = _round_up(max(B, 1), SUBLANE_BF16)
    tb = max(SUBLANE_BF16, _round_up(tb, SUBLANE_BF16))
    b_p = _round_up(B, tb)
    nbt = b_p // tb

    out_itemsize = jnp.dtype(out_dtype).itemsize
    weight_bytes = sum(int(a.size) * a.dtype.itemsize for a in prepped.values())
    io_bytes = 2 * tb * in_p * 2 + 2 * tb * o_p * out_itemsize        # double-buffered
    interm_bytes = 4 * tb * max(h_p, e_p) * 4                         # f32 temporaries
    cap = _vmem_cap_bytes()
    resident_need = weight_bytes + io_bytes + interm_bytes

    # Resident weights when they fit comfortably; otherwise stream per-depth blocks.
    if stream_depth is None:
        stream_depth = resident_need > int(0.6 * cap)

    # Only the activations are padded/cast per call; weights were prepared at setup.
    x_p = _pad_last_dims(x.astype(jnp.bfloat16), b_p, in_p)

    flops = 2 * b_p * (in_p * h_p + depth * (h_p * e_p + e_p * h_p) + h_p * o_p)
    cost = pl.CostEstimate(
        flops=flops,
        transcendentals=b_p * depth,                                   # rsqrt per row/block
        bytes_accessed=weight_bytes + b_p * in_p * 2 + b_p * o_p * out_itemsize)

    ln_kwargs = dict(inv_hidden=1.0 / meta["hidden"],
                     n_pad=float(h_p - meta["hidden"]))

    def call(single_buffer_weights):
        def const_spec(shape):
            zeros = (0,) * len(shape)
            if single_buffer_weights:
                # Constant-index blocks never re-fetch; one buffer halves their VMEM.
                return pl.BlockSpec(shape, lambda *_: zeros, pipeline_mode=pl.Buffered(1))
            return pl.BlockSpec(shape, lambda *_: zeros)

        if not stream_depth:
            grid = (nbt,)
            in_specs = [
                pl.BlockSpec((tb, in_p), lambda i: (i, 0)),            # x (pipelined)
                const_spec((in_p, h_p)),                               # w_in
                const_spec((1, h_p)),                                  # b_in
                const_spec((depth, 1, h_p)),                           # ln_g
                const_spec((depth, 1, h_p)),                           # ln_b
                const_spec((depth, h_p, e_p)),                         # w1
                const_spec((depth, 1, e_p)),                           # b1
                const_spec((depth, e_p, h_p)),                         # w2
                const_spec((depth, 1, h_p)),                           # b2
                const_spec((h_p, o_p)),                                # w_head
                const_spec((1, o_p)),                                  # b_head
            ]
            out_specs = pl.BlockSpec((tb, o_p), lambda i: (i, 0))
            kernel = functools.partial(_resident_kernel, depth=depth,
                                       unroll=depth <= 8, **ln_kwargs)
            scratch = []
            dims = ("parallel",)
            vmem_need = resident_need
        else:
            grid = (nbt, depth)                                        # d innermost
            in_specs = [
                pl.BlockSpec((tb, in_p), lambda i, d: (i, 0)),         # x
                const_spec((in_p, h_p)),                               # w_in (resident)
                const_spec((1, h_p)),                                  # b_in
                pl.BlockSpec((1, 1, h_p), lambda i, d: (d, 0, 0)),     # ln_g  (streamed)
                pl.BlockSpec((1, 1, h_p), lambda i, d: (d, 0, 0)),     # ln_b
                pl.BlockSpec((1, h_p, e_p), lambda i, d: (d, 0, 0)),   # w1
                pl.BlockSpec((1, 1, e_p), lambda i, d: (d, 0, 0)),     # b1
                pl.BlockSpec((1, e_p, h_p), lambda i, d: (d, 0, 0)),   # w2
                pl.BlockSpec((1, 1, h_p), lambda i, d: (d, 0, 0)),     # b2
                const_spec((h_p, o_p)),                                # w_head (resident)
                const_spec((1, o_p)),                                  # b_head
            ]
            out_specs = pl.BlockSpec((tb, o_p), lambda i, d: (i, 0))
            kernel = functools.partial(_streamed_kernel, **ln_kwargs)
            scratch = [pltpu.VMEM((tb, h_p), jnp.float32)]             # running h
            dims = ("parallel", "arbitrary")
            per_block = 2 * ((h_p * e_p + e_p * h_p) * 2 + (e_p + 3 * h_p) * 4)
            head = (in_p * h_p + h_p * o_p) * 2 + 2 * (h_p + o_p) * 4
            vmem_need = head + per_block + io_bytes + tb * h_p * 4 + interm_bytes

        vmem_limit = int(min(max(int(vmem_need * 1.5), 32 << 20), int(cap * 0.9)))

        out_padded = pl.pallas_call(
            kernel,
            out_shape=jax.ShapeDtypeStruct((b_p, o_p), out_dtype),
            grid=grid,
            in_specs=in_specs,
            out_specs=out_specs,
            scratch_shapes=scratch,
            compiler_params=pltpu.CompilerParams(
                dimension_semantics=dims,
                vmem_limit_bytes=vmem_limit,
            ),
            cost_estimate=cost,
        )(x_p, prepped["w_in"], prepped["b_in"], prepped["ln_g"], prepped["ln_b"],
          prepped["w1"], prepped["b1"], prepped["w2"], prepped["b2"],
          prepped["w_head"], prepped["b_head"])
        return out_padded

    try:
        out_padded = jax.block_until_ready(call(single_buffer_weights=True))
    except Exception:
        # pipeline_mode=pl.Buffered(1) unsupported on this JAX version -> fall back
        # to default (double) buffering for the constant-index weight blocks.
        out_padded = call(single_buffer_weights=False)

    return out_padded[:B, :meta["out_dim"]]


# --------------------------------------------------------------------- init & reference

def init_params(key, input_dim, hidden_dim, expansion_dim, output_dim, depth):
    """Deterministic synthetic init (scaled normals stand in for orthogonal_)."""
    # TODO(synk): torch.nn.init.orthogonal_ not replicated; init-only, forward unaffected.
    ks = jax.random.split(key, 4)

    def lin_w(k, fan_in, fan_out, std):
        return jax.random.normal(k, (fan_in, fan_out), jnp.float32) * (std / jnp.sqrt(fan_in))

    w_in = lin_w(ks[0], input_dim, hidden_dim, 1.0 / hidden_dim)
    b_in = jnp.zeros((1, hidden_dim), jnp.float32)                     # bias_const = 0.0

    k1s = jax.random.split(ks[1], depth)
    k2s = jax.random.split(ks[2], depth)
    w1 = jnp.stack([lin_w(k, hidden_dim, expansion_dim, 1.0 / expansion_dim) for k in k1s])
    w2 = jnp.stack([lin_w(k, expansion_dim, hidden_dim, 1.0 / hidden_dim) for k in k2s])
    b1 = jnp.zeros((depth, 1, expansion_dim), jnp.float32)
    b2 = jnp.zeros((depth, 1, hidden_dim), jnp.float32)
    ln_g = jnp.ones((depth, 1, hidden_dim), jnp.float32)
    ln_b = jnp.zeros((depth, 1, hidden_dim), jnp.float32)

    w_head = lin_w(ks[3], hidden_dim, output_dim, 1.0 / output_dim)
    b_head = jnp.zeros((1, output_dim), jnp.float32)

    return dict(w_in=w_in, b_in=b_in, ln_g=ln_g, ln_b=ln_b,
                w1=w1, b1=b1, w2=w2, b2=b2, w_head=w_head, b_head=b_head)


def _layernorm_ref(x, g, b):
    mu = jnp.mean(x, axis=-1, keepdims=True)
    var = jnp.mean(jnp.square(x - mu), axis=-1, keepdims=True)
    return (x - mu) * jax.lax.rsqrt(var + LN_EPS) * g + b


def residual_mlp_reference(x, p, depth):
    """Pure-JAX reference mirroring the kernel's precision policy (bf16 MXU, f32 accum)."""
    bf16 = jnp.bfloat16

    def mm(a, w):
        return jnp.dot(a.astype(bf16), w.astype(bf16), preferred_element_type=jnp.float32)

    h = ACT(mm(x, p["w_in"]) + p["b_in"])
    for d in range(depth):
        y = _layernorm_ref(h, p["ln_g"][d], p["ln_b"][d])
        y = ACT(mm(y, p["w1"][d]) + p["b1"][d])
        y = mm(y, p["w2"][d]) + p["b2"][d]
        h = h + y
    return mm(h, p["w_head"]) + p["b_head"]


if __name__ == "__main__":
    B, INPUT_DIM, HIDDEN_DIM, EXPANSION_DIM, OUTPUT_DIM, DEPTH = 64, 16, 32, 64, 8, 2

    key = jax.random.PRNGKey(0)
    kx, kp = jax.random.split(key)
    x = jax.random.normal(kx, (B, INPUT_DIM), jnp.float32)
    params = init_params(kp, INPUT_DIM, HIDDEN_DIM, EXPANSION_DIM, OUTPUT_DIM, DEPTH)

    # Padding/casting of weights done once at setup (hoisted out of the hot path).
    prepped, meta = prepare_params(params, DEPTH)

    ref = residual_mlp_reference(x, params, DEPTH)

    # Resident-weight path (default for small models).  B=64 -> tb=32 -> 2 batch tiles.
    out = jax.block_until_ready(residual_mlp(x, prepped, meta, stream_depth=False))
    assert out.shape == (B, OUTPUT_DIM)
    assert jnp.allclose(out, ref, rtol=1e-2, atol=2e-4), "resident path mismatch vs reference"

    # Depth-streamed path (auto-selected when resident weights would overflow VMEM,
    # e.g. large models on v7x's 64 MiB/TC); exercised here for correctness.
    out_s = jax.block_until_ready(residual_mlp(x, prepped, meta, stream_depth=True))
    assert out_s.shape == (B, OUTPUT_DIM)
    assert jnp.allclose(out_s, ref, rtol=1e-2, atol=2e-4), "streamed path mismatch vs reference"

    print("KERNEL_OK")
</pallas_src>

<mosaic_0001>
module attributes {stable_mosaic.version = 11 : i64} {
  func.func @_resident_kernel(%arg0: i32, %arg1: memref<32x128xbf16, #tpu.memory_space<vmem>>, %arg2: memref<128x128xbf16, #tpu.memory_space<vmem>>, %arg3: memref<1x128xf32, #tpu.memory_space<vmem>>, %arg4: memref<2x1x128xf32, #tpu.memory_space<vmem>>, %arg5: memref<2x1x128xf32, #tpu.memory_space<vmem>>, %arg6: memref<2x128x128xbf16, #tpu.memory_space<vmem>>, %arg7: memref<2x1x128xf32, #tpu.memory_space<vmem>>, %arg8: memref<2x128x128xbf16, #tpu.memory_space<vmem>>, %arg9: memref<2x1x128xf32, #tpu.memory_space<vmem>>, %arg10: memref<128x128xbf16, #tpu.memory_space<vmem>>, %arg11: memref<1x128xf32, #tpu.memory_space<vmem>>, %arg12: memref<32x128xf32, #tpu.memory_space<vmem>>) attributes {dimension_semantics = [#tpu.dimension_semantics<parallel>], iteration_bounds = array<i64: 2>, scalar_prefetch = 0 : i64, scratch_operands = 0 : i64, tpu.core_type = #tpu.core_type<tc>, window_params = [{transform_indices = @transform_0, window_bounds = array<i64: 32, 128>}, {pipeline_mode = #tpu.pipeline_mode<synchronous>, transform_indices = @transform_1, window_bounds = array<i64: 128, 128>}, {pipeline_mode = #tpu.pipeline_mode<synchronous>, transform_indices = @transform_2, window_bounds = array<i64: 1, 128>}, {pipeline_mode = #tpu.pipeline_mode<synchronous>, transform_indices = @transform_3, window_bounds = array<i64: 2, 1, 128>}, {pipeline_mode = #tpu.pipeline_mode<synchronous>, transform_indices = @transform_4, window_bounds = array<i64: 2, 1, 128>}, {pipeline_mode = #tpu.pipeline_mode<synchronous>, transform_indices = @transform_5, window_bounds = array<i64: 2, 128, 128>}, {pipeline_mode = #tpu.pipeline_mode<synchronous>, transform_indices = @transform_6, window_bounds = array<i64: 2, 1, 128>}, {pipeline_mode = #tpu.pipeline_mode<synchronous>, transform_indices = @transform_7, window_bounds = array<i64: 2, 128, 128>}, {pipeline_mode = #tpu.pipeline_mode<synchronous>, transform_indices = @transform_8, window_bounds = array<i64: 2, 1, 128>}, {pipeline_mode = #tpu.pipeline_mode<synchronous>, transform_indices = @transform_9, window_bounds = array<i64: 128, 128>}, {pipeline_mode = #tpu.pipeline_mode<synchronous>, transform_indices = @transform_10, window_bounds = array<i64: 1, 128>}, {transform_indices = @transform_11, window_bounds = array<i64: 32, 128>}]} {
    %c0 = arith.constant 0 : index
    %c0_0 = arith.constant 0 : index
    %0 = vector.load %arg1[%c0, %c0_0] : memref<32x128xbf16, #tpu.memory_space<vmem>>, vector<32x128xbf16>
    %c0_1 = arith.constant 0 : index
    %c0_2 = arith.constant 0 : index
    %1 = vector.load %arg2[%c0_1, %c0_2] : memref<128x128xbf16, #tpu.memory_space<vmem>>, vector<128x128xbf16>
    %cst = arith.constant dense<0.000000e+00> : vector<32x128xf32>
    %2 = tpu.matmul %0, %1, %cst {dimension_numbers = #tpu.dot_dimension_numbers<[1], [0], [0], [1], [0, 0, 1, 1], [], []>} : vector<32x128xbf16>, vector<128x128xbf16>, vector<32x128xf32> -> vector<32x128xf32>
    %c0_3 = arith.constant 0 : index
    %c0_4 = arith.constant 0 : index
    %3 = vector.load %arg3[%c0_3, %c0_4] : memref<1x128xf32, #tpu.memory_space<vmem>>, vector<1x128xf32>
    %4 = vector.broadcast %3 : vector<1x128xf32> to vector<32x128xf32>
    %5 = arith.addf %2, %4 : vector<32x128xf32>
    %cst_5 = arith.constant 0.000000e+00 : f32
    %6 = vector.broadcast %cst_5 : f32 to vector<32x128xf32>
    %7 = arith.maximumf %5, %6 : vector<32x128xf32>
    %c0_6 = arith.constant 0 : index
    %c0_7 = arith.constant 0 : index
    %c0_8 = arith.constant 0 : index
    %8 = vector.load %arg4[%c0_6, %c0_7, %c0_8] : memref<2x1x128xf32, #tpu.memory_space<vmem>>, vector<1x1x128xf32>
    %9 = vector.shape_cast %8 : vector<1x1x128xf32> to vector<1x128xf32>
    %c0_9 = arith.constant 0 : index
    %c0_10 = arith.constant 0 : index
    %c0_11 = arith.constant 0 : index
    %10 = vector.load %arg5[%c0_9, %c0_10, %c0_11] : memref<2x1x128xf32, #tpu.memory_space<vmem>>, vector<1x1x128xf32>
    %11 = vector.shape_cast %10 : vector<1x1x128xf32> to vector<1x128xf32>
    %c0_12 = arith.constant 0 : index
    %c0_13 = arith.constant 0 : index
    %c0_14 = arith.constant 0 : index
    %12 = vector.load %arg6[%c0_12, %c0_13, %c0_14] : memref<2x128x128xbf16, #tpu.memory_space<vmem>>, vector<1x128x128xbf16>
    %13 = vector.shape_cast %12 : vector<1x128x128xbf16> to vector<128x128xbf16>
    %c0_15 = arith.constant 0 : index
    %c0_16 = arith.constant 0 : index
    %c0_17 = arith.constant 0 : index
    %14 = vector.load %arg7[%c0_15, %c0_16, %c0_17] : memref<2x1x128xf32, #tpu.memory_space<vmem>>, vector<1x1x128xf32>
    %15 = vector.shape_cast %14 : vector<1x1x128xf32> to vector<1x128xf32>
    %c0_18 = arith.constant 0 : index
    %c0_19 = arith.constant 0 : index
    %c0_20 = arith.constant 0 : index
    %16 = vector.load %arg8[%c0_18, %c0_19, %c0_20] : memref<2x128x128xbf16, #tpu.memory_space<vmem>>, vector<1x128x128xbf16>
    %17 = vector.shape_cast %16 : vector<1x128x128xbf16> to vector<128x128xbf16>
    %c0_21 = arith.constant 0 : index
    %c0_22 = arith.constant 0 : index
    %c0_23 = arith.constant 0 : index
    %18 = vector.load %arg9[%c0_21, %c0_22, %c0_23] : memref<2x1x128xf32, #tpu.memory_space<vmem>>, vector<1x1x128xf32>
    %19 = vector.shape_cast %18 : vector<1x1x128xf32> to vector<1x128xf32>
    %cst_24 = arith.constant dense<0.000000e+00> : vector<32xf32>
    %20 = vector.multi_reduction <add>, %7, %cst_24 [1] : vector<32x128xf32> to vector<32xf32>
    %21 = vector.shape_cast %20 : vector<32xf32> to vector<32x1xf32>
    %cst_25 = arith.constant 3.125000e-02 : f32
    %22 = vector.broadcast %cst_25 : f32 to vector<32x1xf32>
    %23 = arith.mulf %21, %22 : vector<32x1xf32>
    %24 = vector.broadcast %23 : vector<32x1xf32> to vector<32x128xf32>
    %25 = arith.subf %7, %24 : vector<32x128xf32>
    %26 = arith.mulf %25, %25 : vector<32x128xf32>
    %cst_26 = arith.constant dense<0.000000e+00> : vector<32xf32>
    %27 = vector.multi_reduction <add>, %26, %cst_26 [1] : vector<32x128xf32> to vector<32xf32>
    %28 = vector.shape_cast %27 : vector<32xf32> to vector<32x1xf32>
    %cst_27 = arith.constant 9.600000e+01 : f32
    %29 = vector.broadcast %cst_27 : f32 to vector<32x1xf32>
    %30 = arith.mulf %29, %23 : vector<32x1xf32>
    %31 = arith.mulf %30, %23 : vector<32x1xf32>
    %32 = arith.subf %28, %31 : vector<32x1xf32>
    %cst_28 = arith.constant 3.125000e-02 : f32
    %33 = vector.broadcast %cst_28 : f32 to vector<32x1xf32>
    %34 = arith.mulf %32, %33 : vector<32x1xf32>
    %cst_29 = arith.constant 9.99999974E-6 : f32
    %35 = vector.broadcast %cst_29 : f32 to vector<32x1xf32>
    %36 = arith.addf %34, %35 : vector<32x1xf32>
    %37 = math.rsqrt %36 : vector<32x1xf32>
    %38 = vector.broadcast %37 : vector<32x1xf32> to vector<32x128xf32>
    %39 = arith.mulf %25, %38 : vector<32x128xf32>
    %40 = vector.broadcast %9 : vector<1x128xf32> to vector<32x128xf32>
    %41 = arith.mulf %39, %40 : vector<32x128xf32>
    %42 = vector.broadcast %11 : vector<1x128xf32> to vector<32x128xf32>
    %43 = arith.addf %41, %42 : vector<32x128xf32>
    %44 = arith.truncf %43 : vector<32x128xf32> to vector<32x128xbf16>
    %cst_30 = arith.constant dense<0.000000e+00> : vector<32x128xf32>
    %45 = tpu.matmul %44, %13, %cst_30 {dimension_numbers = #tpu.dot_dimension_numbers<[1], [0], [0], [1], [0, 0, 1, 1], [], []>} : vector<32x128xbf16>, vector<128x128xbf16>, vector<32x128xf32> -> vector<32x128xf32>
    %46 = vector.broadcast %15 : vector<1x128xf32> to vector<32x128xf32>
    %47 = arith.addf %45, %46 : vector<32x128xf32>
    %cst_31 = arith.constant 0.000000e+00 : f32
    %48 = vector.broadcast %cst_31 : f32 to vector<32x128xf32>
    %49 = arith.maximumf %47, %48 : vector<32x128xf32>
    %50 = arith.truncf %49 : vector<32x128xf32> to vector<32x128xbf16>
    %cst_32 = arith.constant dense<0.000000e+00> : vector<32x128xf32>
    %51 = tpu.matmul %50, %17, %cst_32 {dimension_numbers = #tpu.dot_dimension_numbers<[1], [0], [0], [1], [0, 0, 1, 1], [], []>} : vector<32x128xbf16>, vector<128x128xbf16>, vector<32x128xf32> -> vector<32x128xf32>
    %52 = vector.broadcast %19 : vector<1x128xf32> to vector<32x128xf32>
    %53 = arith.addf %51, %52 : vector<32x128xf32>
    %54 = arith.addf %7, %53 : vector<32x128xf32>
    %c1 = arith.constant 1 : index
    %c0_33 = arith.constant 0 : index
    %c0_34 = arith.constant 0 : index
    %55 = vector.load %arg4[%c1, %c0_33, %c0_34] : memref<2x1x128xf32, #tpu.memory_space<vmem>>, vector<1x1x128xf32>
    %56 = vector.shape_cast %55 : vector<1x1x128xf32> to vector<1x128xf32>
    %c1_35 = arith.constant 1 : index
    %c0_36 = arith.constant 0 : index
    %c0_37 = arith.constant 0 : index
    %57 = vector.load %arg5[%c1_35, %c0_36, %c0_37] : memref<2x1x128xf32, #tpu.memory_space<vmem>>, vector<1x1x128xf32>
    %58 = vector.shape_cast %57 : vector<1x1x128xf32> to vector<1x128xf32>
    %c1_38 = arith.constant 1 : index
    %c0_39 = arith.constant 0 : index
    %c0_40 = arith.constant 0 : index
    %59 = vector.load %arg6[%c1_38, %c0_39, %c0_40] : memref<2x128x128xbf16, #tpu.memory_space<vmem>>, vector<1x128x128xbf16>
    %60 = vector.shape_cast %59 : vector<1x128x128xbf16> to vector<128x128xbf16>
    %c1_41 = arith.constant 1 : index
    %c0_42 = arith.constant 0 : index
    %c0_43 = arith.constant 0 : index
    %61 = vector.load %arg7[%c1_41, %c0_42, %c0_43] : memref<2x1x128xf32, #tpu.memory_space<vmem>>, vector<1x1x128xf32>
    %62 = vector.shape_cast %61 : vector<1x1x128xf32> to vector<1x128xf32>
    %c1_44 = arith.constant 1 : index
    %c0_45 = arith.constant 0 : index
    %c0_46 = arith.constant 0 : index
    %63 = vector.load %arg8[%c1_44, %c0_45, %c0_46] : memref<2x128x128xbf16, #tpu.memory_space<vmem>>, vector<1x128x128xbf16>
    %64 = vector.shape_cast %63 : vector<1x128x128xbf16> to vector<128x128xbf16>
    %c1_47 = arith.constant 1 : index
    %c0_48 = arith.constant 0 : index
    %c0_49 = arith.constant 0 : index
    %65 = vector.load %arg9[%c1_47, %c0_48, %c0_49] : memref<2x1x128xf32, #tpu.memory_space<vmem>>, vector<1x1x128xf32>
    %66 = vector.shape_cast %65 : vector<1x1x128xf32> to vector<1x128xf32>
    %cst_50 = arith.constant dense<0.000000e+00> : vector<32xf32>
    %67 = vector.multi_reduction <add>, %54, %cst_50 [1] : vector<32x128xf32> to vector<32xf32>
    %68 = vector.shape_cast %67 : vector<32xf32> to vector<32x1xf32>
    %cst_51 = arith.constant 3.125000e-02 : f32
    %69 = vector.broadcast %cst_51 : f32 to vector<32x1xf32>
    %70 = arith.mulf %68, %69 : vector<32x1xf32>
    %71 = vector.broadcast %70 : vector<32x1xf32> to vector<32x128xf32>
    %72 = arith.subf %54, %71 : vector<32x128xf32>
    %73 = arith.mulf %72, %72 : vector<32x128xf32>
    %cst_52 = arith.constant dense<0.000000e+00> : vector<32xf32>
    %74 = vector.multi_reduction <add>, %73, %cst_52 [1] : vector<32x128xf32> to vector<32xf32>
    %75 = vector.shape_cast %74 : vector<32xf32> to vector<32x1xf32>
    %cst_53 = arith.constant 9.600000e+01 : f32
    %76 = vector.broadcast %cst_53 : f32 to vector<32x1xf32>
    %77 = arith.mulf %76, %70 : vector<32x1xf32>
    %78 = arith.mulf %77, %70 : vector<32x1xf32>
    %79 = arith.subf %75, %78 : vector<32x1xf32>
    %cst_54 = arith.constant 3.125000e-02 : f32
    %80 = vector.broadcast %cst_54 : f32 to vector<32x1xf32>
    %81 = arith.mulf %79, %80 : vector<32x1xf32>
    %cst_55 = arith.constant 9.99999974E-6 : f32
    %82 = vector.broadcast %cst_55 : f32 to vector<32x1xf32>
    %83 = arith.addf %81, %82 : vector<32x1xf32>
    %84 = math.rsqrt %83 : vector<32x1xf32>
    %85 = vector.broadcast %84 : vector<32x1xf32> to vector<32x128xf32>
    %86 = arith.mulf %72, %85 : vector<32x128xf32>
    %87 = vector.broadcast %56 : vector<1x128xf32> to vector<32x128xf32>
    %88 = arith.mulf %86, %87 : vector<32x128xf32>
    %89 = vector.broadcast %58 : vector<1x128xf32> to vector<32x128xf32>
    %90 = arith.addf %88, %89 : vector<32x128xf32>
    %91 = arith.truncf %90 : vector<32x128xf32> to vector<32x128xbf16>
    %cst_56 = arith.constant dense<0.000000e+00> : vector<32x128xf32>
    %92 = tpu.matmul %91, %60, %cst_56 {dimension_numbers = #tpu.dot_dimension_numbers<[1], [0], [0], [1], [0, 0, 1, 1], [], []>} : vector<32x128xbf16>, vector<128x128xbf16>, vector<32x128xf32> -> vector<32x128xf32>
    %93 = vector.broadcast %62 : vector<1x128xf32> to vector<32x128xf32>
    %94 = arith.addf %92, %93 : vector<32x128xf32>
    %cst_57 = arith.constant 0.000000e+00 : f32
    %95 = vector.broadcast %cst_57 : f32 to vector<32x128xf32>
    %96 = arith.maximumf %94, %95 : vector<32x128xf32>
    %97 = arith.truncf %96 : vector<32x128xf32> to vector<32x128xbf16>
    %cst_58 = arith.constant dense<0.000000e+00> : vector<32x128xf32>
    %98 = tpu.matmul %97, %64, %cst_58 {dimension_numbers = #tpu.dot_dimension_numbers<[1], [0], [0], [1], [0, 0, 1, 1], [], []>} : vector<32x128xbf16>, vector<128x128xbf16>, vector<32x128xf32> -> vector<32x128xf32>
    %99 = vector.broadcast %66 : vector<1x128xf32> to vector<32x128xf32>
    %100 = arith.addf %98, %99 : vector<32x128xf32>
    %101 = arith.addf %54, %100 : vector<32x128xf32>
    %102 = arith.truncf %101 : vector<32x128xf32> to vector<32x128xbf16>
    %c0_59 = arith.constant 0 : index
    %c0_60 = arith.constant 0 : index
    %103 = vector.load %arg10[%c0_59, %c0_60] : memref<128x128xbf16, #tpu.memory_space<vmem>>, vector<128x128xbf16>
    %cst_61 = arith.constant dense<0.000000e+00> : vector<32x128xf32>
    %104 = tpu.matmul %102, %103, %cst_61 {dimension_numbers = #tpu.dot_dimension_numbers<[1], [0], [0], [1], [0, 0, 1, 1], [], []>} : vector<32x128xbf16>, vector<128x128xbf16>, vector<32x128xf32> -> vector<32x128xf32>
    %c0_62 = arith.constant 0 : index
    %c0_63 = arith.constant 0 : index
    %105 = vector.load %arg11[%c0_62, %c0_63] : memref<1x128xf32, #tpu.memory_space<vmem>>, vector<1x128xf32>
    %106 = vector.broadcast %105 : vector<1x128xf32> to vector<32x128xf32>
    %107 = arith.addf %104, %106 : vector<32x128xf32>
    %c0_64 = arith.constant 0 : index
    %c0_65 = arith.constant 0 : index
    %108 = vector.load %arg12[%c0_64, %c0_65] : memref<32x128xf32, #tpu.memory_space<vmem>>, vector<32x128xf32>
    tpu.vector_store %arg12[%c0_64, %c0_65], %107 {strides = array<i32>} : memref<32x128xf32, #tpu.memory_space<vmem>>, vector<32x128xf32>,
    return
  }
  func.func @transform_0(%arg0: i32) -> (i32, i32) {
    %c0_i32 = arith.constant 0 : i32
    %c0_i32_0 = arith.constant 0 : i32
    return %arg0, %c0_i32 : i32, i32
  }
  func.func @transform_1(%arg0: i32) -> (i32, i32) {
    %c0_i32 = arith.constant 0 : i32
    %c0_i32_0 = arith.constant 0 : i32
    %c0_i32_1 = arith.constant 0 : i32
    return %c0_i32, %c0_i32_0 : i32, i32
  }
  func.func @transform_2(%arg0: i32) -> (i32, i32) {
    %c0_i32 = arith.constant 0 : i32
    %c0_i32_0 = arith.constant 0 : i32
    %c0_i32_1 = arith.constant 0 : i32
    return %c0_i32, %c0_i32_0 : i32, i32
  }
  func.func @transform_3(%arg0: i32) -> (i32, i32, i32) {
    %c0_i32 = arith.constant 0 : i32
    %c0_i32_0 = arith.constant 0 : i32
    %c0_i32_1 = arith.constant 0 : i32
    %c0_i32_2 = arith.constant 0 : i32
    return %c0_i32, %c0_i32_0, %c0_i32_1 : i32, i32, i32
  }
  func.func @transform_4(%arg0: i32) -> (i32, i32, i32) {
    %c0_i32 = arith.constant 0 : i32
    %c0_i32_0 = arith.constant 0 : i32
    %c0_i32_1 = arith.constant 0 : i32
    %c0_i32_2 = arith.constant 0 : i32
    return %c0_i32, %c0_i32_0, %c0_i32_1 : i32, i32, i32
  }
  func.func @transform_5(%arg0: i32) -> (i32, i32, i32) {
    %c0_i32 = arith.constant 0 : i32
    %c0_i32_0 = arith.constant 0 : i32
    %c0_i32_1 = arith.constant 0 : i32
    %c0_i32_2 = arith.constant 0 : i32
    return %c0_i32, %c0_i32_0, %c0_i32_1 : i32, i32, i32
  }
  func.func @transform_6(%arg0: i32) -> (i32, i32, i32) {
    %c0_i32 = arith.constant 0 : i32
    %c0_i32_0 = arith.constant 0 : i32
    %c0_i32_1 = arith.constant 0 : i32
    %c0_i32_2 = arith.constant 0 : i32
    return %c0_i32, %c0_i32_0, %c0_i32_1 : i32, i32, i32
  }
  func.func @transform_7(%arg0: i32) -> (i32, i32, i32) {
    %c0_i32 = arith.constant 0 : i32
    %c0_i32_0 = arith.constant 0 : i32
    %c0_i32_1 = arith.constant 0 : i32
    %c0_i32_2 = arith.constant 0 : i32
    return %c0_i32, %c0_i32_0, %c0_i32_1 : i32, i32, i32
  }
  func.func @transform_8(%arg0: i32) -> (i32, i32, i32) {
    %c0_i32 = arith.constant 0 : i32
    %c0_i32_0 = arith.constant 0 : i32
    %c0_i32_1 = arith.constant 0 : i32
    %c0_i32_2 = arith.constant 0 : i32
    return %c0_i32, %c0_i32_0, %c0_i32_1 : i32, i32, i32
  }
  func.func @transform_9(%arg0: i32) -> (i32, i32) {
    %c0_i32 = arith.constant 0 : i32
    %c0_i32_0 = arith.constant 0 : i32
    %c0_i32_1 = arith.constant 0 : i32
    return %c0_i32, %c0_i32_0 : i32, i32
  }
  func.func @transform_10(%arg0: i32) -> (i32, i32) {
    %c0_i32 = arith.constant 0 : i32
    %c0_i32_0 = arith.constant 0 : i32
    %c0_i32_1 = arith.constant 0 : i32
    return %c0_i32, %c0_i32_0 : i32, i32
  }
  func.func @transform_11(%arg0: i32) -> (i32, i32) {
    %c0_i32 = arith.constant 0 : i32
    %c0_i32_0 = arith.constant 0 : i32
    return %arg0, %c0_i32 : i32, i32
  }
}

module attributes {stable_mosaic.version = 11 : i64} {
  func.func @_resident_kernel(%arg0: i32, %arg1: memref<32x128xbf16, #tpu.memory_space<vmem>>, %arg2: memref<128x128xbf16, #tpu.memory_space<vmem>>, %arg3: memref<1x128xf32, #tpu.memory_space<vmem>>, %arg4: memref<2x1x128xf32, #tpu.memory_space<vmem>>, %arg5: memref<2x1x128xf32, #tpu.memory_space<vmem>>, %arg6: memref<2x128x128xbf16, #tpu.memory_space<vmem>>, %arg7: memref<2x1x128xf32, #tpu.memory_space<vmem>>, %arg8: memref<2x128x128xbf16, #tpu.memory_space<vmem>>, %arg9: memref<2x1x128xf32, #tpu.memory_space<vmem>>, %arg10: memref<128x128xbf16, #tpu.memory_space<vmem>>, %arg11: memref<1x128xf32, #tpu.memory_space<vmem>>, %arg12: memref<32x128xf32, #tpu.memory_space<vmem>>) attributes {dimension_semantics = [#tpu.dimension_semantics<parallel>], iteration_bounds = array<i64: 2>, scalar_prefetch = 0 : i64, scratch_operands = 0 : i64, tpu.core_type = #tpu.core_type<tc>, window_params = [{transform_indices = @transform_0, window_bounds = array<i64: 32, 128>}, {pipeline_mode = #tpu.pipeline_mode<synchronous>, transform_indices = @transform_1, window_bounds = array<i64: 128, 128>}, {pipeline_mode = #tpu.pipeline_mode<synchronous>, transform_indices = @transform_2, window_bounds = array<i64: 1, 128>}, {pipeline_mode = #tpu.pipeline_mode<synchronous>, transform_indices = @transform_3, window_bounds = array<i64: 2, 1, 128>}, {pipeline_mode = #tpu.pipeline_mode<synchronous>, transform_indices = @transform_4, window_bounds = array<i64: 2, 1, 128>}, {pipeline_mode = #tpu.pipeline_mode<synchronous>, transform_indices = @transform_5, window_bounds = array<i64: 2, 128, 128>}, {pipeline_mode = #tpu.pipeline_mode<synchronous>, transform_indices = @transform_6, window_bounds = array<i64: 2, 1, 128>}, {pipeline_mode = #tpu.pipeline_mode<synchronous>, transform_indices = @transform_7, window_bounds = array<i64: 2, 128, 128>}, {pipeline_mode = #tpu.pipeline_mode<synchronous>, transform_indices = @transform_8, window_bounds = array<i64: 2, 1, 128>}, {pipeline_mode = #tpu.pipeline_mode<synchronous>, transform_indices = @transform_9, window_bounds = array<i64: 128, 128>}, {pipeline_mode = #tpu.pipeline_mode<synchronous>, transform_indices = @transform_10, window_bounds = array<i64: 1, 128>}, {transform_indices = @transform_11, window_bounds = array<i64: 32, 128>}]} {
    %c0 = arith.constant 0 : index
    %c0_0 = arith.constant 0 : index
    %0 = vector.load %arg1[%c0, %c0_0] : memref<32x128xbf16, #tpu.memory_space<vmem>>, vector<32x128xbf16>
    %c0_1 = arith.constant 0 : index
    %c0_2 = arith.constant 0 : index
    %1 = vector.load %arg2[%c0_1, %c0_2] : memref<128x128xbf16, #tpu.memory_space<vmem>>, vector<128x128xbf16>
    %cst = arith.constant dense<0.000000e+00> : vector<32x128xf32>
    %2 = tpu.matmul %0, %1, %cst {dimension_numbers = #tpu.dot_dimension_numbers<[1], [0], [0], [1], [0, 0, 1, 1], [], []>} : vector<32x128xbf16>, vector<128x128xbf16>, vector<32x128xf32> -> vector<32x128xf32>
    %c0_3 = arith.constant 0 : index
    %c0_4 = arith.constant 0 : index
    %3 = vector.load %arg3[%c0_3, %c0_4] : memref<1x128xf32, #tpu.memory_space<vmem>>, vector<1x128xf32>
    %4 = vector.broadcast %3 : vector<1x128xf32> to vector<32x128xf32>
    %5 = arith.addf %2, %4 : vector<32x128xf32>
    %cst_5 = arith.constant 0.000000e+00 : f32
    %6 = vector.broadcast %cst_5 : f32 to vector<32x128xf32>
    %7 = arith.maximumf %5, %6 : vector<32x128xf32>
    %c0_6 = arith.constant 0 : index
    %c0_7 = arith.constant 0 : index
    %c0_8 = arith.constant 0 : index
    %8 = vector.load %arg4[%c0_6, %c0_7, %c0_8] : memref<2x1x128xf32, #tpu.memory_space<vmem>>, vector<1x1x128xf32>
    %9 = vector.shape_cast %8 : vector<1x1x128xf32> to vector<1x128xf32>
    %c0_9 = arith.constant 0 : index
    %c0_10 = arith.constant 0 : index
    %c0_11 = arith.constant 0 : index
    %10 = vector.load %arg5[%c0_9, %c0_10, %c0_11] : memref<2x1x128xf32, #tpu.memory_space<vmem>>, vector<1x1x128xf32>
    %11 = vector.shape_cast %10 : vector<1x1x128xf32> to vector<1x128xf32>
    %c0_12 = arith.constant 0 : index
    %c0_13 = arith.constant 0 : index
    %c0_14 = arith.constant 0 : index
    %12 = vector.load %arg6[%c0_12, %c0_13, %c0_14] : memref<2x128x128xbf16, #tpu.memory_space<vmem>>, vector<1x128x128xbf16>
    %13 = vector.shape_cast %12 : vector<1x128x128xbf16> to vector<128x128xbf16>
    %c0_15 = arith.constant 0 : index
    %c0_16 = arith.constant 0 : index
    %c0_17 = arith.constant 0 : index
    %14 = vector.load %arg7[%c0_15, %c0_16, %c0_17] : memref<2x1x128xf32, #tpu.memory_space<vmem>>, vector<1x1x128xf32>
    %15 = vector.shape_cast %14 : vector<1x1x128xf32> to vector<1x128xf32>
    %c0_18 = arith.constant 0 : index
    %c0_19 = arith.constant 0 : index
    %c0_20 = arith.constant 0 : index
    %16 = vector.load %arg8[%c0_18, %c0_19, %c0_20] : memref<2x128x128xbf16, #tpu.memory_space<vmem>>, vector<1x128x128xbf16>
    %17 = vector.shape_cast %16 : vector<1x128x128xbf16> to vector<128x128xbf16>
    %c0_21 = arith.constant 0 : index
    %c0_22 = arith.constant 0 : index
    %c0_23 = arith.constant 0 : index
    %18 = vector.load %arg9[%c0_21, %c0_22, %c0_23] : memref<2x1x128xf32, #tpu.memory_space<vmem>>, vector<1x1x128xf32>
    %19 = vector.shape_cast %18 : vector<1x1x128xf32> to vector<1x128xf32>
    %cst_24 = arith.constant dense<0.000000e+00> : vector<32xf32>
    %20 = vector.multi_reduction <add>, %7, %cst_24 [1] : vector<32x128xf32> to vector<32xf32>
    %21 = vector.shape_cast %20 : vector<32xf32> to vector<32x1xf32>
    %cst_25 = arith.constant 3.125000e-02 : f32
    %22 = vector.broadcast %cst_25 : f32 to vector<32x1xf32>
    %23 = arith.mulf %21, %22 : vector<32x1xf32>
    %24 = vector.broadcast %23 : vector<32x1xf32> to vector<32x128xf32>
    %25 = arith.subf %7, %24 : vector<32x128xf32>
    %26 = arith.mulf %25, %25 : vector<32x128xf32>
    %cst_26 = arith.constant dense<0.000000e+00> : vector<32xf32>
    %27 = vector.multi_reduction <add>, %26, %cst_26 [1] : vector<32x128xf32> to vector<32xf32>
    %28 = vector.shape_cast %27 : vector<32xf32> to vector<32x1xf32>
    %cst_27 = arith.constant 9.600000e+01 : f32
    %29 = vector.broadcast %cst_27 : f32 to vector<32x1xf32>
    %30 = arith.mulf %29, %23 : vector<32x1xf32>
    %31 = arith.mulf %30, %23 : vector<32x1xf32>
    %32 = arith.subf %28, %31 : vector<32x1xf32>
    %cst_28 = arith.constant 3.125000e-02 : f32
    %33 = vector.broadcast %cst_28 : f32 to vector<32x1xf32>
    %34 = arith.mulf %32, %33 : vector<32x1xf32>
    %cst_29 = arith.constant 9.99999974E-6 : f32
    %35 = vector.broadcast %cst_29 : f32 to vector<32x1xf32>
    %36 = arith.addf %34, %35 : vector<32x1xf32>
    %37 = math.rsqrt %36 : vector<32x1xf32>
    %38 = vector.broadcast %37 : vector<32x1xf32> to vector<32x128xf32>
    %39 = arith.mulf %25, %38 : vector<32x128xf32>
    %40 = vector.broadcast %9 : vector<1x128xf32> to vector<32x128xf32>
    %41 = arith.mulf %39, %40 : vector<32x128xf32>
    %42 = vector.broadcast %11 : vector<1x128xf32> to vector<32x128xf32>
    %43 = arith.addf %41, %42 : vector<32x128xf32>
    %44 = arith.truncf %43 : vector<32x128xf32> to vector<32x128xbf16>
    %cst_30 = arith.constant dense<0.000000e+00> : vector<32x128xf32>
    %45 = tpu.matmul %44, %13, %cst_30 {dimension_numbers = #tpu.dot_dimension_numbers<[1], [0], [0], [1], [0, 0, 1, 1], [], []>} : vector<32x128xbf16>, vector<128x128xbf16>, vector<32x128xf32> -> vector<32x128xf32>
    %46 = vector.broadcast %15 : vector<1x128xf32> to vector<32x128xf32>
    %47 = arith.addf %45, %46 : vector<32x128xf32>
    %cst_31 = arith.constant 0.000000e+00 : f32
    %48 = vector.broadcast %cst_31 : f32 to vector<32x128xf32>
    %49 = arith.maximumf %47, %48 : vector<32x128xf32>
    %50 = arith.truncf %49 : vector<32x128xf32> to vector<32x128xbf16>
    %cst_32 = arith.constant dense<0.000000e+00> : vector<32x128xf32>
    %51 = tpu.matmul %50, %17, %cst_32 {dimension_numbers = #tpu.dot_dimension_numbers<[1], [0], [0], [1], [0, 0, 1, 1], [], []>} : vector<32x128xbf16>, vector<128x128xbf16>, vector<32x128xf32> -> vector<32x128xf32>
    %52 = vector.broadcast %19 : vector<1x128xf32> to vector<32x128xf32>
    %53 = arith.addf %51, %52 : vector<32x128xf32>
    %54 = arith.addf %7, %53 : vector<32x128xf32>
    %c1 = arith.constant 1 : index
    %c0_33 = arith.constant 0 : index
    %c0_34 = arith.constant 0 : index
    %55 = vector.load %arg4[%c1, %c0_33, %c0_34] : memref<2x1x128xf32, #tpu.memory_space<vmem>>, vector<1x1x128xf32>
    %56 = vector.shape_cast %55 : vector<1x1x128xf32> to vector<1x128xf32>
    %c1_35 = arith.constant 1 : index
    %c0_36 = arith.constant 0 : index
    %c0_37 = arith.constant 0 : index
    %57 = vector.load %arg5[%c1_35, %c0_36, %c0_37] : memref<2x1x128xf32, #tpu.memory_space<vmem>>, vector<1x1x128xf32>
    %58 = vector.shape_cast %57 : vector<1x1x128xf32> to vector<1x128xf32>
    %c1_38 = arith.constant 1 : index
    %c0_39 = arith.constant 0 : index
    %c0_40 = arith.constant 0 : index
    %59 = vector.load %arg6[%c1_38, %c0_39, %c0_40] : memref<2x128x128xbf16, #tpu.memory_space<vmem>>, vector<1x128x128xbf16>
    %60 = vector.shape_cast %59 : vector<1x128x128xbf16> to vector<128x128xbf16>
    %c1_41 = arith.constant 1 : index
    %c0_42 = arith.constant 0 : index
    %c0_43 = arith.constant 0 : index
    %61 = vector.load %arg7[%c1_41, %c0_42, %c0_43] : memref<2x1x128xf32, #tpu.memory_space<vmem>>, vector<1x1x128xf32>
    %62 = vector.shape_cast %61 : vector<1x1x128xf32> to vector<1x128xf32>
    %c1_44 = arith.constant 1 : index
    %c0_45 = arith.constant 0 : index
    %c0_46 = arith.constant 0 : index
    %63 = vector.load %arg8[%c1_44, %c0_45, %c0_46] : memref<2x128x128xbf16, #tpu.memory_space<vmem>>, vector<1x128x128xbf16>
    %64 = vector.shape_cast %63 : vector<1x128x128xbf16> to vector<128x128xbf16>
    %c1_47 = arith.constant 1 : index
    %c0_48 = arith.constant 0 : index
    %c0_49 = arith.constant 0 : index
    %65 = vector.load %arg9[%c1_47, %c0_48, %c0_49] : memref<2x1x128xf32, #tpu.memory_space<vmem>>, vector<1x1x128xf32>
    %66 = vector.shape_cast %65 : vector<1x1x128xf32> to vector<1x128xf32>
    %cst_50 = arith.constant dense<0.000000e+00> : vector<32xf32>
    %67 = vector.multi_reduction <add>, %54, %cst_50 [1] : vector<32x128xf32> to vector<32xf32>
    %68 = vector.shape_cast %67 : vector<32xf32> to vector<32x1xf32>
    %cst_51 = arith.constant 3.125000e-02 : f32
    %69 = vector.broadcast %cst_51 : f32 to vector<32x1xf32>
    %70 = arith.mulf %68, %69 : vector<32x1xf32>
    %71 = vector.broadcast %70 : vector<32x1xf32> to vector<32x128xf32>
    %72 = arith.subf %54, %71 : vector<32x128xf32>
    %73 = arith.mulf %72, %72 : vector<32x128xf32>
    %cst_52 = arith.constant dense<0.000000e+00> : vector<32xf32>
    %74 = vector.multi_reduction <add>, %73, %cst_52 [1] : vector<32x128xf32> to vector<32xf32>
    %75 = vector.shape_cast %74 : vector<32xf32> to vector<32x1xf32>
    %cst_53 = arith.constant 9.600000e+01 : f32
    %76 = vector.broadcast %cst_53 : f32 to vector<32x1xf32>
    %77 = arith.mulf %76, %70 : vector<32x1xf32>
    %78 = arith.mulf %77, %70 : vector<32x1xf32>
    %79 = arith.subf %75, %78 : vector<32x1xf32>
    %cst_54 = arith.constant 3.125000e-02 : f32
    %80 = vector.broadcast %cst_54 : f32 to vector<32x1xf32>
    %81 = arith.mulf %79, %80 : vector<32x1xf32>
    %cst_55 = arith.constant 9.99999974E-6 : f32
    %82 = vector.broadcast %cst_55 : f32 to vector<32x1xf32>
    %83 = arith.addf %81, %82 : vector<32x1xf32>
    %84 = math.rsqrt %83 : vector<32x1xf32>
    %85 = vector.broadcast %84 : vector<32x1xf32> to vector<32x128xf32>
    %86 = arith.mulf %72, %85 : vector<32x128xf32>
    %87 = vector.broadcast %56 : vector<1x128xf32> to vector<32x128xf32>
    %88 = arith.mulf %86, %87 : vector<32x128xf32>
    %89 = vector.broadcast %58 : vector<1x128xf32> to vector<32x128xf32>
    %90 = arith.addf %88, %89 : vector<32x128xf32>
    %91 = arith.truncf %90 : vector<32x128xf32> to vector<32x128xbf16>
    %cst_56 = arith.constant dense<0.000000e+00> : vector<32x128xf32>
    %92 = tpu.matmul %91, %60, %cst_56 {dimension_numbers = #tpu.dot_dimension_numbers<[1], [0], [0], [1], [0, 0, 1, 1], [], []>} : vector<32x128xbf16>, vector<128x128xbf16>, vector<32x128xf32> -> vector<32x128xf32>
    %93 = vector.broadcast %62 : vector<1x128xf32> to vector<32x128xf32>
    %94 = arith.addf %92, %93 : vector<32x128xf32>
    %cst_57 = arith.constant 0.000000e+00 : f32
    %95 = vector.broadcast %cst_57 : f32 to vector<32x128xf32>
    %96 = arith.maximumf %94, %95 : vector<32x128xf32>
    %97 = arith.truncf %96 : vector<32x128xf32> to vector<32x128xbf16>
    %cst_58 = arith.constant dense<0.000000e+00> : vector<32x128xf32>
    %98 = tpu.matmul %97, %64, %cst_58 {dimension_numbers = #tpu.dot_dimension_numbers<[1], [0], [0], [1], [0, 0, 1, 1], [], []>} : vector<32x128xbf16>, vector<128x128xbf16>, vector<32x128xf32> -> vector<32x128xf32>
    %99 = vector.broadcast %66 : vector<1x128xf32> to vector<32x128xf32>
    %100 = arith.addf %98, %99 : vector<32x128xf32>
    %101 = arith.addf %54, %100 : vector<32x128xf32>
    %102 = arith.truncf %101 : vector<32x128xf32> to vector<32x128xbf16>
    %c0_59 = arith.constant 0 : index
    %c0_60 = arith.constant 0 : index
    %103 = vector.load %arg10[%c0_59, %c0_60] : memref<128x128xbf16, #tpu.memory_space<vmem>>, vector<128x128xbf16>
    %cst_61 = arith.constant dense<0.000000e+00> : vector<32x128xf32>
    %104 = tpu.matmul %102, %103, %cst_61 {dimension_numbers = #tpu.dot_dimension_numbers<[1], [0], [0], [1], [0, 0, 1, 1], [], []>} : vector<32x128xbf16>, vector<128x128xbf16>, vector<32x128xf32> -> vector<32x128xf32>
    %c0_62 = arith.constant 0 : index
    %c0_63 = arith.constant 0 : index
    %105 = vector.load %arg11[%c0_62, %c0_63] : memref<1x128xf32, #tpu.memory_space<vmem>>, vector<1x128xf32>
    %106 = vector.broadcast %105 : vector<1x128xf32> to vector<32x128xf32>
    %107 = arith.addf %104, %106 : vector<32x128xf32>
    %c0_64 = arith.constant 0 : index
    %c0_65 = arith.constant 0 : index
    %108 = vector.load %arg12[%c0_64, %c0_65] : memref<32x128xf32, #tpu.memory_space<vmem>>, vector<32x128xf32>
    tpu.vector_store %arg12[%c0_64, %c0_65], %107 {strides = array<i32>} : memref<32x128xf32, #tpu.memory_space<vmem>>, vector<32x128xf32>,
    return
  }
  func.func @transform_0(%arg0: i32) -> (i32, i32) {
    %c0_i32 = arith.constant 0 : i32
    %c0_i32_0 = arith.constant 0 : i32
    return %arg0, %c0_i32 : i32, i32
  }
  func.func @transform_1(%arg0: i32) -> (i32, i32) {
    %c0_i32 = arith.constant 0 : i32
    %c0_i32_0 = arith.constant 0 : i32
    %c0_i32_1 = arith.constant 0 : i32
    return %c0_i32, %c0_i32_0 : i32, i32
  }
  func.func @transform_2(%arg0: i32) -> (i32, i32) {
    %c0_i32 = arith.constant 0 : i32
    %c0_i32_0 = arith.constant 0 : i32
    %c0_i32_1 = arith.constant 0 : i32
    return %c0_i32, %c0_i32_0 : i32, i32
  }
  func.func @transform_3(%arg0: i32) -> (i32, i32, i32) {
    %c0_i32 = arith.constant 0 : i32
    %c0_i32_0 = arith.constant 0 : i32
    %c0_i32_1 = arith.constant 0 : i32
    %c0_i32_2 = arith.constant 0 : i32
    return %c0_i32, %c0_i32_0, %c0_i32_1 : i32, i32, i32
  }
  func.func @transform_4(%arg0: i32) -> (i32, i32, i32) {
    %c0_i32 = arith.constant 0 : i32
    %c0_i32_0 = arith.constant 0 : i32
    %c0_i32_1 = arith.constant 0 : i32
    %c0_i32_2 = arith.constant 0 : i32
    return %c0_i32, %c0_i32_0, %c0_i32_1 : i32, i32, i32
  }
  func.func @transform_5(%arg0: i32) -> (i32, i32, i32) {
    %c0_i32 = arith.constant 0 : i32
    %c0_i32_0 = arith.constant 0 : i32
    %c0_i32_1 = arith.constant 0 : i32
    %c0_i32_2 = arith.constant 0 : i32
    return %c0_i32, %c0_i32_0, %c0_i32_1 : i32, i32, i32
  }
  func.func @transform_6(%arg0: i32) -> (i32, i32, i32) {
    %c0_i32 = arith.constant 0 : i32
    %c0_i32_0 = arith.constant 0 : i32
    %c0_i32_1 = arith.constant 0 : i32
    %c0_i32_2 = arith.constant 0 : i32
    return %c0_i32, %c0_i32_0, %c0_i32_1 : i32, i32, i32
  }
  func.func @transform_7(%arg0: i32) -> (i32, i32, i32) {
    %c0_i32 = arith.constant 0 : i32
    %c0_i32_0 = arith.constant 0 : i32
    %c0_i32_1 = arith.constant 0 : i32
    %c0_i32_2 = arith.constant 0 : i32
    return %c0_i32, %c0_i32_0, %c0_i32_1 : i32, i32, i32
  }
  func.func @transform_8(%arg0: i32) -> (i32, i32, i32) {
    %c0_i32 = arith.constant 0 : i32
    %c0_i32_0 = arith.constant 0 : i32
    %c0_i32_1 = arith.constant 0 : i32
    %c0_i32_2 = arith.constant 0 : i32
    return %c0_i32, %c0_i32_0, %c0_i32_1 : i32, i32, i32
  }
  func.func @transform_9(%arg0: i32) -> (i32, i32) {
    %c0_i32 = arith.constant 0 : i32
    %c0_i32_0 = arith.constant 0 : i32
    %c0_i32_1 = arith.constant 0 : i32
    return %c0_i32, %c0_i32_0 : i32, i32
  }
  func.func @transform_10(%arg0: i32) -> (i32, i32) {
    %c0_i32 = arith.constant 0 : i32
    %c0_i32_0 = arith.constant 0 : i32
    %c0_i32_1 = arith.constant 0 : i32
    return %c0_i32, %c0_i32_0 : i32, i32
  }
  func.func @transform_11(%arg0: i32) -> (i32, i32) {
    %c0_i32 = arith.constant 0 : i32
    %c0_i32_0 = arith.constant 0 : i32
    return %arg0, %c0_i32 : i32, i32
  }
}

</mosaic_0001>

<llo_original>
// kernel: tpu_custom_call.1
$region0: #{tpu_custom_call.1}
  #allocation0 [shape = 'u32[]', space=smem, size = 0x4, offset = 0x4, fixed_abs, tag = 'smem constant byte address 0x4 - core index']
  #allocation1 [shape = 'u32[144,128]{1,0:T(1,128)}', space=vmem, size = 0x12000, scoped, tag = 'internal scratch']
  %s0 = inlined_call_operand.hbm [shape: bf16[64,128], index: 0, kind: input, shape index: {}]
  %s1 = inlined_call_operand.hbm [shape: bf16[128,128], index: 1, kind: input, shape index: {}]
  %s2 = inlined_call_operand.vmem [shape: f32[1,128], index: 2, kind: input, shape index: {}]
  %s3 = inlined_call_operand.vmem [shape: f32[2,1,128], index: 3, kind: input, shape index: {}]
  %s4 = inlined_call_operand.vmem [shape: f32[2,1,128], index: 4, kind: input, shape index: {}]
  %s5 = inlined_call_operand.hbm [shape: bf16[2,128,128], index: 5, kind: input, shape index: {}]
  %s6 = inlined_call_operand.vmem [shape: f32[2,1,128], index: 6, kind: input, shape index: {}]
  %s7 = inlined_call_operand.hbm [shape: bf16[2,128,128], index: 7, kind: input, shape index: {}]
  %s8 = inlined_call_operand.vmem [shape: f32[2,1,128], index: 8, kind: input, shape index: {}]
  %s9 = inlined_call_operand.hbm [shape: bf16[128,128], index: 9, kind: input, shape index: {}]
  %s10 = inlined_call_operand.vmem [shape: f32[1,128], index: 10, kind: input, shape index: {}]
  %s11 = inlined_call_operand.hbm [shape: f32[64,128], index: 11, kind: output, shape index: {}]
  %s12 = sld [smem:[#allocation0]]
  $region97: #{tpu_custom_call.1} parent=0
    _
  %s14 = ssub.s32 1, %s12
  %s15 = scalar_select 0, %s14, %s12
  $region1: #{tpu_custom_call.1} parent=0
    #allocation2 [shape = 'u8[16384]{0}', space=vmem, size = 0x4000, scoped, tag = 'input window, operand 0']
    #allocation3 [shape = 's32[2]{0}', space=sflag, size = 0x8, scoped, tag = 'scoped memory for tpu_custom_call.1']
    #allocation4 [shape = 's32[2]{0}', space=sflag, size = 0x8, scoped, tag = 'scoped memory for tpu_custom_call.1']
    #allocation5 [shape = 'u8[32768]{0}', space=vmem, size = 0x8000, scoped, tag = 'input window, operand 1, single buffered']
    #allocation6 [shape = 's32[1]{0}', space=sflag, size = 0x4, scoped, tag = 'scoped memory for tpu_custom_call.1']
    #allocation7 [shape = 'u8[65536]{0}', space=vmem, size = 0x10000, scoped, tag = 'input window, operand 5, single buffered']
    #allocation8 [shape = 'u8[65536]{0}', space=vmem, size = 0x10000, scoped, tag = 'input window, operand 7, single buffered']
    #allocation9 [shape = 's32[1]{0}', space=sflag, size = 0x4, scoped, tag = 'scoped memory for tpu_custom_call.1']
    #allocation10 [shape = 'u8[32768]{0}', space=vmem, size = 0x8000, scoped, tag = 'input window, operand 9, single buffered']
    #allocation11 [shape = 'u8[32768]{0}', space=vmem, size = 0x8000, scoped, tag = 'output window, operand 0']
    %16 = vsyncpa [#allocation3], 0
    %s17 = scalar_lea.sflag [#allocation3], 1
    %18 = vsyncpa %s17, 0
    %19 = vsyncpa [#allocation6], 0
    %20 = vsyncpa [#allocation9], 0
    %21 = vsyncpa [#allocation4], 0
    %s22 = scalar_lea.sflag [#allocation4], 1
    %23 = vsyncpa %s22, 0
    loop: start=0, step=1, limit=4
    $region2: #{tpu_custom_call.1} parent=1 // loop_pre_header
      _
    $region3: #{tpu_custom_call.1} parent=1 // loop_header
      %s25 = sphi 0, %s29
      %p26 = scmp.ge.s32.totalorder %s25, 4
      %s35 = sphi 0, %s37
      %s38 = sphi 0, %s35
      %s39 = sphi 0, %s38
      %s55 = sphi 0, %s39
      %s59 = sphi 0, %s59
      %s61 = sphi 0, %s59
      %s62 = sphi 0, %s61
      %s76 = sphi 0, %s62
      %s80 = sphi 0, %s80
      %s82 = sphi 0, %s80
      %s83 = sphi 0, %s82
      %s97 = sphi 0, %s83
      %s101 = sphi 0, %s101
      %s103 = sphi 0, %s101
      %s104 = sphi 0, %s103
      %s118 = sphi 0, %s104
      %s122 = sphi 0, %s122
      %s124 = sphi 0, %s122
      %s125 = sphi 0, %s124
      %s139 = sphi 0, %s125
      %s143 = sphi 0, %s143
      %s145 = sphi 0, %s143
      %s146 = sphi 0, %s145
      %s160 = sphi 0, %s146
      %s164 = sphi 0, %s164
      %s166 = sphi 0, %s164
      %s167 = sphi 0, %s166
      %s181 = sphi 0, %s167
      %s185 = sphi 0, %s185
      %s187 = sphi 0, %s185
      %s188 = sphi 0, %s187
      %s202 = sphi 0, %s188
      %s206 = sphi 0, %s206
      %s208 = sphi 0, %s206
      %s209 = sphi 0, %s208
      %s223 = sphi 0, %s209
      %s227 = sphi 0, %s227
      %s229 = sphi 0, %s227
      %s230 = sphi 0, %s229
      %s244 = sphi 0, %s230
      %s248 = sphi 0, %s248
      %s250 = sphi 0, %s248
      %s251 = sphi 0, %s250
      %s265 = sphi 0, %s251
      %s271 = sphi 0, %s273
      %s274 = sphi 0, %s271
      %s275 = sphi 0, %s274
      %s291 = sphi 0, %s275
    $region4: #{tpu_custom_call.1} parent=1 // loop_header_branch
      %28 = sbr.rel (%p26) target = $region8
    $region5: #{tpu_custom_call.1} parent=1 // loop_body
      %s30 = ssub.s32 %s25, 1
      %s31 = ssub.s32 %s25, 2
      %s32 = sadd.s32 %s25, 1
      %s33 = ssub.s32 %s25, %s32
      %p34 = scmp.eq.s32.totalorder %s33, 0
      %s36 = sadd.s32 %s35, 1
      %s37 = scalar_select %p34, %s35, %s36
      %p40 = pneg %p34
      %p41 = scmp.eq.s32.totalorder %s25, 1
      %p42 = por %p40, %p41
      %p43 = scmp.ne.s32.totalorder %s35, %s38
      %p44 = scmp.eq.s32.totalorder %s25, 0
      %p45 = por %p43, %p44
      %p46 = scmp.ne.s32.totalorder %s35, %s38
      %p47 = scmp.eq.s32.totalorder %s30, 1
      %p48 = por %p46, %p47
      %p49 = scmp.ne.s32.totalorder %s38, %s39
      %p50 = scmp.eq.s32.totalorder %s30, 0
      %p51 = por %p49, %p50
      %p52 = scmp.ne.s32.totalorder %s38, %s39
      %p53 = scmp.eq.s32.totalorder %s31, 1
      %p54 = por %p52, %p53
      %p56 = scmp.ne.s32.totalorder %s39, %s55
      %p57 = scmp.eq.s32.totalorder %s31, 0
      %p58 = por %p56, %p57
      %s60 = sadd.s32 %s59, 1
      %p63 = scmp.eq.s32.totalorder %s25, 1
      %p64 = scmp.ne.s32.totalorder %s59, %s61
      %p65 = scmp.eq.s32.totalorder %s25, 0
      %p66 = por %p64, %p65
      %p67 = scmp.ne.s32.totalorder %s59, %s61
      %p68 = scmp.eq.s32.totalorder %s30, 1
      %p69 = por %p67, %p68
      %p70 = scmp.ne.s32.totalorder %s61, %s62
      %p71 = scmp.eq.s32.totalorder %s30, 0
      %p72 = por %p70, %p71
      %p73 = scmp.ne.s32.totalorder %s61, %s62
      %p74 = scmp.eq.s32.totalorder %s31, 1
      %p75 = por %p73, %p74
      %p77 = scmp.ne.s32.totalorder %s62, %s76
      %p78 = scmp.eq.s32.totalorder %s31, 0
      %p79 = por %p77, %p78
      %s81 = sadd.s32 %s80, 1
      %p84 = scmp.eq.s32.totalorder %s25, 1
      %p85 = scmp.ne.s32.totalorder %s80, %s82
      %p86 = scmp.eq.s32.totalorder %s25, 0
      %p87 = por %p85, %p86
      %p88 = scmp.ne.s32.totalorder %s80, %s82
      %p89 = scmp.eq.s32.totalorder %s30, 1
      %p90 = por %p88, %p89
      %p91 = scmp.ne.s32.totalorder %s82, %s83
      %p92 = scmp.eq.s32.totalorder %s30, 0
      %p93 = por %p91, %p92
      %p94 = scmp.ne.s32.totalorder %s82, %s83
      %p95 = scmp.eq.s32.totalorder %s31, 1
      %p96 = por %p94, %p95
      %p98 = scmp.ne.s32.totalorder %s83, %s97
      %p99 = scmp.eq.s32.totalorder %s31, 0
      %p100 = por %p98, %p99
      %s102 = sadd.s32 %s101, 1
      %p105 = scmp.eq.s32.totalorder %s25, 1
      %p106 = scmp.ne.s32.totalorder %s101, %s103
      %p107 = scmp.eq.s32.totalorder %s25, 0
      %p108 = por %p106, %p107
      %p109 = scmp.ne.s32.totalorder %s101, %s103
      %p110 = scmp.eq.s32.totalorder %s30, 1
      %p111 = por %p109, %p110
      %p112 = scmp.ne.s32.totalorder %s103, %s104
      %p113 = scmp.eq.s32.totalorder %s30, 0
      %p114 = por %p112, %p113
      %p115 = scmp.ne.s32.totalorder %s103, %s104
      %p116 = scmp.eq.s32.totalorder %s31, 1
      %p117 = por %p115, %p116
      %p119 = scmp.ne.s32.totalorder %s104, %s118
      %p120 = scmp.eq.s32.totalorder %s31, 0
      %p121 = por %p119, %p120
      %s123 = sadd.s32 %s122, 1
      %p126 = scmp.eq.s32.totalorder %s25, 1
      %p127 = scmp.ne.s32.totalorder %s122, %s124
      %p128 = scmp.eq.s32.totalorder %s25, 0
      %p129 = por %p127, %p128
      %p130 = scmp.ne.s32.totalorder %s122, %s124
      %p131 = scmp.eq.s32.totalorder %s30, 1
      %p132 = por %p130, %p131
      %p133 = scmp.ne.s32.totalorder %s124, %s125
      %p134 = scmp.eq.s32.totalorder %s30, 0
      %p135 = por %p133, %p134
      %p136 = scmp.ne.s32.totalorder %s124, %s125
      %p137 = scmp.eq.s32.totalorder %s31, 1
      %p138 = por %p136, %p137
      %p140 = scmp.ne.s32.totalorder %s125, %s139
      %p141 = scmp.eq.s32.totalorder %s31, 0
      %p142 = por %p140, %p141
      %s144 = sadd.s32 %s143, 1
      %p147 = scmp.eq.s32.totalorder %s25, 1
      %p148 = scmp.ne.s32.totalorder %s143, %s145
      %p149 = scmp.eq.s32.totalorder %s25, 0
      %p150 = por %p148, %p149
      %p151 = scmp.ne.s32.totalorder %s143, %s145
      %p152 = scmp.eq.s32.totalorder %s30, 1
      %p153 = por %p151, %p152
      %p154 = scmp.ne.s32.totalorder %s145, %s146
      %p155 = scmp.eq.s32.totalorder %s30, 0
      %p156 = por %p154, %p155
      %p157 = scmp.ne.s32.totalorder %s145, %s146
      %p158 = scmp.eq.s32.totalorder %s31, 1
      %p159 = por %p157, %p158
      %p161 = scmp.ne.s32.totalorder %s146, %s160
      %p162 = scmp.eq.s32.totalorder %s31, 0
      %p163 = por %p161, %p162
      %s165 = sadd.s32 %s164, 1
      %p168 = scmp.eq.s32.totalorder %s25, 1
      %p169 = scmp.ne.s32.totalorder %s164, %s166
      %p170 = scmp.eq.s32.totalorder %s25, 0
      %p171 = por %p169, %p170
      %p172 = scmp.ne.s32.totalorder %s164, %s166
      %p173 = scmp.eq.s32.totalorder %s30, 1
      %p174 = por %p172, %p173
      %p175 = scmp.ne.s32.totalorder %s166, %s167
      %p176 = scmp.eq.s32.totalorder %s30, 0
      %p177 = por %p175, %p176
      %p178 = scmp.ne.s32.totalorder %s166, %s167
      %p179 = scmp.eq.s32.totalorder %s31, 1
      %p180 = por %p178, %p179
      %p182 = scmp.ne.s32.totalorder %s167, %s181
      %p183 = scmp.eq.s32.totalorder %s31, 0
      %p184 = por %p182, %p183
      %s186 = sadd.s32 %s185, 1
      %p189 = scmp.eq.s32.totalorder %s25, 1
      %p190 = scmp.ne.s32.totalorder %s185, %s187
      %p191 = scmp.eq.s32.totalorder %s25, 0
      %p192 = por %p190, %p191
      %p193 = scmp.ne.s32.totalorder %s185, %s187
      %p194 = scmp.eq.s32.totalorder %s30, 1
      %p195 = por %p193, %p194
      %p196 = scmp.ne.s32.totalorder %s187, %s188
      %p197 = scmp.eq.s32.totalorder %s30, 0
      %p198 = por %p196, %p197
      %p199 = scmp.ne.s32.totalorder %s187, %s188
      %p200 = scmp.eq.s32.totalorder %s31, 1
      %p201 = por %p199, %p200
      %p203 = scmp.ne.s32.totalorder %s188, %s202
      %p204 = scmp.eq.s32.totalorder %s31, 0
      %p205 = por %p203, %p204
      %s207 = sadd.s32 %s206, 1
      %p210 = scmp.eq.s32.totalorder %s25, 1
      %p211 = scmp.ne.s32.totalorder %s206, %s208
      %p212 = scmp.eq.s32.totalorder %s25, 0
      %p213 = por %p211, %p212
      %p214 = scmp.ne.s32.totalorder %s206, %s208
      %p215 = scmp.eq.s32.totalorder %s30, 1
      %p216 = por %p214, %p215
      %p217 = scmp.ne.s32.totalorder %s208, %s209
      %p218 = scmp.eq.s32.totalorder %s30, 0
      %p219 = por %p217, %p218
      %p220 = scmp.ne.s32.totalorder %s208, %s209
      %p221 = scmp.eq.s32.totalorder %s31, 1
      %p222 = por %p220, %p221
      %p224 = scmp.ne.s32.totalorder %s209, %s223
      %p225 = scmp.eq.s32.totalorder %s31, 0
      %p226 = por %p224, %p225
      %s228 = sadd.s32 %s227, 1
      %p231 = scmp.eq.s32.totalorder %s25, 1
      %p232 = scmp.ne.s32.totalorder %s227, %s229
      %p233 = scmp.eq.s32.totalorder %s25, 0
      %p234 = por %p232, %p233
      %p235 = scmp.ne.s32.totalorder %s227, %s229
      %p236 = scmp.eq.s32.totalorder %s30, 1
      %p237 = por %p235, %p236
      %p238 = scmp.ne.s32.totalorder %s229, %s230
      %p239 = scmp.eq.s32.totalorder %s30, 0
      %p240 = por %p238, %p239
      %p241 = scmp.ne.s32.totalorder %s229, %s230
      %p242 = scmp.eq.s32.totalorder %s31, 1
      %p243 = por %p241, %p242
      %p245 = scmp.ne.s32.totalorder %s230, %s244
      %p246 = scmp.eq.s32.totalorder %s31, 0
      %p247 = por %p245, %p246
      %s249 = sadd.s32 %s248, 1
      %p252 = scmp.eq.s32.totalorder %s25, 1
      %p253 = scmp.ne.s32.totalorder %s248, %s250
      %p254 = scmp.eq.s32.totalorder %s25, 0
      %p255 = por %p253, %p254
      %p256 = scmp.ne.s32.totalorder %s248, %s250
      %p257 = scmp.eq.s32.totalorder %s30, 1
      %p258 = por %p256, %p257
      %p259 = scmp.ne.s32.totalorder %s250, %s251
      %p260 = scmp.eq.s32.totalorder %s30, 0
      %p261 = por %p259, %p260
      %p262 = scmp.ne.s32.totalorder %s250, %s251
      %p263 = scmp.eq.s32.totalorder %s31, 1
      %p264 = por %p262, %p263
      %p266 = scmp.ne.s32.totalorder %s251, %s265
      %p267 = scmp.eq.s32.totalorder %s31, 0
      %p268 = por %p266, %p267
      %s269 = ssub.s32 %s25, %s32
      %p270 = scmp.eq.s32.totalorder %s269, 0
      %s272 = sadd.s32 %s271, 1
      %s273 = scalar_select %p270, %s271, %s272
      %p276 = pneg %p270
      %p277 = scmp.eq.s32.totalorder %s25, 1
      %p278 = por %p276, %p277
      %p279 = scmp.ne.s32.totalorder %s271, %s274
      %p280 = scmp.eq.s32.totalorder %s25, 0
      %p281 = por %p279, %p280
      %p282 = scmp.ne.s32.totalorder %s271, %s274
      %p283 = scmp.eq.s32.totalorder %s30, 1
      %p284 = por %p282, %p283
      %p285 = scmp.ne.s32.totalorder %s274, %s275
      %p286 = scmp.eq.s32.totalorder %s30, 0
      %p287 = por %p285, %p286
      %p288 = scmp.ne.s32.totalorder %s274, %s275
      %p289 = scmp.eq.s32.totalorder %s31, 1
      %p290 = por %p288, %p289
      %p292 = scmp.ne.s32.totalorder %s275, %s291
      %p293 = scmp.eq.s32.totalorder %s31, 0
      %p294 = por %p292, %p293
      %p295 = scmp.le.s32.totalorder 1, %s25
      %p296 = scmp.lt.s32.totalorder %s25, 3
      %p297 = pnand %p295, %p296
      %p298 = pneg %p297
      // Predicated region
      $region9: #{tpu_custom_call.1} parent=5 // pred_check
        _
      $region10: #{tpu_custom_call.1} parent=5 // pred_check_branch
        %300 = sbr.rel (%p297) target = $region12
      $region11: #{tpu_custom_call.1} parent=5 // pred_region
        %s301 = ssub.s32 %s25, 1
        // Predicated region
        $region13: #{tpu_custom_call.1} parent=11 // pred_check
          %p302 = pneg %p72
        $region14: #{tpu_custom_call.1} parent=11 // pred_check_branch
          %304 = sbr.rel (%p302) target = $region16
        $region15: #{tpu_custom_call.1} parent=11 // pred_region
          %s306 = ssub.s32 1024, 1024
          %307 = vsyncadd [#allocation6], %s306
          %s308 = sshll.u32 [#allocation5], 4
          %s309 = int_to_ptr.vmem [resolvable:$true] %s308
          %314 = dma.hbm_to_vmem [thread:$0]  %s1, 1024, %s309, [#allocation6], 64, 64, 4
        $region16: #{tpu_custom_call.1} parent=11 // pred_fallthru
          _
        // Predicated region
        $region17: #{tpu_custom_call.1} parent=11 // pred_check
          %p315 = pneg %p93
        $region18: #{tpu_custom_call.1} parent=11 // pred_check_branch
          %317 = sbr.rel (%p315) target = $region20
        $region19: #{tpu_custom_call.1} parent=11 // pred_region
          _
        $region20: #{tpu_custom_call.1} parent=11 // pred_fallthru
          _
        // Predicated region
        $region21: #{tpu_custom_call.1} parent=11 // pred_check
          %p318 = pneg %p114
        $region22: #{tpu_custom_call.1} parent=11 // pred_check_branch
          %320 = sbr.rel (%p318) target = $region24
        $region23: #{tpu_custom_call.1} parent=11 // pred_region
          _
        $region24: #{tpu_custom_call.1} parent=11 // pred_fallthru
          _
        // Predicated region
        $region25: #{tpu_custom_call.1} parent=11 // pred_check
          %p321 = pneg %p135
        $region26: #{tpu_custom_call.1} parent=11 // pred_check_branch
          %323 = sbr.rel (%p321) target = $region28
        $region27: #{tpu_custom_call.1} parent=11 // pred_region
          _
        $region28: #{tpu_custom_call.1} parent=11 // pred_fallthru
          _
        // Predicated region
        $region29: #{tpu_custom_call.1} parent=11 // pred_check
          %p324 = pneg %p156
        $region30: #{tpu_custom_call.1} parent=11 // pred_check_branch
          %326 = sbr.rel (%p324) target = $region32
        $region31: #{tpu_custom_call.1} parent=11 // pred_region
          %s328 = ssub.s32 2048, 2048
          %329 = vsyncadd [#allocation6], %s328
          %s330 = sshll.u32 [#allocation7], 4
          %s331 = int_to_ptr.vmem [resolvable:$true] %s330
          %336 = dma.hbm_to_vmem [thread:$0]  %s5, 2048, %s331, [#allocation6], 64, 64, 4
        $region32: #{tpu_custom_call.1} parent=11 // pred_fallthru
          _
        // Predicated region
        $region33: #{tpu_custom_call.1} parent=11 // pred_check
          %p337 = pneg %p177
        $region34: #{tpu_custom_call.1} parent=11 // pred_check_branch
          %339 = sbr.rel (%p337) target = $region36
        $region35: #{tpu_custom_call.1} parent=11 // pred_region
          _
        $region36: #{tpu_custom_call.1} parent=11 // pred_fallthru
          _
        // Predicated region
        $region37: #{tpu_custom_call.1} parent=11 // pred_check
          %p340 = pneg %p198
        $region38: #{tpu_custom_call.1} parent=11 // pred_check_branch
          %342 = sbr.rel (%p340) target = $region40
        $region39: #{tpu_custom_call.1} parent=11 // pred_region
          %s344 = ssub.s32 2048, 2048
          %345 = vsyncadd [#allocation9], %s344
          %s346 = sshll.u32 [#allocation8], 4
          %s347 = int_to_ptr.vmem [resolvable:$true] %s346
          %352 = dma.hbm_to_vmem [thread:$0]  %s7, 2048, %s347, [#allocation9], 64, 64, 4
        $region40: #{tpu_custom_call.1} parent=11 // pred_fallthru
          _
        // Predicated region
        $region41: #{tpu_custom_call.1} parent=11 // pred_check
          %p353 = pneg %p219
        $region42: #{tpu_custom_call.1} parent=11 // pred_check_branch
          %355 = sbr.rel (%p353) target = $region44
        $region43: #{tpu_custom_call.1} parent=11 // pred_region
          _
        $region44: #{tpu_custom_call.1} parent=11 // pred_fallthru
          _
        // Predicated region
        $region45: #{tpu_custom_call.1} parent=11 // pred_check
          %p356 = pneg %p240
        $region46: #{tpu_custom_call.1} parent=11 // pred_check_branch
          %358 = sbr.rel (%p356) target = $region48
        $region47: #{tpu_custom_call.1} parent=11 // pred_region
          %s360 = ssub.s32 1024, 1024
          %361 = vsyncadd [#allocation9], %s360
          %s362 = sshll.u32 [#allocation10], 4
          %s363 = int_to_ptr.vmem [resolvable:$true] %s362
          %368 = dma.hbm_to_vmem [thread:$0]  %s9, 1024, %s363, [#allocation9], 64, 64, 4
        $region48: #{tpu_custom_call.1} parent=11 // pred_fallthru
          _
        // Predicated region
        $region49: #{tpu_custom_call.1} parent=11 // pred_check
          %p369 = pneg %p261
        $region50: #{tpu_custom_call.1} parent=11 // pred_check_branch
          %371 = sbr.rel (%p369) target = $region52
        $region51: #{tpu_custom_call.1} parent=11 // pred_region
          _
        $region52: #{tpu_custom_call.1} parent=11 // pred_fallthru
          _
      $region12: #{tpu_custom_call.1} parent=5 // pred_fallthru
        _
      %p372 = scmp.lt.s32.totalorder %s25, 2
      // Predicated region
      $region53: #{tpu_custom_call.1} parent=5 // pred_check
        %p373 = pneg %p372
      $region54: #{tpu_custom_call.1} parent=5 // pred_check_branch
        %375 = sbr.rel (%p373) target = $region56
      $region55: #{tpu_custom_call.1} parent=5 // pred_region
        // Predicated region
        $region57: #{tpu_custom_call.1} parent=55 // pred_check
          %p376 = pneg %p45
        $region58: #{tpu_custom_call.1} parent=55 // pred_check_branch
          %378 = sbr.rel (%p376) target = $region60
        $region59: #{tpu_custom_call.1} parent=55 // pred_region
          %s379 = sand.u32 %s35, 1
          %s380 = scalar_lea.sflag [#allocation3], %s379
          %s381 = sand.u32 %s35, 1
          %s382 = smul.addr %s381, 16
          %s383 = scalar_lea.vmem [#allocation2], %s382
          %s384 = smul.u32 4, %s25
          %s386 = ssub.s32 256, 256
          %387 = vsyncadd %s380, %s386
          %s388 = smul.addr %s384, 64
          %s389 = scalar_lea.hbm %s0, %s388
          %s390 = sshll.u32 %s383, 4
          %s391 = int_to_ptr.vmem [resolvable:$true] %s390
          %396 = dma.hbm_to_vmem [thread:$0]  %s389, 256, %s391, %s380, 64, 64, 4
        $region60: #{tpu_custom_call.1} parent=55 // pred_fallthru
          _
      $region56: #{tpu_custom_call.1} parent=5 // pred_fallthru
        _
      %p397 = scmp.le.s32.totalorder 1, %s25
      %p398 = scmp.lt.s32.totalorder %s25, 3
      %p399 = pnand %p397, %p398
      %p400 = pneg %p399
      // Predicated region
      $region61: #{tpu_custom_call.1} parent=5 // pred_check
        _
      $region62: #{tpu_custom_call.1} parent=5 // pred_check_branch
        %402 = sbr.rel (%p399) target = $region64
      $region63: #{tpu_custom_call.1} parent=5 // pred_region
        %s403 = ssub.s32 %s25, 1
        %s404 = sand.u32 %s38, 1
        %s405 = scalar_lea.sflag [#allocation3], %s404
        %s406 = sand.u32 %s38, 1
        %s407 = smul.addr %s406, 16
        %s408 = scalar_lea.vmem [#allocation2], %s407
        // Predicated region
        $region65: #{tpu_custom_call.1} parent=63 // pred_check
          %p409 = pneg %p51
        $region66: #{tpu_custom_call.1} parent=63 // pred_check_branch
          %411 = sbr.rel (%p409) target = $region68
        $region67: #{tpu_custom_call.1} parent=63 // pred_region
          %412 = dma.done %s405, 256
        $region68: #{tpu_custom_call.1} parent=63 // pred_fallthru
          _
        // Predicated region
        $region69: #{tpu_custom_call.1} parent=63 // pred_check
          %p413 = pneg %p72
        $region70: #{tpu_custom_call.1} parent=63 // pred_check_branch
          %415 = sbr.rel (%p413) target = $region72
        $region71: #{tpu_custom_call.1} parent=63 // pred_region
          %416 = dma.done [#allocation6], 1024
        $region72: #{tpu_custom_call.1} parent=63 // pred_fallthru
          _
        // Predicated region
        $region73: #{tpu_custom_call.1} parent=63 // pred_check
          %p417 = pneg %p156
        $region74: #{tpu_custom_call.1} parent=63 // pred_check_branch
          %419 = sbr.rel (%p417) target = $region76
        $region75: #{tpu_custom_call.1} parent=63 // pred_region
          %420 = dma.done [#allocation6], 2048
        $region76: #{tpu_custom_call.1} parent=63 // pred_fallthru
          _
        // Predicated region
        $region77: #{tpu_custom_call.1} parent=63 // pred_check
          %p421 = pneg %p198
        $region78: #{tpu_custom_call.1} parent=63 // pred_check_branch
          %423 = sbr.rel (%p421) target = $region80
        $region79: #{tpu_custom_call.1} parent=63 // pred_region
          %424 = dma.done [#allocation9], 2048
        $region80: #{tpu_custom_call.1} parent=63 // pred_fallthru
          _
        // Predicated region
        $region81: #{tpu_custom_call.1} parent=63 // pred_check
          %p425 = pneg %p240
        $region82: #{tpu_custom_call.1} parent=63 // pred_check_branch
          %427 = sbr.rel (%p425) target = $region84
        $region83: #{tpu_custom_call.1} parent=63 // pred_region
          %428 = dma.done [#allocation9], 1024
        $region84: #{tpu_custom_call.1} parent=63 // pred_fallthru
          _
        %s429 = sand.u32 %s38, 1
        %s430 = scalar_lea.sflag [#allocation3], %s429
        %s431 = sand.u32 %s38, 1
        %s432 = smul.addr %s431, 16
        %s433 = scalar_lea.vmem [#allocation2], %s432
        %p434 = pneg %p51
        %p435 = pneg %p48
        %p436 = pneg %p72
        %p437 = pneg %p69
        %p438 = pneg %p93
        %p439 = pneg %p90
        %p440 = pneg %p114
        %p441 = pneg %p111
        %p442 = pneg %p135
        %p443 = pneg %p132
        %p444 = pneg %p156
        %p445 = pneg %p153
        %p446 = pneg %p177
        %p447 = pneg %p174
        %p448 = pneg %p198
        %p449 = pneg %p195
        %p450 = pneg %p219
        %p451 = pneg %p216
        %p452 = pneg %p240
        %p453 = pneg %p237
        %p454 = pneg %p261
        %p455 = pneg %p258
        %p456 = pneg %p287
        %p457 = pneg %p284
        %s458 = sand.u32 %s274, 1
        %s459 = scalar_lea.sflag [#allocation4], %s458
        %s460 = sand.u32 %s274, 1
        %s461 = smul.addr %s460, 32
        %s462 = scalar_lea.vmem [#allocation11], %s461
        %s463 = smul.u32 4, %s30
        %s464 = smul.u32 4, %s30
        %v466 = vld [vmem:[%s408] sm:$0xf]
        %v467 = vld [vmem:[%s408 + $0x4] sm:$0xf]
        %v468 = vld [vmem:[%s408 + $0x8] sm:$0xf]
        %v469 = vld [vmem:[%s408 + $0xc] sm:$0xf]
        %v470 = vld [vmem:[#allocation5] sm:$0xf]
        %v471 = vld [vmem:[#allocation5 + $0x4] sm:$0xf]
        %v472 = vld [vmem:[#allocation5 + $0x8] sm:$0xf]
        %v473 = vld [vmem:[#allocation5 + $0xc] sm:$0xf]
        %v474 = vld [vmem:[#allocation5 + $0x10] sm:$0xf]
        %v475 = vld [vmem:[#allocation5 + $0x14] sm:$0xf]
        %v476 = vld [vmem:[#allocation5 + $0x18] sm:$0xf]
        %v477 = vld [vmem:[#allocation5 + $0x1c] sm:$0xf]
        %v478 = vld [vmem:[#allocation5 + $0x20] sm:$0xf]
        %v479 = vld [vmem:[#allocation5 + $0x24] sm:$0xf]
        %v480 = vld [vmem:[#allocation5 + $0x28] sm:$0xf]
        %v481 = vld [vmem:[#allocation5 + $0x2c] sm:$0xf]
        %v482 = vld [vmem:[#allocation5 + $0x30] sm:$0xf]
        %v483 = vld [vmem:[#allocation5 + $0x34] sm:$0xf]
        %v484 = vld [vmem:[#allocation5 + $0x38] sm:$0xf]
        %v485 = vld [vmem:[#allocation5 + $0x3c] sm:$0xf]
        %v486 = vld [vmem:[%s2] sm:$0x1]
        %v488 = vlaneseq
        %v489 = vshrl.u32 %v488, 7
        %v490 = vsub.s32 0, %v489
        %v491 = vrot.slane %v486, %v490
        %v497 = vunpack.c.l.b16 %v466
        %v498 = vunpack.c.l.b16 %v467
        %v499 = vunpack.c.l.b16 %v468
        %v500 = vunpack.c.l.b16 %v469
        %v501 = vpack.c.b16 %v498, %v497
        %v502 = vpack.c.b16 %v500, %v499
        %v521 = vunpack.c.l.b16 %v470
        %v522 = vunpack.c.l.b16 %v471
        %v523 = vunpack.c.l.b16 %v472
        %v524 = vunpack.c.l.b16 %v473
        %v525 = vunpack.c.l.b16 %v474
        %v526 = vunpack.c.l.b16 %v475
        %v527 = vunpack.c.l.b16 %v476
        %v528 = vunpack.c.l.b16 %v477
        %v529 = vunpack.c.l.b16 %v478
        %v530 = vunpack.c.l.b16 %v479
        %v531 = vunpack.c.l.b16 %v480
        %v532 = vunpack.c.l.b16 %v481
        %v533 = vunpack.c.l.b16 %v482
        %v534 = vunpack.c.l.b16 %v483
        %v535 = vunpack.c.l.b16 %v484
        %v536 = vunpack.c.l.b16 %v485
        %v537 = vpack.c.b16 %v522, %v521
        %v538 = vpack.c.b16 %v524, %v523
        %v539 = vpack.c.b16 %v526, %v525
        %v540 = vpack.c.b16 %v528, %v527
        %v541 = vpack.c.b16 %v530, %v529
        %v542 = vpack.c.b16 %v532, %v531
        %v543 = vpack.c.b16 %v534, %v533
        %v544 = vpack.c.b16 %v536, %v535
        %553 = vmatprep.subr.bf16.mxu0 0
        %554 = vmatpush1.bf16.msra.mxu0 %v537
        %555 = vmatprep.subr.bf16.mxu0 0
        %556 = vmatpush1.bf16.msra.mxu0 %v538
        %557 = vmatprep.subr.bf16.mxu0 0
        %558 = vmatpush1.bf16.msra.mxu0 %v539
        %559 = vmatprep.subr.bf16.mxu0 0
        %560 = vmatpush1.bf16.msra.mxu0 %v540
        %561 = vmatprep.subr.bf16.mxu0 0
        %562 = vmatpush1.bf16.msra.mxu0 %v541
        %563 = vmatprep.subr.bf16.mxu0 0
        %564 = vmatpush1.bf16.msra.mxu0 %v542
        %565 = vmatprep.subr.bf16.mxu0 0
        %566 = vmatpush1.bf16.msra.mxu0 %v543
        %567 = vmatprep.subr.bf16.mxu0 0
        %568 = vmatpush1.bf16.msra.mxu0 %v544
        %569 = vmatprep.subr.bf16.mxu0 0
        %570 = vmatpush1.bf16.msra.mxu0 0
        %571 = vmatprep.subr.bf16.mxu0 0
        %572 = vmatpush1.bf16.msra.mxu0 0
        %573 = vmatprep.subr.bf16.mxu0 0
        %574 = vmatpush1.bf16.msra.mxu0 0
        %575 = vmatprep.subr.bf16.mxu0 0
        %576 = vmatpush1.bf16.msra.mxu0 0
        %577 = vmatprep.subr.bf16.mxu0 0
        %578 = vmatpush1.bf16.msra.mxu0 0
        %579 = vmatprep.subr.bf16.mxu0 0
        %580 = vmatpush1.bf16.msra.mxu0 0
        %581 = vmatprep.subr.bf16.mxu0 0
        %582 = vmatpush1.bf16.msra.mxu0 0
        %583 = vmatprep.subr.bf16.mxu0 0
        %584 = vmatpush1.bf16.msra.mxu0 0
        %585 = vmatprep.mubr.bf16.mxu0 0
        %586 = vmatmul.mubr.bf16.gmra.mrb[0].mxu0 %v501
        %v587 = vpop.f32.mrb[0].mxu0
        %v588 = vadd.f32 %v491, %v587
        %v589 = vpop.f32.mrb[0].mxu0
        %v590 = vpop.f32.mrb[0].mxu0
        %v591 = vadd.f32 %v491, %v590
        %v592 = vpop.f32.mrb[0].mxu0
        %593 = vmatprep.mubr.bf16.mxu0 0
        %594 = vmatmul.mubr.bf16.gmra.mrb[0].mxu0 %v502
        %v595 = vpop.f32.mrb[0].mxu0
        %v596 = vadd.f32 %v491, %v595
        %v597 = vpop.f32.mrb[0].mxu0
        %v598 = vpop.f32.mrb[0].mxu0
        %v599 = vadd.f32 %v491, %v598
        %v600 = vpop.f32.mrb[0].mxu0
        %601 = vdwg.mxu0
        %v602 = vmax.f32 %v588, 0.0
        %v603 = vmax.f32 %v591, 0.0
        %v604 = vmax.f32 %v596, 0.0
        %v605 = vmax.f32 %v599, 0.0
        %v606 = vld [vmem:[%s3] sm:$0x1]
        %v607 = vld [vmem:[%s4] sm:$0x1]
        %v608 = vld [vmem:[#allocation7] sm:$0xf]
        %v609 = vld [vmem:[#allocation7 + $0x4] sm:$0xf]
        %v610 = vld [vmem:[#allocation7 + $0x8] sm:$0xf]
        %v611 = vld [vmem:[#allocation7 + $0xc] sm:$0xf]
        %v612 = vld [vmem:[#allocation7 + $0x10] sm:$0xf]
        %v613 = vld [vmem:[#allocation7 + $0x14] sm:$0xf]
        %v614 = vld [vmem:[#allocation7 + $0x18] sm:$0xf]
        %v615 = vld [vmem:[#allocation7 + $0x1c] sm:$0xf]
        %v616 = vld [vmem:[#allocation7 + $0x20] sm:$0xf]
        %v617 = vld [vmem:[#allocation7 + $0x24] sm:$0xf]
        %v618 = vld [vmem:[#allocation7 + $0x28] sm:$0xf]
        %v619 = vld [vmem:[#allocation7 + $0x2c] sm:$0xf]
        %v620 = vld [vmem:[#allocation7 + $0x30] sm:$0xf]
        %v621 = vld [vmem:[#allocation7 + $0x34] sm:$0xf]
        %v622 = vld [vmem:[#allocation7 + $0x38] sm:$0xf]
        %v623 = vld [vmem:[#allocation7 + $0x3c] sm:$0xf]
        %v624 = vld [vmem:[%s6] sm:$0x1]
        %v625 = vld [vmem:[#allocation8] sm:$0xf]
        %v626 = vld [vmem:[#allocation8 + $0x4] sm:$0xf]
        %v627 = vld [vmem:[#allocation8 + $0x8] sm:$0xf]
        %v628 = vld [vmem:[#allocation8 + $0xc] sm:$0xf]
        %v629 = vld [vmem:[#allocation8 + $0x10] sm:$0xf]
        %v630 = vld [vmem:[#allocation8 + $0x14] sm:$0xf]
        %v631 = vld [vmem:[#allocation8 + $0x18] sm:$0xf]
        %v632 = vld [vmem:[#allocation8 + $0x1c] sm:$0xf]
        %v633 = vld [vmem:[#allocation8 + $0x20] sm:$0xf]
        %v634 = vld [vmem:[#allocation8 + $0x24] sm:$0xf]
        %v635 = vld [vmem:[#allocation8 + $0x28] sm:$0xf]
        %v636 = vld [vmem:[#allocation8 + $0x2c] sm:$0xf]
        %v637 = vld [vmem:[#allocation8 + $0x30] sm:$0xf]
        %v638 = vld [vmem:[#allocation8 + $0x34] sm:$0xf]
        %v639 = vld [vmem:[#allocation8 + $0x38] sm:$0xf]
        %v640 = vld [vmem:[#allocation8 + $0x3c] sm:$0xf]
        %v641 = vld [vmem:[%s8] sm:$0x1]
        %642 = vadd.xlane.f32.xlu0 %v602
        %v643 = vpop.xlane.xlu0 %642
        %644 = vadd.xlane.f32.xlu0 %v603
        %v645 = vpop.xlane.xlu0 %644
        %646 = vadd.xlane.f32.xlu0 %v604
        %v647 = vpop.xlane.xlu0 %646
        %648 = vadd.xlane.f32.xlu0 %v605
        %v649 = vpop.xlane.xlu0 %648
        %v650 = vmul.f32 %v643, 0.03125
        %v651 = vmul.f32 %v645, 0.03125
        %v652 = vmul.f32 %v647, 0.03125
        %v653 = vmul.f32 %v649, 0.03125
        %v654 = vsub.f32 %v602, %v650
        %v655 = vsub.f32 %v603, %v651
        %v656 = vsub.f32 %v604, %v652
        %v657 = vsub.f32 %v605, %v653
        %v658 = vmul.f32 %v654, %v654
        %v659 = vmul.f32 %v655, %v655
        %v660 = vmul.f32 %v656, %v656
        %v661 = vmul.f32 %v657, %v657
        %662 = vadd.xlane.f32.xlu0 %v658
        %v663 = vpop.xlane.xlu0 %662
        %664 = vadd.xlane.f32.xlu0 %v659
        %v665 = vpop.xlane.xlu0 %664
        %666 = vadd.xlane.f32.xlu0 %v660
        %v667 = vpop.xlane.xlu0 %666
        %668 = vadd.xlane.f32.xlu0 %v661
        %v669 = vpop.xlane.xlu0 %668
        %v670 = vmul.f32 %v650, 96.0
        %v671 = vmul.f32 %v651, 96.0
        %v672 = vmul.f32 %v652, 96.0
        %v673 = vmul.f32 %v653, 96.0
        %v674 = vmul.f32 %v670, %v650
        %v675 = vmul.f32 %v671, %v651
        %v676 = vmul.f32 %v672, %v652
        %v677 = vmul.f32 %v673, %v653
        %v678 = vsub.f32 %v663, %v674
        %v679 = vsub.f32 %v665, %v675
        %v680 = vsub.f32 %v667, %v676
        %v681 = vsub.f32 %v669, %v677
        %v682 = vmul.f32 %v678, 0.03125
        %v683 = vmul.f32 %v679, 0.03125
        %v684 = vmul.f32 %v680, 0.03125
        %v685 = vmul.f32 %v681, 0.03125
        %v686 = vadd.f32 %v682, 1e-05
        %v687 = vadd.f32 %v683, 1e-05
        %v688 = vadd.f32 %v684, 1e-05
        %v689 = vadd.f32 %v685, 1e-05
        %v690 = vrsqrt.pop %v686
        %v691 = vrsqrt.pop %v687
        %v692 = vrsqrt.pop %v688
        %v693 = vrsqrt.pop %v689
        %v694 = vmul.f32 %v654, %v690
        %v695 = vmul.f32 %v655, %v691
        %v696 = vmul.f32 %v656, %v692
        %v697 = vmul.f32 %v657, %v693
        %v699 = vlaneseq
        %v700 = vshrl.u32 %v699, 7
        %v701 = vsub.s32 0, %v700
        %v702 = vrot.slane %v606, %v701
        %v704 = vmul.f32 %v694, %v702
        %v705 = vmul.f32 %v695, %v702
        %v706 = vmul.f32 %v696, %v702
        %v707 = vmul.f32 %v697, %v702
        %v709 = vlaneseq
        %v710 = vshrl.u32 %v709, 7
        %v711 = vsub.s32 0, %v710
        %v712 = vrot.slane %v607, %v711
        %v714 = vadd.f32 %v704, %v712
        %v715 = vadd.f32 %v705, %v712
        %v716 = vadd.f32 %v706, %v712
        %v717 = vadd.f32 %v707, %v712
        %v718 = vpack.c.bf16 %v715, %v714
        %v719 = vpack.c.bf16 %v717, %v716
        %v721 = vlaneseq
        %v722 = vshrl.u32 %v721, 7
        %v723 = vsub.s32 0, %v722
        %v724 = vrot.slane %v624, %v723
        %v742 = vunpack.c.l.b16 %v608
        %v743 = vunpack.c.l.b16 %v609
        %v744 = vunpack.c.l.b16 %v610
        %v745 = vunpack.c.l.b16 %v611
        %v746 = vunpack.c.l.b16 %v612
        %v747 = vunpack.c.l.b16 %v613
        %v748 = vunpack.c.l.b16 %v614
        %v749 = vunpack.c.l.b16 %v615
        %v750 = vunpack.c.l.b16 %v616
        %v751 = vunpack.c.l.b16 %v617
        %v752 = vunpack.c.l.b16 %v618
        %v753 = vunpack.c.l.b16 %v619
        %v754 = vunpack.c.l.b16 %v620
        %v755 = vunpack.c.l.b16 %v621
        %v756 = vunpack.c.l.b16 %v622
        %v757 = vunpack.c.l.b16 %v623
        %v758 = vpack.c.b16 %v743, %v742
        %v759 = vpack.c.b16 %v745, %v744
        %v760 = vpack.c.b16 %v747, %v746
        %v761 = vpack.c.b16 %v749, %v748
        %v762 = vpack.c.b16 %v751, %v750
        %v763 = vpack.c.b16 %v753, %v752
        %v764 = vpack.c.b16 %v755, %v754
        %v765 = vpack.c.b16 %v757, %v756
        %774 = vmatprep.subr.bf16.mxu0 0
        %775 = vmatpush1.bf16.msra.mxu0 %v758
        %776 = vmatprep.subr.bf16.mxu0 0
        %777 = vmatpush1.bf16.msra.mxu0 %v759
        %778 = vmatprep.subr.bf16.mxu0 0
        %779 = vmatpush1.bf16.msra.mxu0 %v760
        %780 = vmatprep.subr.bf16.mxu0 0
        %781 = vmatpush1.bf16.msra.mxu0 %v761
        %782 = vmatprep.subr.bf16.mxu0 0
        %783 = vmatpush1.bf16.msra.mxu0 %v762
        %784 = vmatprep.subr.bf16.mxu0 0
        %785 = vmatpush1.bf16.msra.mxu0 %v763
        %786 = vmatprep.subr.bf16.mxu0 0
        %787 = vmatpush1.bf16.msra.mxu0 %v764
        %788 = vmatprep.subr.bf16.mxu0 0
        %789 = vmatpush1.bf16.msra.mxu0 %v765
        %790 = vmatprep.subr.bf16.mxu0 0
        %791 = vmatpush1.bf16.msra.mxu0 0
        %792 = vmatprep.subr.bf16.mxu0 0
        %793 = vmatpush1.bf16.msra.mxu0 0
        %794 = vmatprep.subr.bf16.mxu0 0
        %795 = vmatpush1.bf16.msra.mxu0 0
        %796 = vmatprep.subr.bf16.mxu0 0
        %797 = vmatpush1.bf16.msra.mxu0 0
        %798 = vmatprep.subr.bf16.mxu0 0
        %799 = vmatpush1.bf16.msra.mxu0 0
        %800 = vmatprep.subr.bf16.mxu0 0
        %801 = vmatpush1.bf16.msra.mxu0 0
        %802 = vmatprep.subr.bf16.mxu0 0
        %803 = vmatpush1.bf16.msra.mxu0 0
        %804 = vmatprep.subr.bf16.mxu0 0
        %805 = vmatpush1.bf16.msra.mxu0 0
        %806 = vmatprep.mubr.bf16.mxu0 0
        %807 = vmatmul.mubr.bf16.gmra.mrb[0].mxu0 %v718
        %v808 = vpop.f32.mrb[0].mxu0
        %v809 = vadd.f32 %v724, %v808
        %v810 = vpop.f32.mrb[0].mxu0
        %v811 = vpop.f32.mrb[0].mxu0
        %v812 = vadd.f32 %v724, %v811
        %v813 = vpop.f32.mrb[0].mxu0
        %814 = vmatprep.mubr.bf16.mxu0 0
        %815 = vmatmul.mubr.bf16.gmra.mrb[0].mxu0 %v719
        %v816 = vpop.f32.mrb[0].mxu0
        %v817 = vadd.f32 %v724, %v816
        %v818 = vpop.f32.mrb[0].mxu0
        %v819 = vpop.f32.mrb[0].mxu0
        %v820 = vadd.f32 %v724, %v819
        %v821 = vpop.f32.mrb[0].mxu0
        %822 = vdwg.mxu0
        %v823 = vmax.f32 %v809, 0.0
        %v824 = vmax.f32 %v812, 0.0
        %v825 = vmax.f32 %v817, 0.0
        %v826 = vmax.f32 %v820, 0.0
        %v827 = vpack.c.bf16 %v824, %v823
        %v828 = vpack.c.bf16 %v826, %v825
        %v830 = vlaneseq
        %v831 = vshrl.u32 %v830, 7
        %v832 = vsub.s32 0, %v831
        %v833 = vrot.slane %v641, %v832
        %v851 = vunpack.c.l.b16 %v625
        %v852 = vunpack.c.l.b16 %v626
        %v853 = vunpack.c.l.b16 %v627
        %v854 = vunpack.c.l.b16 %v628
        %v855 = vunpack.c.l.b16 %v629
        %v856 = vunpack.c.l.b16 %v630
        %v857 = vunpack.c.l.b16 %v631
        %v858 = vunpack.c.l.b16 %v632
        %v859 = vunpack.c.l.b16 %v633
        %v860 = vunpack.c.l.b16 %v634
        %v861 = vunpack.c.l.b16 %v635
        %v862 = vunpack.c.l.b16 %v636
        %v863 = vunpack.c.l.b16 %v637
        %v864 = vunpack.c.l.b16 %v638
        %v865 = vunpack.c.l.b16 %v639
        %v866 = vunpack.c.l.b16 %v640
        %v867 = vpack.c.b16 %v852, %v851
        %v868 = vpack.c.b16 %v854, %v853
        %v869 = vpack.c.b16 %v856, %v855
        %v870 = vpack.c.b16 %v858, %v857
        %v871 = vpack.c.b16 %v860, %v859
        %v872 = vpack.c.b16 %v862, %v861
        %v873 = vpack.c.b16 %v864, %v863
        %v874 = vpack.c.b16 %v866, %v865
        %883 = vmatprep.subr.bf16.mxu0 0
        %884 = vmatpush1.bf16.msra.mxu0 %v867
        %885 = vmatprep.subr.bf16.mxu0 0
        %886 = vmatpush1.bf16.msra.mxu0 %v868
        %887 = vmatprep.subr.bf16.mxu0 0
        %888 = vmatpush1.bf16.msra.mxu0 %v869
        %889 = vmatprep.subr.bf16.mxu0 0
        %890 = vmatpush1.bf16.msra.mxu0 %v870
        %891 = vmatprep.subr.bf16.mxu0 0
        %892 = vmatpush1.bf16.msra.mxu0 %v871
        %893 = vmatprep.subr.bf16.mxu0 0
        %894 = vmatpush1.bf16.msra.mxu0 %v872
        %895 = vmatprep.subr.bf16.mxu0 0
        %896 = vmatpush1.bf16.msra.mxu0 %v873
        %897 = vmatprep.subr.bf16.mxu0 0
        %898 = vmatpush1.bf16.msra.mxu0 %v874
        %899 = vmatprep.subr.bf16.mxu0 0
        %900 = vmatpush1.bf16.msra.mxu0 0
        %901 = vmatprep.subr.bf16.mxu0 0
        %902 = vmatpush1.bf16.msra.mxu0 0
        %903 = vmatprep.subr.bf16.mxu0 0
        %904 = vmatpush1.bf16.msra.mxu0 0
        %905 = vmatprep.subr.bf16.mxu0 0
        %906 = vmatpush1.bf16.msra.mxu0 0
        %907 = vmatprep.subr.bf16.mxu0 0
        %908 = vmatpush1.bf16.msra.mxu0 0
        %909 = vmatprep.subr.bf16.mxu0 0
        %910 = vmatpush1.bf16.msra.mxu0 0
        %911 = vmatprep.subr.bf16.mxu0 0
        %912 = vmatpush1.bf16.msra.mxu0 0
        %913 = vmatprep.subr.bf16.mxu0 0
        %914 = vmatpush1.bf16.msra.mxu0 0
        %915 = vmatprep.mubr.bf16.mxu0 0
        %916 = vmatmul.mubr.bf16.gmra.mrb[0].mxu0 %v827
        %v917 = vpop.f32.mrb[0].mxu0
        %v918 = vadd.f32 %v833, %v917
        %v919 = vpop.f32.mrb[0].mxu0
        %v920 = vpop.f32.mrb[0].mxu0
        %v921 = vadd.f32 %v833, %v920
        %v922 = vpop.f32.mrb[0].mxu0
        %923 = vmatprep.mubr.bf16.mxu0 0
        %924 = vmatmul.mubr.bf16.gmra.mrb[0].mxu0 %v828
        %v925 = vpop.f32.mrb[0].mxu0
        %v926 = vadd.f32 %v833, %v925
        %v927 = vpop.f32.mrb[0].mxu0
        %v928 = vpop.f32.mrb[0].mxu0
        %v929 = vadd.f32 %v833, %v928
        %v930 = vpop.f32.mrb[0].mxu0
        %931 = vdwg.mxu0
        %v932 = vadd.f32 %v602, %v918
        %v933 = vadd.f32 %v603, %v921
        %v934 = vadd.f32 %v604, %v926
        %v935 = vadd.f32 %v605, %v929
        %s936 = scalar_lea.vmem %s3, 1
        %v937 = vld [vmem:[%s936] sm:$0x1]
        %s938 = scalar_lea.vmem %s4, 1
        %v939 = vld [vmem:[%s938] sm:$0x1]
        %s940 = scalar_lea.vmem [#allocation7], 64
        %v941 = vld [vmem:[%s940] sm:$0xf]
        %v942 = vld [vmem:[%s940 + $0x4] sm:$0xf]
        %v943 = vld [vmem:[%s940 + $0x8] sm:$0xf]
        %v944 = vld [vmem:[%s940 + $0xc] sm:$0xf]
        %v945 = vld [vmem:[%s940 + $0x10] sm:$0xf]
        %v946 = vld [vmem:[%s940 + $0x14] sm:$0xf]
        %v947 = vld [vmem:[%s940 + $0x18] sm:$0xf]
        %v948 = vld [vmem:[%s940 + $0x1c] sm:$0xf]
        %v949 = vld [vmem:[%s940 + $0x20] sm:$0xf]
        %v950 = vld [vmem:[%s940 + $0x24] sm:$0xf]
        %v951 = vld [vmem:[%s940 + $0x28] sm:$0xf]
        %v952 = vld [vmem:[%s940 + $0x2c] sm:$0xf]
        %v953 = vld [vmem:[%s940 + $0x30] sm:$0xf]
        %v954 = vld [vmem:[%s940 + $0x34] sm:$0xf]
        %v955 = vld [vmem:[%s940 + $0x38] sm:$0xf]
        %v956 = vld [vmem:[%s940 + $0x3c] sm:$0xf]
        %s957 = scalar_lea.vmem %s6, 1
        %v958 = vld [vmem:[%s957] sm:$0x1]
        %s959 = scalar_lea.vmem [#allocation8], 64
        %v960 = vld [vmem:[%s959] sm:$0xf]
        %v961 = vld [vmem:[%s959 + $0x4] sm:$0xf]
        %v962 = vld [vmem:[%s959 + $0x8] sm:$0xf]
        %v963 = vld [vmem:[%s959 + $0xc] sm:$0xf]
        %v964 = vld [vmem:[%s959 + $0x10] sm:$0xf]
        %v965 = vld [vmem:[%s959 + $0x14] sm:$0xf]
        %v966 = vld [vmem:[%s959 + $0x18] sm:$0xf]
        %v967 = vld [vmem:[%s959 + $0x1c] sm:$0xf]
        %v968 = vld [vmem:[%s959 + $0x20] sm:$0xf]
        %v969 = vld [vmem:[%s959 + $0x24] sm:$0xf]
        %v970 = vld [vmem:[%s959 + $0x28] sm:$0xf]
        %v971 = vld [vmem:[%s959 + $0x2c] sm:$0xf]
        %v972 = vld [vmem:[%s959 + $0x30] sm:$0xf]
        %v973 = vld [vmem:[%s959 + $0x34] sm:$0xf]
        %v974 = vld [vmem:[%s959 + $0x38] sm:$0xf]
        %v975 = vld [vmem:[%s959 + $0x3c] sm:$0xf]
        %s976 = scalar_lea.vmem %s8, 1
        %v977 = vld [vmem:[%s976] sm:$0x1]
        %978 = vadd.xlane.f32.xlu0 %v932
        %v979 = vpop.xlane.xlu0 %978
        %980 = vadd.xlane.f32.xlu0 %v933
        %v981 = vpop.xlane.xlu0 %980
        %982 = vadd.xlane.f32.xlu0 %v934
        %v983 = vpop.xlane.xlu0 %982
        %984 = vadd.xlane.f32.xlu0 %v935
        %v985 = vpop.xlane.xlu0 %984
        %v986 = vmul.f32 %v979, 0.03125
        %v987 = vmul.f32 %v981, 0.03125
        %v988 = vmul.f32 %v983, 0.03125
        %v989 = vmul.f32 %v985, 0.03125
        %v990 = vsub.f32 %v932, %v986
        %v991 = vsub.f32 %v933, %v987
        %v992 = vsub.f32 %v934, %v988
        %v993 = vsub.f32 %v935, %v989
        %v994 = vmul.f32 %v990, %v990
        %v995 = vmul.f32 %v991, %v991
        %v996 = vmul.f32 %v992, %v992
        %v997 = vmul.f32 %v993, %v993
        %998 = vadd.xlane.f32.xlu0 %v994
        %v999 = vpop.xlane.xlu0 %998
        %1000 = vadd.xlane.f32.xlu0 %v995
        %v1001 = vpop.xlane.xlu0 %1000
        %1002 = vadd.xlane.f32.xlu0 %v996
        %v1003 = vpop.xlane.xlu0 %1002
        %1004 = vadd.xlane.f32.xlu0 %v997
        %v1005 = vpop.xlane.xlu0 %1004
        %v1006 = vmul.f32 %v986, 96.0
        %v1007 = vmul.f32 %v987, 96.0
        %v1008 = vmul.f32 %v988, 96.0
        %v1009 = vmul.f32 %v989, 96.0
        %v1010 = vmul.f32 %v1006, %v986
        %v1011 = vmul.f32 %v1007, %v987
        %v1012 = vmul.f32 %v1008, %v988
        %v1013 = vmul.f32 %v1009, %v989
        %v1014 = vsub.f32 %v999, %v1010
        %v1015 = vsub.f32 %v1001, %v1011
        %v1016 = vsub.f32 %v1003, %v1012
        %v1017 = vsub.f32 %v1005, %v1013
        %v1018 = vmul.f32 %v1014, 0.03125
        %v1019 = vmul.f32 %v1015, 0.03125
        %v1020 = vmul.f32 %v1016, 0.03125
        %v1021 = vmul.f32 %v1017, 0.03125
        %v1022 = vadd.f32 %v1018, 1e-05
        %v1023 = vadd.f32 %v1019, 1e-05
        %v1024 = vadd.f32 %v1020, 1e-05
        %v1025 = vadd.f32 %v1021, 1e-05
        %v1026 = vrsqrt.pop %v1022
        %v1027 = vrsqrt.pop %v1023
        %v1028 = vrsqrt.pop %v1024
        %v1029 = vrsqrt.pop %v1025
        %v1030 = vmul.f32 %v990, %v1026
        %v1031 = vmul.f32 %v991, %v1027
        %v1032 = vmul.f32 %v992, %v1028
        %v1033 = vmul.f32 %v993, %v1029
        %v1035 = vlaneseq
        %v1036 = vshrl.u32 %v1035, 7
        %v1037 = vsub.s32 0, %v1036
        %v1038 = vrot.slane %v937, %v1037
        %v1040 = vmul.f32 %v1030, %v1038
        %v1041 = vmul.f32 %v1031, %v1038
        %v1042 = vmul.f32 %v1032, %v1038
        %v1043 = vmul.f32 %v1033, %v1038
        %v1045 = vlaneseq
        %v1046 = vshrl.u32 %v1045, 7
        %v1047 = vsub.s32 0, %v1046
        %v1048 = vrot.slane %v939, %v1047
        %v1050 = vadd.f32 %v1040, %v1048
        %v1051 = vadd.f32 %v1041, %v1048
        %v1052 = vadd.f32 %v1042, %v1048
        %v1053 = vadd.f32 %v1043, %v1048
        %v1054 = vpack.c.bf16 %v1051, %v1050
        %v1055 = vpack.c.bf16 %v1053, %v1052
        %v1057 = vlaneseq
        %v1058 = vshrl.u32 %v1057, 7
        %v1059 = vsub.s32 0, %v1058
        %v1060 = vrot.slane %v958, %v1059
        %v1078 = vunpack.c.l.b16 %v941
        %v1079 = vunpack.c.l.b16 %v942
        %v1080 = vunpack.c.l.b16 %v943
        %v1081 = vunpack.c.l.b16 %v944
        %v1082 = vunpack.c.l.b16 %v945
        %v1083 = vunpack.c.l.b16 %v946
        %v1084 = vunpack.c.l.b16 %v947
        %v1085 = vunpack.c.l.b16 %v948
        %v1086 = vunpack.c.l.b16 %v949
        %v1087 = vunpack.c.l.b16 %v950
        %v1088 = vunpack.c.l.b16 %v951
        %v1089 = vunpack.c.l.b16 %v952
        %v1090 = vunpack.c.l.b16 %v953
        %v1091 = vunpack.c.l.b16 %v954
        %v1092 = vunpack.c.l.b16 %v955
        %v1093 = vunpack.c.l.b16 %v956
        %v1094 = vpack.c.b16 %v1079, %v1078
        %v1095 = vpack.c.b16 %v1081, %v1080
        %v1096 = vpack.c.b16 %v1083, %v1082
        %v1097 = vpack.c.b16 %v1085, %v1084
        %v1098 = vpack.c.b16 %v1087, %v1086
        %v1099 = vpack.c.b16 %v1089, %v1088
        %v1100 = vpack.c.b16 %v1091, %v1090
        %v1101 = vpack.c.b16 %v1093, %v1092
        %1110 = vmatprep.subr.bf16.mxu0 0
        %1111 = vmatpush1.bf16.msra.mxu0 %v1094
        %1112 = vmatprep.subr.bf16.mxu0 0
        %1113 = vmatpush1.bf16.msra.mxu0 %v1095
        %1114 = vmatprep.subr.bf16.mxu0 0
        %1115 = vmatpush1.bf16.msra.mxu0 %v1096
        %1116 = vmatprep.subr.bf16.mxu0 0
        %1117 = vmatpush1.bf16.msra.mxu0 %v1097
        %1118 = vmatprep.subr.bf16.mxu0 0
        %1119 = vmatpush1.bf16.msra.mxu0 %v1098
        %1120 = vmatprep.subr.bf16.mxu0 0
        %1121 = vmatpush1.bf16.msra.mxu0 %v1099
        %1122 = vmatprep.subr.bf16.mxu0 0
        %1123 = vmatpush1.bf16.msra.mxu0 %v1100
        %1124 = vmatprep.subr.bf16.mxu0 0
        %1125 = vmatpush1.bf16.msra.mxu0 %v1101
        %1126 = vmatprep.subr.bf16.mxu0 0
        %1127 = vmatpush1.bf16.msra.mxu0 0
        %1128 = vmatprep.subr.bf16.mxu0 0
        %1129 = vmatpush1.bf16.msra.mxu0 0
        %1130 = vmatprep.subr.bf16.mxu0 0
        %1131 = vmatpush1.bf16.msra.mxu0 0
        %1132 = vmatprep.subr.bf16.mxu0 0
        %1133 = vmatpush1.bf16.msra.mxu0 0
        %1134 = vmatprep.subr.bf16.mxu0 0
        %1135 = vmatpush1.bf16.msra.mxu0 0
        %1136 = vmatprep.subr.bf16.mxu0 0
        %1137 = vmatpush1.bf16.msra.mxu0 0
        %1138 = vmatprep.subr.bf16.mxu0 0
        %1139 = vmatpush1.bf16.msra.mxu0 0
        %1140 = vmatprep.subr.bf16.mxu0 0
        %1141 = vmatpush1.bf16.msra.mxu0 0
        %1142 = vmatprep.mubr.bf16.mxu0 0
        %1143 = vmatmul.mubr.bf16.gmra.mrb[0].mxu0 %v1054
        %v1144 = vpop.f32.mrb[0].mxu0
        %v1145 = vadd.f32 %v1060, %v1144
        %v1146 = vpop.f32.mrb[0].mxu0
        %v1147 = vpop.f32.mrb[0].mxu0
        %v1148 = vadd.f32 %v1060, %v1147
        %v1149 = vpop.f32.mrb[0].mxu0
        %1150 = vmatprep.mubr.bf16.mxu0 0
        %1151 = vmatmul.mubr.bf16.gmra.mrb[0].mxu0 %v1055
        %v1152 = vpop.f32.mrb[0].mxu0
        %v1153 = vadd.f32 %v1060, %v1152
        %v1154 = vpop.f32.mrb[0].mxu0
        %v1155 = vpop.f32.mrb[0].mxu0
        %v1156 = vadd.f32 %v1060, %v1155
        %v1157 = vpop.f32.mrb[0].mxu0
        %1158 = vdwg.mxu0
        %v1159 = vmax.f32 %v1145, 0.0
        %v1160 = vmax.f32 %v1148, 0.0
        %v1161 = vmax.f32 %v1153, 0.0
        %v1162 = vmax.f32 %v1156, 0.0
        %v1163 = vpack.c.bf16 %v1160, %v1159
        %v1164 = vpack.c.bf16 %v1162, %v1161
        %v1166 = vlaneseq
        %v1167 = vshrl.u32 %v1166, 7
        %v1168 = vsub.s32 0, %v1167
        %v1169 = vrot.slane %v977, %v1168
        %v1187 = vunpack.c.l.b16 %v960
        %v1188 = vunpack.c.l.b16 %v961
        %v1189 = vunpack.c.l.b16 %v962
        %v1190 = vunpack.c.l.b16 %v963
        %v1191 = vunpack.c.l.b16 %v964
        %v1192 = vunpack.c.l.b16 %v965
        %v1193 = vunpack.c.l.b16 %v966
        %v1194 = vunpack.c.l.b16 %v967
        %v1195 = vunpack.c.l.b16 %v968
        %v1196 = vunpack.c.l.b16 %v969
        %v1197 = vunpack.c.l.b16 %v970
        %v1198 = vunpack.c.l.b16 %v971
        %v1199 = vunpack.c.l.b16 %v972
        %v1200 = vunpack.c.l.b16 %v973
        %v1201 = vunpack.c.l.b16 %v974
        %v1202 = vunpack.c.l.b16 %v975
        %v1203 = vpack.c.b16 %v1188, %v1187
        %v1204 = vpack.c.b16 %v1190, %v1189
        %v1205 = vpack.c.b16 %v1192, %v1191
        %v1206 = vpack.c.b16 %v1194, %v1193
        %v1207 = vpack.c.b16 %v1196, %v1195
        %v1208 = vpack.c.b16 %v1198, %v1197
        %v1209 = vpack.c.b16 %v1200, %v1199
        %v1210 = vpack.c.b16 %v1202, %v1201
        %1219 = vmatprep.subr.bf16.mxu0 0
        %1220 = vmatpush1.bf16.msra.mxu0 %v1203
        %1221 = vmatprep.subr.bf16.mxu0 0
        %1222 = vmatpush1.bf16.msra.mxu0 %v1204
        %1223 = vmatprep.subr.bf16.mxu0 0
        %1224 = vmatpush1.bf16.msra.mxu0 %v1205
        %1225 = vmatprep.subr.bf16.mxu0 0
        %1226 = vmatpush1.bf16.msra.mxu0 %v1206
        %1227 = vmatprep.subr.bf16.mxu0 0
        %1228 = vmatpush1.bf16.msra.mxu0 %v1207
        %1229 = vmatprep.subr.bf16.mxu0 0
        %1230 = vmatpush1.bf16.msra.mxu0 %v1208
        %1231 = vmatprep.subr.bf16.mxu0 0
        %1232 = vmatpush1.bf16.msra.mxu0 %v1209
        %1233 = vmatprep.subr.bf16.mxu0 0
        %1234 = vmatpush1.bf16.msra.mxu0 %v1210
        %1235 = vmatprep.subr.bf16.mxu0 0
        %1236 = vmatpush1.bf16.msra.mxu0 0
        %1237 = vmatprep.subr.bf16.mxu0 0
        %1238 = vmatpush1.bf16.msra.mxu0 0
        %1239 = vmatprep.subr.bf16.mxu0 0
        %1240 = vmatpush1.bf16.msra.mxu0 0
        %1241 = vmatprep.subr.bf16.mxu0 0
        %1242 = vmatpush1.bf16.msra.mxu0 0
        %1243 = vmatprep.subr.bf16.mxu0 0
        %1244 = vmatpush1.bf16.msra.mxu0 0
        %1245 = vmatprep.subr.bf16.mxu0 0
        %1246 = vmatpush1.bf16.msra.mxu0 0
        %1247 = vmatprep.subr.bf16.mxu0 0
        %1248 = vmatpush1.bf16.msra.mxu0 0
        %1249 = vmatprep.subr.bf16.mxu0 0
        %1250 = vmatpush1.bf16.msra.mxu0 0
        %1251 = vmatprep.mubr.bf16.mxu0 0
        %1252 = vmatmul.mubr.bf16.gmra.mrb[0].mxu0 %v1163
        %v1253 = vpop.f32.mrb[0].mxu0
        %v1254 = vadd.f32 %v1169, %v1253
        %v1255 = vpop.f32.mrb[0].mxu0
        %v1256 = vpop.f32.mrb[0].mxu0
        %v1257 = vadd.f32 %v1169, %v1256
        %v1258 = vpop.f32.mrb[0].mxu0
        %1259 = vmatprep.mubr.bf16.mxu0 0
        %1260 = vmatmul.mubr.bf16.gmra.mrb[0].mxu0 %v1164
        %v1261 = vpop.f32.mrb[0].mxu0
        %v1262 = vadd.f32 %v1169, %v1261
        %v1263 = vpop.f32.mrb[0].mxu0
        %v1264 = vpop.f32.mrb[0].mxu0
        %v1265 = vadd.f32 %v1169, %v1264
        %v1266 = vpop.f32.mrb[0].mxu0
        %1267 = vdwg.mxu0
        %v1268 = vadd.f32 %v932, %v1254
        %v1269 = vadd.f32 %v933, %v1257
        %v1270 = vadd.f32 %v934, %v1262
        %v1271 = vadd.f32 %v935, %v1265
        %v1272 = vpack.c.bf16 %v1269, %v1268
        %v1273 = vpack.c.bf16 %v1271, %v1270
        %v1274 = vld [vmem:[#allocation10] sm:$0xf]
        %v1275 = vld [vmem:[#allocation10 + $0x4] sm:$0xf]
        %v1276 = vld [vmem:[#allocation10 + $0x8] sm:$0xf]
        %v1277 = vld [vmem:[#allocation10 + $0xc] sm:$0xf]
        %v1278 = vld [vmem:[#allocation10 + $0x10] sm:$0xf]
        %v1279 = vld [vmem:[#allocation10 + $0x14] sm:$0xf]
        %v1280 = vld [vmem:[#allocation10 + $0x18] sm:$0xf]
        %v1281 = vld [vmem:[#allocation10 + $0x1c] sm:$0xf]
        %v1282 = vld [vmem:[#allocation10 + $0x20] sm:$0xf]
        %v1283 = vld [vmem:[#allocation10 + $0x24] sm:$0xf]
        %v1284 = vld [vmem:[#allocation10 + $0x28] sm:$0xf]
        %v1285 = vld [vmem:[#allocation10 + $0x2c] sm:$0xf]
        %v1286 = vld [vmem:[#allocation10 + $0x30] sm:$0xf]
        %v1287 = vld [vmem:[#allocation10 + $0x34] sm:$0xf]
        %v1288 = vld [vmem:[#allocation10 + $0x38] sm:$0xf]
        %v1289 = vld [vmem:[#allocation10 + $0x3c] sm:$0xf]
        %v1290 = vld [vmem:[%s10] sm:$0x1]
        %v1292 = vlaneseq
        %v1293 = vshrl.u32 %v1292, 7
        %v1294 = vsub.s32 0, %v1293
        %v1295 = vrot.slane %v1290, %v1294
        %v1313 = vunpack.c.l.b16 %v1274
        %v1314 = vunpack.c.l.b16 %v1275
        %v1315 = vunpack.c.l.b16 %v1276
        %v1316 = vunpack.c.l.b16 %v1277
        %v1317 = vunpack.c.l.b16 %v1278
        %v1318 = vunpack.c.l.b16 %v1279
        %v1319 = vunpack.c.l.b16 %v1280
        %v1320 = vunpack.c.l.b16 %v1281
        %v1321 = vunpack.c.l.b16 %v1282
        %v1322 = vunpack.c.l.b16 %v1283
        %v1323 = vunpack.c.l.b16 %v1284
        %v1324 = vunpack.c.l.b16 %v1285
        %v1325 = vunpack.c.l.b16 %v1286
        %v1326 = vunpack.c.l.b16 %v1287
        %v1327 = vunpack.c.l.b16 %v1288
        %v1328 = vunpack.c.l.b16 %v1289
        %v1329 = vpack.c.b16 %v1314, %v1313
        %v1330 = vpack.c.b16 %v1316, %v1315
        %v1331 = vpack.c.b16 %v1318, %v1317
        %v1332 = vpack.c.b16 %v1320, %v1319
        %v1333 = vpack.c.b16 %v1322, %v1321
        %v1334 = vpack.c.b16 %v1324, %v1323
        %v1335 = vpack.c.b16 %v1326, %v1325
        %v1336 = vpack.c.b16 %v1328, %v1327
        %1345 = vmatprep.subr.bf16.mxu0 0
        %1346 = vmatpush1.bf16.msra.mxu0 %v1329
        %1347 = vmatprep.subr.bf16.mxu0 0
        %1348 = vmatpush1.bf16.msra.mxu0 %v1330
        %1349 = vmatprep.subr.bf16.mxu0 0
        %1350 = vmatpush1.bf16.msra.mxu0 %v1331
        %1351 = vmatprep.subr.bf16.mxu0 0
        %1352 = vmatpush1.bf16.msra.mxu0 %v1332
        %1353 = vmatprep.subr.bf16.mxu0 0
        %1354 = vmatpush1.bf16.msra.mxu0 %v1333
        %1355 = vmatprep.subr.bf16.mxu0 0
        %1356 = vmatpush1.bf16.msra.mxu0 %v1334
        %1357 = vmatprep.subr.bf16.mxu0 0
        %1358 = vmatpush1.bf16.msra.mxu0 %v1335
        %1359 = vmatprep.subr.bf16.mxu0 0
        %1360 = vmatpush1.bf16.msra.mxu0 %v1336
        %1361 = vmatprep.subr.bf16.mxu0 0
        %1362 = vmatpush1.bf16.msra.mxu0 0
        %1363 = vmatprep.subr.bf16.mxu0 0
        %1364 = vmatpush1.bf16.msra.mxu0 0
        %1365 = vmatprep.subr.bf16.mxu0 0
        %1366 = vmatpush1.bf16.msra.mxu0 0
        %1367 = vmatprep.subr.bf16.mxu0 0
        %1368 = vmatpush1.bf16.msra.mxu0 0
        %1369 = vmatprep.subr.bf16.mxu0 0
        %1370 = vmatpush1.bf16.msra.mxu0 0
        %1371 = vmatprep.subr.bf16.mxu0 0
        %1372 = vmatpush1.bf16.msra.mxu0 0
        %1373 = vmatprep.subr.bf16.mxu0 0
        %1374 = vmatpush1.bf16.msra.mxu0 0
        %1375 = vmatprep.subr.bf16.mxu0 0
        %1376 = vmatpush1.bf16.msra.mxu0 0
        %1377 = vmatprep.mubr.bf16.mxu0 0
        %1378 = vmatmul.mubr.bf16.gmra.mrb[0].mxu0 %v1272
        %v1379 = vpop.f32.mrb[0].mxu0
        %v1380 = vadd.f32 %v1295, %v1379
        %v1381 = vpop.f32.mrb[0].mxu0
        %v1382 = vpop.f32.mrb[0].mxu0
        %v1383 = vadd.f32 %v1295, %v1382
        %v1384 = vpop.f32.mrb[0].mxu0
        %1385 = vmatprep.mubr.bf16.mxu0 0
        %1386 = vmatmul.mubr.bf16.gmra.mrb[0].mxu0 %v1273
        %v1387 = vpop.f32.mrb[0].mxu0
        %v1388 = vadd.f32 %v1295, %v1387
        %v1389 = vpop.f32.mrb[0].mxu0
        %v1390 = vpop.f32.mrb[0].mxu0
        %v1391 = vadd.f32 %v1295, %v1390
        %v1392 = vpop.f32.mrb[0].mxu0
        %1393 = vdwg.mxu0
        %1394 = vst [vmem:[%s462] sm:$0xff] %v1380
        %1395 = vst [vmem:[%s462 + $0x8] sm:$0xff] %v1383
        %1396 = vst [vmem:[%s462 + $0x10] sm:$0xff] %v1388
        %1397 = vst [vmem:[%s462 + $0x18] sm:$0xff] %v1391
        %s1398 = sand.u32 %s274, 1
        %s1399 = scalar_lea.sflag [#allocation4], %s1398
        %s1400 = sand.u32 %s274, 1
        %s1401 = smul.addr %s1400, 32
        %s1402 = scalar_lea.vmem [#allocation11], %s1401
        // Predicated region
        $region85: #{tpu_custom_call.1} parent=63 // pred_check
          %p1403 = pneg %p284
        $region86: #{tpu_custom_call.1} parent=63 // pred_check_branch
          %1405 = sbr.rel (%p1403) target = $region88
        $region87: #{tpu_custom_call.1} parent=63 // pred_region
          %s1406 = smul.u32 4, %s30
          %s1408 = ssub.s32 512, 512
          %1409 = vsyncadd %s1399, %s1408
          %s1410 = smul.addr %s1406, 128
          %s1411 = scalar_lea.hbm %s11, %s1410
          %s1412 = sshll.u32 %s1402, 4
          %s1413 = int_to_ptr.vmem [resolvable:$true] %s1412
          %1418 = dma.vmem_to_hbm [thread:$0]  %s1413, 512, %s1411, %s1399, 128, 128, 8
        $region88: #{tpu_custom_call.1} parent=63 // pred_fallthru
          _
      $region64: #{tpu_custom_call.1} parent=5 // pred_fallthru
        _
      %p1419 = scmp.le.s32.totalorder 2, %s25
      // Predicated region
      $region89: #{tpu_custom_call.1} parent=5 // pred_check
        %p1420 = pneg %p1419
      $region90: #{tpu_custom_call.1} parent=5 // pred_check_branch
        %1422 = sbr.rel (%p1420) target = $region92
      $region91: #{tpu_custom_call.1} parent=5 // pred_region
        %s1423 = ssub.s32 %s25, 2
        // Predicated region
        $region93: #{tpu_custom_call.1} parent=91 // pred_check
          %p1424 = pneg %p290
        $region94: #{tpu_custom_call.1} parent=91 // pred_check_branch
          %1426 = sbr.rel (%p1424) target = $region96
        $region95: #{tpu_custom_call.1} parent=91 // pred_region
          %s1427 = sand.u32 %s275, 1
          %s1428 = scalar_lea.sflag [#allocation4], %s1427
          %s1429 = sand.u32 %s275, 1
          %s1430 = smul.addr %s1429, 32
          %s1431 = scalar_lea.vmem [#allocation11], %s1430
          %1432 = dma.done %s1428, 512
        $region96: #{tpu_custom_call.1} parent=91 // pred_fallthru
          _
      $region92: #{tpu_custom_call.1} parent=5 // pred_fallthru
        _
    $region6: #{tpu_custom_call.1} parent=1 // loop_footer
      %s29 = sadd.s32 1, %s25
    $region7: #{tpu_custom_call.1} parent=1 // loop_footer_branch
      %24 = sbr.rel target = $region3
    $region8: #{tpu_custom_call.1} parent=1 // loop_exit
      _
    %1433 = vsyncpa [#allocation3], 1
    %s1434 = scalar_lea.sflag [#allocation3], 1
    %1435 = vsyncpa %s1434, 1
    %1436 = vsyncpa [#allocation6], 1
    %1437 = vsyncpa [#allocation9], 1
    %1438 = vsyncpa [#allocation4], 1
    %s1439 = scalar_lea.sflag [#allocation4], 1
    %1440 = vsyncpa %s1439, 1

// kernel: tpu_custom_call.1
$region0: #{tpu_custom_call.1}
  #allocation0 [shape = 'u32[]', space=smem, size = 0x4, offset = 0x4, fixed_abs, tag = 'smem constant byte address 0x4 - core index']
  #allocation1 [shape = 'u32[144,128]{1,0:T(1,128)}', space=vmem, size = 0x12000, scoped, tag = 'internal scratch']
  %s0 = inlined_call_operand.hbm [shape: bf16[64,128], index: 0, kind: input, shape index: {}]
  %s1 = inlined_call_operand.hbm [shape: bf16[128,128], index: 1, kind: input, shape index: {}]
  %s2 = inlined_call_operand.vmem [shape: f32[1,128], index: 2, kind: input, shape index: {}]
  %s3 = inlined_call_operand.vmem [shape: f32[2,1,128], index: 3, kind: input, shape index: {}]
  %s4 = inlined_call_operand.vmem [shape: f32[2,1,128], index: 4, kind: input, shape index: {}]
  %s5 = inlined_call_operand.hbm [shape: bf16[2,128,128], index: 5, kind: input, shape index: {}]
  %s6 = inlined_call_operand.vmem [shape: f32[2,1,128], index: 6, kind: input, shape index: {}]
  %s7 = inlined_call_operand.hbm [shape: bf16[2,128,128], index: 7, kind: input, shape index: {}]
  %s8 = inlined_call_operand.vmem [shape: f32[2,1,128], index: 8, kind: input, shape index: {}]
  %s9 = inlined_call_operand.hbm [shape: bf16[128,128], index: 9, kind: input, shape index: {}]
  %s10 = inlined_call_operand.vmem [shape: f32[1,128], index: 10, kind: input, shape index: {}]
  %s11 = inlined_call_operand.hbm [shape: f32[64,128], index: 11, kind: output, shape index: {}]
  %s12 = sld [smem:[#allocation0]]
  $region97: #{tpu_custom_call.1} parent=0
    _
  %s14 = ssub.s32 1, %s12
  %s15 = scalar_select 0, %s14, %s12
  $region1: #{tpu_custom_call.1} parent=0
    #allocation2 [shape = 'u8[16384]{0}', space=vmem, size = 0x4000, scoped, tag = 'input window, operand 0']
    #allocation3 [shape = 's32[2]{0}', space=sflag, size = 0x8, scoped, tag = 'scoped memory for tpu_custom_call.1']
    #allocation4 [shape = 's32[2]{0}', space=sflag, size = 0x8, scoped, tag = 'scoped memory for tpu_custom_call.1']
    #allocation5 [shape = 'u8[32768]{0}', space=vmem, size = 0x8000, scoped, tag = 'input window, operand 1, single buffered']
    #allocation6 [shape = 's32[1]{0}', space=sflag, size = 0x4, scoped, tag = 'scoped memory for tpu_custom_call.1']
    #allocation7 [shape = 'u8[65536]{0}', space=vmem, size = 0x10000, scoped, tag = 'input window, operand 5, single buffered']
    #allocation8 [shape = 'u8[65536]{0}', space=vmem, size = 0x10000, scoped, tag = 'input window, operand 7, single buffered']
    #allocation9 [shape = 's32[1]{0}', space=sflag, size = 0x4, scoped, tag = 'scoped memory for tpu_custom_call.1']
    #allocation10 [shape = 'u8[32768]{0}', space=vmem, size = 0x8000, scoped, tag = 'input window, operand 9, single buffered']
    #allocation11 [shape = 'u8[32768]{0}', space=vmem, size = 0x8000, scoped, tag = 'output window, operand 0']
    %16 = vsyncpa [#allocation3], 0
    %s17 = scalar_lea.sflag [#allocation3], 1
    %18 = vsyncpa %s17, 0
    %19 = vsyncpa [#allocation6], 0
    %20 = vsyncpa [#allocation9], 0
    %21 = vsyncpa [#allocation4], 0
    %s22 = scalar_lea.sflag [#allocation4], 1
    %23 = vsyncpa %s22, 0
    loop: start=0, step=1, limit=4
    $region2: #{tpu_custom_call.1} parent=1 // loop_pre_header
      _
    $region3: #{tpu_custom_call.1} parent=1 // loop_header
      %s25 = sphi 0, %s29
      %p26 = scmp.ge.s32.totalorder %s25, 4
      %s35 = sphi 0, %s37
      %s38 = sphi 0, %s35
      %s39 = sphi 0, %s38
      %s55 = sphi 0, %s39
      %s59 = sphi 0, %s59
      %s61 = sphi 0, %s59
      %s62 = sphi 0, %s61
      %s76 = sphi 0, %s62
      %s80 = sphi 0, %s80
      %s82 = sphi 0, %s80
      %s83 = sphi 0, %s82
      %s97 = sphi 0, %s83
      %s101 = sphi 0, %s101
      %s103 = sphi 0, %s101
      %s104 = sphi 0, %s103
      %s118 = sphi 0, %s104
      %s122 = sphi 0, %s122
      %s124 = sphi 0, %s122
      %s125 = sphi 0, %s124
      %s139 = sphi 0, %s125
      %s143 = sphi 0, %s143
      %s145 = sphi 0, %s143
      %s146 = sphi 0, %s145
      %s160 = sphi 0, %s146
      %s164 = sphi 0, %s164
      %s166 = sphi 0, %s164
      %s167 = sphi 0, %s166
      %s181 = sphi 0, %s167
      %s185 = sphi 0, %s185
      %s187 = sphi 0, %s185
      %s188 = sphi 0, %s187
      %s202 = sphi 0, %s188
      %s206 = sphi 0, %s206
      %s208 = sphi 0, %s206
      %s209 = sphi 0, %s208
      %s223 = sphi 0, %s209
      %s227 = sphi 0, %s227
      %s229 = sphi 0, %s227
      %s230 = sphi 0, %s229
      %s244 = sphi 0, %s230
      %s248 = sphi 0, %s248
      %s250 = sphi 0, %s248
      %s251 = sphi 0, %s250
      %s265 = sphi 0, %s251
      %s271 = sphi 0, %s273
      %s274 = sphi 0, %s271
      %s275 = sphi 0, %s274
      %s291 = sphi 0, %s275
    $region4: #{tpu_custom_call.1} parent=1 // loop_header_branch
      %28 = sbr.rel (%p26) target = $region8
    $region5: #{tpu_custom_call.1} parent=1 // loop_body
      %s30 = ssub.s32 %s25, 1
      %s31 = ssub.s32 %s25, 2
      %s32 = sadd.s32 %s25, 1
      %s33 = ssub.s32 %s25, %s32
      %p34 = scmp.eq.s32.totalorder %s33, 0
      %s36 = sadd.s32 %s35, 1
      %s37 = scalar_select %p34, %s35, %s36
      %p40 = pneg %p34
      %p41 = scmp.eq.s32.totalorder %s25, 1
      %p42 = por %p40, %p41
      %p43 = scmp.ne.s32.totalorder %s35, %s38
      %p44 = scmp.eq.s32.totalorder %s25, 0
      %p45 = por %p43, %p44
      %p46 = scmp.ne.s32.totalorder %s35, %s38
      %p47 = scmp.eq.s32.totalorder %s30, 1
      %p48 = por %p46, %p47
      %p49 = scmp.ne.s32.totalorder %s38, %s39
      %p50 = scmp.eq.s32.totalorder %s30, 0
      %p51 = por %p49, %p50
      %p52 = scmp.ne.s32.totalorder %s38, %s39
      %p53 = scmp.eq.s32.totalorder %s31, 1
      %p54 = por %p52, %p53
      %p56 = scmp.ne.s32.totalorder %s39, %s55
      %p57 = scmp.eq.s32.totalorder %s31, 0
      %p58 = por %p56, %p57
      %s60 = sadd.s32 %s59, 1
      %p63 = scmp.eq.s32.totalorder %s25, 1
      %p64 = scmp.ne.s32.totalorder %s59, %s61
      %p65 = scmp.eq.s32.totalorder %s25, 0
      %p66 = por %p64, %p65
      %p67 = scmp.ne.s32.totalorder %s59, %s61
      %p68 = scmp.eq.s32.totalorder %s30, 1
      %p69 = por %p67, %p68
      %p70 = scmp.ne.s32.totalorder %s61, %s62
      %p71 = scmp.eq.s32.totalorder %s30, 0
      %p72 = por %p70, %p71
      %p73 = scmp.ne.s32.totalorder %s61, %s62
      %p74 = scmp.eq.s32.totalorder %s31, 1
      %p75 = por %p73, %p74
      %p77 = scmp.ne.s32.totalorder %s62, %s76
      %p78 = scmp.eq.s32.totalorder %s31, 0
      %p79 = por %p77, %p78
      %s81 = sadd.s32 %s80, 1
      %p84 = scmp.eq.s32.totalorder %s25, 1
      %p85 = scmp.ne.s32.totalorder %s80, %s82
      %p86 = scmp.eq.s32.totalorder %s25, 0
      %p87 = por %p85, %p86
      %p88 = scmp.ne.s32.totalorder %s80, %s82
      %p89 = scmp.eq.s32.totalorder %s30, 1
      %p90 = por %p88, %p89
      %p91 = scmp.ne.s32.totalorder %s82, %s83
      %p92 = scmp.eq.s32.totalorder %s30, 0
      %p93 = por %p91, %p92
      %p94 = scmp.ne.s32.totalorder %s82, %s83
      %p95 = scmp.eq.s32.totalorder %s31, 1
      %p96 = por %p94, %p95
      %p98 = scmp.ne.s32.totalorder %s83, %s97
      %p99 = scmp.eq.s32.totalorder %s31, 0
      %p100 = por %p98, %p99
      %s102 = sadd.s32 %s101, 1
      %p105 = scmp.eq.s32.totalorder %s25, 1
      %p106 = scmp.ne.s32.totalorder %s101, %s103
      %p107 = scmp.eq.s32.totalorder %s25, 0
      %p108 = por %p106, %p107
      %p109 = scmp.ne.s32.totalorder %s101, %s103
      %p110 = scmp.eq.s32.totalorder %s30, 1
      %p111 = por %p109, %p110
      %p112 = scmp.ne.s32.totalorder %s103, %s104
      %p113 = scmp.eq.s32.totalorder %s30, 0
      %p114 = por %p112, %p113
      %p115 = scmp.ne.s32.totalorder %s103, %s104
      %p116 = scmp.eq.s32.totalorder %s31, 1
      %p117 = por %p115, %p116
      %p119 = scmp.ne.s32.totalorder %s104, %s118
      %p120 = scmp.eq.s32.totalorder %s31, 0
      %p121 = por %p119, %p120
      %s123 = sadd.s32 %s122, 1
      %p126 = scmp.eq.s32.totalorder %s25, 1
      %p127 = scmp.ne.s32.totalorder %s122, %s124
      %p128 = scmp.eq.s32.totalorder %s25, 0
      %p129 = por %p127, %p128
      %p130 = scmp.ne.s32.totalorder %s122, %s124
      %p131 = scmp.eq.s32.totalorder %s30, 1
      %p132 = por %p130, %p131
      %p133 = scmp.ne.s32.totalorder %s124, %s125
      %p134 = scmp.eq.s32.totalorder %s30, 0
      %p135 = por %p133, %p134
      %p136 = scmp.ne.s32.totalorder %s124, %s125
      %p137 = scmp.eq.s32.totalorder %s31, 1
      %p138 = por %p136, %p137
      %p140 = scmp.ne.s32.totalorder %s125, %s139
      %p141 = scmp.eq.s32.totalorder %s31, 0
      %p142 = por %p140, %p141
      %s144 = sadd.s32 %s143, 1
      %p147 = scmp.eq.s32.totalorder %s25, 1
      %p148 = scmp.ne.s32.totalorder %s143, %s145
      %p149 = scmp.eq.s32.totalorder %s25, 0
      %p150 = por %p148, %p149
      %p151 = scmp.ne.s32.totalorder %s143, %s145
      %p152 = scmp.eq.s32.totalorder %s30, 1
      %p153 = por %p151, %p152
      %p154 = scmp.ne.s32.totalorder %s145, %s146
      %p155 = scmp.eq.s32.totalorder %s30, 0
      %p156 = por %p154, %p155
      %p157 = scmp.ne.s32.totalorder %s145, %s146
      %p158 = scmp.eq.s32.totalorder %s31, 1
      %p159 = por %p157, %p158
      %p161 = scmp.ne.s32.totalorder %s146, %s160
      %p162 = scmp.eq.s32.totalorder %s31, 0
      %p163 = por %p161, %p162
      %s165 = sadd.s32 %s164, 1
      %p168 = scmp.eq.s32.totalorder %s25, 1
      %p169 = scmp.ne.s32.totalorder %s164, %s166
      %p170 = scmp.eq.s32.totalorder %s25, 0
      %p171 = por %p169, %p170
      %p172 = scmp.ne.s32.totalorder %s164, %s166
      %p173 = scmp.eq.s32.totalorder %s30, 1
      %p174 = por %p172, %p173
      %p175 = scmp.ne.s32.totalorder %s166, %s167
      %p176 = scmp.eq.s32.totalorder %s30, 0
      %p177 = por %p175, %p176
      %p178 = scmp.ne.s32.totalorder %s166, %s167
      %p179 = scmp.eq.s32.totalorder %s31, 1
      %p180 = por %p178, %p179
      %p182 = scmp.ne.s32.totalorder %s167, %s181
      %p183 = scmp.eq.s32.totalorder %s31, 0
      %p184 = por %p182, %p183
      %s186 = sadd.s32 %s185, 1
      %p189 = scmp.eq.s32.totalorder %s25, 1
      %p190 = scmp.ne.s32.totalorder %s185, %s187
      %p191 = scmp.eq.s32.totalorder %s25, 0
      %p192 = por %p190, %p191
      %p193 = scmp.ne.s32.totalorder %s185, %s187
      %p194 = scmp.eq.s32.totalorder %s30, 1
      %p195 = por %p193, %p194
      %p196 = scmp.ne.s32.totalorder %s187, %s188
      %p197 = scmp.eq.s32.totalorder %s30, 0
      %p198 = por %p196, %p197
      %p199 = scmp.ne.s32.totalorder %s187, %s188
      %p200 = scmp.eq.s32.totalorder %s31, 1
      %p201 = por %p199, %p200
      %p203 = scmp.ne.s32.totalorder %s188, %s202
      %p204 = scmp.eq.s32.totalorder %s31, 0
      %p205 = por %p203, %p204
      %s207 = sadd.s32 %s206, 1
      %p210 = scmp.eq.s32.totalorder %s25, 1
      %p211 = scmp.ne.s32.totalorder %s206, %s208
      %p212 = scmp.eq.s32.totalorder %s25, 0
      %p213 = por %p211, %p212
      %p214 = scmp.ne.s32.totalorder %s206, %s208
      %p215 = scmp.eq.s32.totalorder %s30, 1
      %p216 = por %p214, %p215
      %p217 = scmp.ne.s32.totalorder %s208, %s209
      %p218 = scmp.eq.s32.totalorder %s30, 0
      %p219 = por %p217, %p218
      %p220 = scmp.ne.s32.totalorder %s208, %s209
      %p221 = scmp.eq.s32.totalorder %s31, 1
      %p222 = por %p220, %p221
      %p224 = scmp.ne.s32.totalorder %s209, %s223
      %p225 = scmp.eq.s32.totalorder %s31, 0
      %p226 = por %p224, %p225
      %s228 = sadd.s32 %s227, 1
      %p231 = scmp.eq.s32.totalorder %s25, 1
      %p232 = scmp.ne.s32.totalorder %s227, %s229
      %p233 = scmp.eq.s32.totalorder %s25, 0
      %p234 = por %p232, %p233
      %p235 = scmp.ne.s32.totalorder %s227, %s229
      %p236 = scmp.eq.s32.totalorder %s30, 1
      %p237 = por %p235, %p236
      %p238 = scmp.ne.s32.totalorder %s229, %s230
      %p239 = scmp.eq.s32.totalorder %s30, 0
      %p240 = por %p238, %p239
      %p241 = scmp.ne.s32.totalorder %s229, %s230
      %p242 = scmp.eq.s32.totalorder %s31, 1
      %p243 = por %p241, %p242
      %p245 = scmp.ne.s32.totalorder %s230, %s244
      %p246 = scmp.eq.s32.totalorder %s31, 0
      %p247 = por %p245, %p246
      %s249 = sadd.s32 %s248, 1
      %p252 = scmp.eq.s32.totalorder %s25, 1
      %p253 = scmp.ne.s32.totalorder %s248, %s250
      %p254 = scmp.eq.s32.totalorder %s25, 0
      %p255 = por %p253, %p254
      %p256 = scmp.ne.s32.totalorder %s248, %s250
      %p257 = scmp.eq.s32.totalorder %s30, 1
      %p258 = por %p256, %p257
      %p259 = scmp.ne.s32.totalorder %s250, %s251
      %p260 = scmp.eq.s32.totalorder %s30, 0
      %p261 = por %p259, %p260
      %p262 = scmp.ne.s32.totalorder %s250, %s251
      %p263 = scmp.eq.s32.totalorder %s31, 1
      %p264 = por %p262, %p263
      %p266 = scmp.ne.s32.totalorder %s251, %s265
      %p267 = scmp.eq.s32.totalorder %s31, 0
      %p268 = por %p266, %p267
      %s269 = ssub.s32 %s25, %s32
      %p270 = scmp.eq.s32.totalorder %s269, 0
      %s272 = sadd.s32 %s271, 1
      %s273 = scalar_select %p270, %s271, %s272
      %p276 = pneg %p270
      %p277 = scmp.eq.s32.totalorder %s25, 1
      %p278 = por %p276, %p277
      %p279 = scmp.ne.s32.totalorder %s271, %s274
      %p280 = scmp.eq.s32.totalorder %s25, 0
      %p281 = por %p279, %p280
      %p282 = scmp.ne.s32.totalorder %s271, %s274
      %p283 = scmp.eq.s32.totalorder %s30, 1
      %p284 = por %p282, %p283
      %p285 = scmp.ne.s32.totalorder %s274, %s275
      %p286 = scmp.eq.s32.totalorder %s30, 0
      %p287 = por %p285, %p286
      %p288 = scmp.ne.s32.totalorder %s274, %s275
      %p289 = scmp.eq.s32.totalorder %s31, 1
      %p290 = por %p288, %p289
      %p292 = scmp.ne.s32.totalorder %s275, %s291
      %p293 = scmp.eq.s32.totalorder %s31, 0
      %p294 = por %p292, %p293
      %p295 = scmp.le.s32.totalorder 1, %s25
      %p296 = scmp.lt.s32.totalorder %s25, 3
      %p297 = pnand %p295, %p296
      %p298 = pneg %p297
      // Predicated region
      $region9: #{tpu_custom_call.1} parent=5 // pred_check
        _
      $region10: #{tpu_custom_call.1} parent=5 // pred_check_branch
        %300 = sbr.rel (%p297) target = $region12
      $region11: #{tpu_custom_call.1} parent=5 // pred_region
        %s301 = ssub.s32 %s25, 1
        // Predicated region
        $region13: #{tpu_custom_call.1} parent=11 // pred_check
          %p302 = pneg %p72
        $region14: #{tpu_custom_call.1} parent=11 // pred_check_branch
          %304 = sbr.rel (%p302) target = $region16
        $region15: #{tpu_custom_call.1} parent=11 // pred_region
          %s306 = ssub.s32 1024, 1024
          %307 = vsyncadd [#allocation6], %s306
          %s308 = sshll.u32 [#allocation5], 4
          %s309 = int_to_ptr.vmem [resolvable:$true] %s308
          %314 = dma.hbm_to_vmem [thread:$0]  %s1, 1024, %s309, [#allocation6], 64, 64, 4
        $region16: #{tpu_custom_call.1} parent=11 // pred_fallthru
          _
        // Predicated region
        $region17: #{tpu_custom_call.1} parent=11 // pred_check
          %p315 = pneg %p93
        $region18: #{tpu_custom_call.1} parent=11 // pred_check_branch
          %317 = sbr.rel (%p315) target = $region20
        $region19: #{tpu_custom_call.1} parent=11 // pred_region
          _
        $region20: #{tpu_custom_call.1} parent=11 // pred_fallthru
          _
        // Predicated region
        $region21: #{tpu_custom_call.1} parent=11 // pred_check
          %p318 = pneg %p114
        $region22: #{tpu_custom_call.1} parent=11 // pred_check_branch
          %320 = sbr.rel (%p318) target = $region24
        $region23: #{tpu_custom_call.1} parent=11 // pred_region
          _
        $region24: #{tpu_custom_call.1} parent=11 // pred_fallthru
          _
        // Predicated region
        $region25: #{tpu_custom_call.1} parent=11 // pred_check
          %p321 = pneg %p135
        $region26: #{tpu_custom_call.1} parent=11 // pred_check_branch
          %323 = sbr.rel (%p321) target = $region28
        $region27: #{tpu_custom_call.1} parent=11 // pred_region
          _
        $region28: #{tpu_custom_call.1} parent=11 // pred_fallthru
          _
        // Predicated region
        $region29: #{tpu_custom_call.1} parent=11 // pred_check
          %p324 = pneg %p156
        $region30: #{tpu_custom_call.1} parent=11 // pred_check_branch
          %326 = sbr.rel (%p324) target = $region32
        $region31: #{tpu_custom_call.1} parent=11 // pred_region
          %s328 = ssub.s32 2048, 2048
          %329 = vsyncadd [#allocation6], %s328
          %s330 = sshll.u32 [#allocation7], 4
          %s331 = int_to_ptr.vmem [resolvable:$true] %s330
          %336 = dma.hbm_to_vmem [thread:$0]  %s5, 2048, %s331, [#allocation6], 64, 64, 4
        $region32: #{tpu_custom_call.1} parent=11 // pred_fallthru
          _
        // Predicated region
        $region33: #{tpu_custom_call.1} parent=11 // pred_check
          %p337 = pneg %p177
        $region34: #{tpu_custom_call.1} parent=11 // pred_check_branch
          %339 = sbr.rel (%p337) target = $region36
        $region35: #{tpu_custom_call.1} parent=11 // pred_region
          _
        $region36: #{tpu_custom_call.1} parent=11 // pred_fallthru
          _
        // Predicated region
        $region37: #{tpu_custom_call.1} parent=11 // pred_check
          %p340 = pneg %p198
        $region38: #{tpu_custom_call.1} parent=11 // pred_check_branch
          %342 = sbr.rel (%p340) target = $region40
        $region39: #{tpu_custom_call.1} parent=11 // pred_region
          %s344 = ssub.s32 2048, 2048
          %345 = vsyncadd [#allocation9], %s344
          %s346 = sshll.u32 [#allocation8], 4
          %s347 = int_to_ptr.vmem [resolvable:$true] %s346
          %352 = dma.hbm_to_vmem [thread:$0]  %s7, 2048, %s347, [#allocation9], 64, 64, 4
        $region40: #{tpu_custom_call.1} parent=11 // pred_fallthru
          _
        // Predicated region
        $region41: #{tpu_custom_call.1} parent=11 // pred_check
          %p353 = pneg %p219
        $region42: #{tpu_custom_call.1} parent=11 // pred_check_branch
          %355 = sbr.rel (%p353) target = $region44
        $region43: #{tpu_custom_call.1} parent=11 // pred_region
          _
        $region44: #{tpu_custom_call.1} parent=11 // pred_fallthru
          _
        // Predicated region
        $region45: #{tpu_custom_call.1} parent=11 // pred_check
          %p356 = pneg %p240
        $region46: #{tpu_custom_call.1} parent=11 // pred_check_branch
          %358 = sbr.rel (%p356) target = $region48
        $region47: #{tpu_custom_call.1} parent=11 // pred_region
          %s360 = ssub.s32 1024, 1024
          %361 = vsyncadd [#allocation9], %s360
          %s362 = sshll.u32 [#allocation10], 4
          %s363 = int_to_ptr.vmem [resolvable:$true] %s362
          %368 = dma.hbm_to_vmem [thread:$0]  %s9, 1024, %s363, [#allocation9], 64, 64, 4
        $region48: #{tpu_custom_call.1} parent=11 // pred_fallthru
          _
        // Predicated region
        $region49: #{tpu_custom_call.1} parent=11 // pred_check
          %p369 = pneg %p261
        $region50: #{tpu_custom_call.1} parent=11 // pred_check_branch
          %371 = sbr.rel (%p369) target = $region52
        $region51: #{tpu_custom_call.1} parent=11 // pred_region
          _
        $region52: #{tpu_custom_call.1} parent=11 // pred_fallthru
          _
      $region12: #{tpu_custom_call.1} parent=5 // pred_fallthru
        _
      %p372 = scmp.lt.s32.totalorder %s25, 2
      // Predicated region
      $region53: #{tpu_custom_call.1} parent=5 // pred_check
        %p373 = pneg %p372
      $region54: #{tpu_custom_call.1} parent=5 // pred_check_branch
        %375 = sbr.rel (%p373) target = $region56
      $region55: #{tpu_custom_call.1} parent=5 // pred_region
        // Predicated region
        $region57: #{tpu_custom_call.1} parent=55 // pred_check
          %p376 = pneg %p45
        $region58: #{tpu_custom_call.1} parent=55 // pred_check_branch
          %378 = sbr.rel (%p376) target = $region60
        $region59: #{tpu_custom_call.1} parent=55 // pred_region
          %s379 = sand.u32 %s35, 1
          %s380 = scalar_lea.sflag [#allocation3], %s379
          %s381 = sand.u32 %s35, 1
          %s382 = smul.addr %s381, 16
          %s383 = scalar_lea.vmem [#allocation2], %s382
          %s384 = smul.u32 4, %s25
          %s386 = ssub.s32 256, 256
          %387 = vsyncadd %s380, %s386
          %s388 = smul.addr %s384, 64
          %s389 = scalar_lea.hbm %s0, %s388
          %s390 = sshll.u32 %s383, 4
          %s391 = int_to_ptr.vmem [resolvable:$true] %s390
          %396 = dma.hbm_to_vmem [thread:$0]  %s389, 256, %s391, %s380, 64, 64, 4
        $region60: #{tpu_custom_call.1} parent=55 // pred_fallthru
          _
      $region56: #{tpu_custom_call.1} parent=5 // pred_fallthru
        _
      %p397 = scmp.le.s32.totalorder 1, %s25
      %p398 = scmp.lt.s32.totalorder %s25, 3
      %p399 = pnand %p397, %p398
      %p400 = pneg %p399
      // Predicated region
      $region61: #{tpu_custom_call.1} parent=5 // pred_check
        _
      $region62: #{tpu_custom_call.1} parent=5 // pred_check_branch
        %402 = sbr.rel (%p399) target = $region64
      $region63: #{tpu_custom_call.1} parent=5 // pred_region
        %s403 = ssub.s32 %s25, 1
        %s404 = sand.u32 %s38, 1
        %s405 = scalar_lea.sflag [#allocation3], %s404
        %s406 = sand.u32 %s38, 1
        %s407 = smul.addr %s406, 16
        %s408 = scalar_lea.vmem [#allocation2], %s407
        // Predicated region
        $region65: #{tpu_custom_call.1} parent=63 // pred_check
          %p409 = pneg %p51
        $region66: #{tpu_custom_call.1} parent=63 // pred_check_branch
          %411 = sbr.rel (%p409) target = $region68
        $region67: #{tpu_custom_call.1} parent=63 // pred_region
          %412 = dma.done %s405, 256
        $region68: #{tpu_custom_call.1} parent=63 // pred_fallthru
          _
        // Predicated region
        $region69: #{tpu_custom_call.1} parent=63 // pred_check
          %p413 = pneg %p72
        $region70: #{tpu_custom_call.1} parent=63 // pred_check_branch
          %415 = sbr.rel (%p413) target = $region72
        $region71: #{tpu_custom_call.1} parent=63 // pred_region
          %416 = dma.done [#allocation6], 1024
        $region72: #{tpu_custom_call.1} parent=63 // pred_fallthru
          _
        // Predicated region
        $region73: #{tpu_custom_call.1} parent=63 // pred_check
          %p417 = pneg %p156
        $region74: #{tpu_custom_call.1} parent=63 // pred_check_branch
          %419 = sbr.rel (%p417) target = $region76
        $region75: #{tpu_custom_call.1} parent=63 // pred_region
          %420 = dma.done [#allocation6], 2048
        $region76: #{tpu_custom_call.1} parent=63 // pred_fallthru
          _
        // Predicated region
        $region77: #{tpu_custom_call.1} parent=63 // pred_check
          %p421 = pneg %p198
        $region78: #{tpu_custom_call.1} parent=63 // pred_check_branch
          %423 = sbr.rel (%p421) target = $region80
        $region79: #{tpu_custom_call.1} parent=63 // pred_region
          %424 = dma.done [#allocation9], 2048
        $region80: #{tpu_custom_call.1} parent=63 // pred_fallthru
          _
        // Predicated region
        $region81: #{tpu_custom_call.1} parent=63 // pred_check
          %p425 = pneg %p240
        $region82: #{tpu_custom_call.1} parent=63 // pred_check_branch
          %427 = sbr.rel (%p425) target = $region84
        $region83: #{tpu_custom_call.1} parent=63 // pred_region
          %428 = dma.done [#allocation9], 1024
        $region84: #{tpu_custom_call.1} parent=63 // pred_fallthru
          _
        %s429 = sand.u32 %s38, 1
        %s430 = scalar_lea.sflag [#allocation3], %s429
        %s431 = sand.u32 %s38, 1
        %s432 = smul.addr %s431, 16
        %s433 = scalar_lea.vmem [#allocation2], %s432
        %p434 = pneg %p51
        %p435 = pneg %p48
        %p436 = pneg %p72
        %p437 = pneg %p69
        %p438 = pneg %p93
        %p439 = pneg %p90
        %p440 = pneg %p114
        %p441 = pneg %p111
        %p442 = pneg %p135
        %p443 = pneg %p132
        %p444 = pneg %p156
        %p445 = pneg %p153
        %p446 = pneg %p177
        %p447 = pneg %p174
        %p448 = pneg %p198
        %p449 = pneg %p195
        %p450 = pneg %p219
        %p451 = pneg %p216
        %p452 = pneg %p240
        %p453 = pneg %p237
        %p454 = pneg %p261
        %p455 = pneg %p258
        %p456 = pneg %p287
        %p457 = pneg %p284
        %s458 = sand.u32 %s274, 1
        %s459 = scalar_lea.sflag [#allocation4], %s458
        %s460 = sand.u32 %s274, 1
        %s461 = smul.addr %s460, 32
        %s462 = scalar_lea.vmem [#allocation11], %s461
        %s463 = smul.u32 4, %s30
        %s464 = smul.u32 4, %s30
        %v466 = vld [vmem:[%s408] sm:$0xf]
        %v467 = vld [vmem:[%s408 + $0x4] sm:$0xf]
        %v468 = vld [vmem:[%s408 + $0x8] sm:$0xf]
        %v469 = vld [vmem:[%s408 + $0xc] sm:$0xf]
        %v470 = vld [vmem:[#allocation5] sm:$0xf]
        %v471 = vld [vmem:[#allocation5 + $0x4] sm:$0xf]
        %v472 = vld [vmem:[#allocation5 + $0x8] sm:$0xf]
        %v473 = vld [vmem:[#allocation5 + $0xc] sm:$0xf]
        %v474 = vld [vmem:[#allocation5 + $0x10] sm:$0xf]
        %v475 = vld [vmem:[#allocation5 + $0x14] sm:$0xf]
        %v476 = vld [vmem:[#allocation5 + $0x18] sm:$0xf]
        %v477 = vld [vmem:[#allocation5 + $0x1c] sm:$0xf]
        %v478 = vld [vmem:[#allocation5 + $0x20] sm:$0xf]
        %v479 = vld [vmem:[#allocation5 + $0x24] sm:$0xf]
        %v480 = vld [vmem:[#allocation5 + $0x28] sm:$0xf]
        %v481 = vld [vmem:[#allocation5 + $0x2c] sm:$0xf]
        %v482 = vld [vmem:[#allocation5 + $0x30] sm:$0xf]
        %v483 = vld [vmem:[#allocation5 + $0x34] sm:$0xf]
        %v484 = vld [vmem:[#allocation5 + $0x38] sm:$0xf]
        %v485 = vld [vmem:[#allocation5 + $0x3c] sm:$0xf]
        %v486 = vld [vmem:[%s2] sm:$0x1]
        %v488 = vlaneseq
        %v489 = vshrl.u32 %v488, 7
        %v490 = vsub.s32 0, %v489
        %v491 = vrot.slane %v486, %v490
        %v497 = vunpack.c.l.b16 %v466
        %v498 = vunpack.c.l.b16 %v467
        %v499 = vunpack.c.l.b16 %v468
        %v500 = vunpack.c.l.b16 %v469
        %v501 = vpack.c.b16 %v498, %v497
        %v502 = vpack.c.b16 %v500, %v499
        %v521 = vunpack.c.l.b16 %v470
        %v522 = vunpack.c.l.b16 %v471
        %v523 = vunpack.c.l.b16 %v472
        %v524 = vunpack.c.l.b16 %v473
        %v525 = vunpack.c.l.b16 %v474
        %v526 = vunpack.c.l.b16 %v475
        %v527 = vunpack.c.l.b16 %v476
        %v528 = vunpack.c.l.b16 %v477
        %v529 = vunpack.c.l.b16 %v478
        %v530 = vunpack.c.l.b16 %v479
        %v531 = vunpack.c.l.b16 %v480
        %v532 = vunpack.c.l.b16 %v481
        %v533 = vunpack.c.l.b16 %v482
        %v534 = vunpack.c.l.b16 %v483
        %v535 = vunpack.c.l.b16 %v484
        %v536 = vunpack.c.l.b16 %v485
        %v537 = vpack.c.b16 %v522, %v521
        %v538 = vpack.c.b16 %v524, %v523
        %v539 = vpack.c.b16 %v526, %v525
        %v540 = vpack.c.b16 %v528, %v527
        %v541 = vpack.c.b16 %v530, %v529
        %v542 = vpack.c.b16 %v532, %v531
        %v543 = vpack.c.b16 %v534, %v533
        %v544 = vpack.c.b16 %v536, %v535
        %553 = vmatprep.subr.bf16.mxu0 0
        %554 = vmatpush1.bf16.msra.mxu0 %v537
        %555 = vmatprep.subr.bf16.mxu0 0
        %556 = vmatpush1.bf16.msra.mxu0 %v538
        %557 = vmatprep.subr.bf16.mxu0 0
        %558 = vmatpush1.bf16.msra.mxu0 %v539
        %559 = vmatprep.subr.bf16.mxu0 0
        %560 = vmatpush1.bf16.msra.mxu0 %v540
        %561 = vmatprep.subr.bf16.mxu0 0
        %562 = vmatpush1.bf16.msra.mxu0 %v541
        %563 = vmatprep.subr.bf16.mxu0 0
        %564 = vmatpush1.bf16.msra.mxu0 %v542
        %565 = vmatprep.subr.bf16.mxu0 0
        %566 = vmatpush1.bf16.msra.mxu0 %v543
        %567 = vmatprep.subr.bf16.mxu0 0
        %568 = vmatpush1.bf16.msra.mxu0 %v544
        %569 = vmatprep.subr.bf16.mxu0 0
        %570 = vmatpush1.bf16.msra.mxu0 0
        %571 = vmatprep.subr.bf16.mxu0 0
        %572 = vmatpush1.bf16.msra.mxu0 0
        %573 = vmatprep.subr.bf16.mxu0 0
        %574 = vmatpush1.bf16.msra.mxu0 0
        %575 = vmatprep.subr.bf16.mxu0 0
        %576 = vmatpush1.bf16.msra.mxu0 0
        %577 = vmatprep.subr.bf16.mxu0 0
        %578 = vmatpush1.bf16.msra.mxu0 0
        %579 = vmatprep.subr.bf16.mxu0 0
        %580 = vmatpush1.bf16.msra.mxu0 0
        %581 = vmatprep.subr.bf16.mxu0 0
        %582 = vmatpush1.bf16.msra.mxu0 0
        %583 = vmatprep.subr.bf16.mxu0 0
        %584 = vmatpush1.bf16.msra.mxu0 0
        %585 = vmatprep.mubr.bf16.mxu0 0
        %586 = vmatmul.mubr.bf16.gmra.mrb[0].mxu0 %v501
        %v587 = vpop.f32.mrb[0].mxu0
        %v588 = vadd.f32 %v491, %v587
        %v589 = vpop.f32.mrb[0].mxu0
        %v590 = vpop.f32.mrb[0].mxu0
        %v591 = vadd.f32 %v491, %v590
        %v592 = vpop.f32.mrb[0].mxu0
        %593 = vmatprep.mubr.bf16.mxu0 0
        %594 = vmatmul.mubr.bf16.gmra.mrb[0].mxu0 %v502
        %v595 = vpop.f32.mrb[0].mxu0
        %v596 = vadd.f32 %v491, %v595
        %v597 = vpop.f32.mrb[0].mxu0
        %v598 = vpop.f32.mrb[0].mxu0
        %v599 = vadd.f32 %v491, %v598
        %v600 = vpop.f32.mrb[0].mxu0
        %601 = vdwg.mxu0
        %v602 = vmax.f32 %v588, 0.0
        %v603 = vmax.f32 %v591, 0.0
        %v604 = vmax.f32 %v596, 0.0
        %v605 = vmax.f32 %v599, 0.0
        %v606 = vld [vmem:[%s3] sm:$0x1]
        %v607 = vld [vmem:[%s4] sm:$0x1]
        %v608 = vld [vmem:[#allocation7] sm:$0xf]
        %v609 = vld [vmem:[#allocation7 + $0x4] sm:$0xf]
        %v610 = vld [vmem:[#allocation7 + $0x8] sm:$0xf]
        %v611 = vld [vmem:[#allocation7 + $0xc] sm:$0xf]
        %v612 = vld [vmem:[#allocation7 + $0x10] sm:$0xf]
        %v613 = vld [vmem:[#allocation7 + $0x14] sm:$0xf]
        %v614 = vld [vmem:[#allocation7 + $0x18] sm:$0xf]
        %v615 = vld [vmem:[#allocation7 + $0x1c] sm:$0xf]
        %v616 = vld [vmem:[#allocation7 + $0x20] sm:$0xf]
        %v617 = vld [vmem:[#allocation7 + $0x24] sm:$0xf]
        %v618 = vld [vmem:[#allocation7 + $0x28] sm:$0xf]
        %v619 = vld [vmem:[#allocation7 + $0x2c] sm:$0xf]
        %v620 = vld [vmem:[#allocation7 + $0x30] sm:$0xf]
        %v621 = vld [vmem:[#allocation7 + $0x34] sm:$0xf]
        %v622 = vld [vmem:[#allocation7 + $0x38] sm:$0xf]
        %v623 = vld [vmem:[#allocation7 + $0x3c] sm:$0xf]
        %v624 = vld [vmem:[%s6] sm:$0x1]
        %v625 = vld [vmem:[#allocation8] sm:$0xf]
        %v626 = vld [vmem:[#allocation8 + $0x4] sm:$0xf]
        %v627 = vld [vmem:[#allocation8 + $0x8] sm:$0xf]
        %v628 = vld [vmem:[#allocation8 + $0xc] sm:$0xf]
        %v629 = vld [vmem:[#allocation8 + $0x10] sm:$0xf]
        %v630 = vld [vmem:[#allocation8 + $0x14] sm:$0xf]
        %v631 = vld [vmem:[#allocation8 + $0x18] sm:$0xf]
        %v632 = vld [vmem:[#allocation8 + $0x1c] sm:$0xf]
        %v633 = vld [vmem:[#allocation8 + $0x20] sm:$0xf]
        %v634 = vld [vmem:[#allocation8 + $0x24] sm:$0xf]
        %v635 = vld [vmem:[#allocation8 + $0x28] sm:$0xf]
        %v636 = vld [vmem:[#allocation8 + $0x2c] sm:$0xf]
        %v637 = vld [vmem:[#allocation8 + $0x30] sm:$0xf]
        %v638 = vld [vmem:[#allocation8 + $0x34] sm:$0xf]
        %v639 = vld [vmem:[#allocation8 + $0x38] sm:$0xf]
        %v640 = vld [vmem:[#allocation8 + $0x3c] sm:$0xf]
        %v641 = vld [vmem:[%s8] sm:$0x1]
        %642 = vadd.xlane.f32.xlu0 %v602
        %v643 = vpop.xlane.xlu0 %642
        %644 = vadd.xlane.f32.xlu0 %v603
        %v645 = vpop.xlane.xlu0 %644
        %646 = vadd.xlane.f32.xlu0 %v604
        %v647 = vpop.xlane.xlu0 %646
        %648 = vadd.xlane.f32.xlu0 %v605
        %v649 = vpop.xlane.xlu0 %648
        %v650 = vmul.f32 %v643, 0.03125
        %v651 = vmul.f32 %v645, 0.03125
        %v652 = vmul.f32 %v647, 0.03125
        %v653 = vmul.f32 %v649, 0.03125
        %v654 = vsub.f32 %v602, %v650
        %v655 = vsub.f32 %v603, %v651
        %v656 = vsub.f32 %v604, %v652
        %v657 = vsub.f32 %v605, %v653
        %v658 = vmul.f32 %v654, %v654
        %v659 = vmul.f32 %v655, %v655
        %v660 = vmul.f32 %v656, %v656
        %v661 = vmul.f32 %v657, %v657
        %662 = vadd.xlane.f32.xlu0 %v658
        %v663 = vpop.xlane.xlu0 %662
        %664 = vadd.xlane.f32.xlu0 %v659
        %v665 = vpop.xlane.xlu0 %664
        %666 = vadd.xlane.f32.xlu0 %v660
        %v667 = vpop.xlane.xlu0 %666
        %668 = vadd.xlane.f32.xlu0 %v661
        %v669 = vpop.xlane.xlu0 %668
        %v670 = vmul.f32 %v650, 96.0
        %v671 = vmul.f32 %v651, 96.0
        %v672 = vmul.f32 %v652, 96.0
        %v673 = vmul.f32 %v653, 96.0
        %v674 = vmul.f32 %v670, %v650
        %v675 = vmul.f32 %v671, %v651
        %v676 = vmul.f32 %v672, %v652
        %v677 = vmul.f32 %v673, %v653
        %v678 = vsub.f32 %v663, %v674
        %v679 = vsub.f32 %v665, %v675
        %v680 = vsub.f32 %v667, %v676
        %v681 = vsub.f32 %v669, %v677
        %v682 = vmul.f32 %v678, 0.03125
        %v683 = vmul.f32 %v679, 0.03125
        %v684 = vmul.f32 %v680, 0.03125
        %v685 = vmul.f32 %v681, 0.03125
        %v686 = vadd.f32 %v682, 1e-05
        %v687 = vadd.f32 %v683, 1e-05
        %v688 = vadd.f32 %v684, 1e-05
        %v689 = vadd.f32 %v685, 1e-05
        %v690 = vrsqrt.pop %v686
        %v691 = vrsqrt.pop %v687
        %v692 = vrsqrt.pop %v688
        %v693 = vrsqrt.pop %v689
        %v694 = vmul.f32 %v654, %v690
        %v695 = vmul.f32 %v655, %v691
        %v696 = vmul.f32 %v656, %v692
        %v697 = vmul.f32 %v657, %v693
        %v699 = vlaneseq
        %v700 = vshrl.u32 %v699, 7
        %v701 = vsub.s32 0, %v700
        %v702 = vrot.slane %v606, %v701
        %v704 = vmul.f32 %v694, %v702
        %v705 = vmul.f32 %v695, %v702
        %v706 = vmul.f32 %v696, %v702
        %v707 = vmul.f32 %v697, %v702
        %v709 = vlaneseq
        %v710 = vshrl.u32 %v709, 7
        %v711 = vsub.s32 0, %v710
        %v712 = vrot.slane %v607, %v711
        %v714 = vadd.f32 %v704, %v712
        %v715 = vadd.f32 %v705, %v712
        %v716 = vadd.f32 %v706, %v712
        %v717 = vadd.f32 %v707, %v712
        %v718 = vpack.c.bf16 %v715, %v714
        %v719 = vpack.c.bf16 %v717, %v716
        %v721 = vlaneseq
        %v722 = vshrl.u32 %v721, 7
        %v723 = vsub.s32 0, %v722
        %v724 = vrot.slane %v624, %v723
        %v742 = vunpack.c.l.b16 %v608
        %v743 = vunpack.c.l.b16 %v609
        %v744 = vunpack.c.l.b16 %v610
        %v745 = vunpack.c.l.b16 %v611
        %v746 = vunpack.c.l.b16 %v612
        %v747 = vunpack.c.l.b16 %v613
        %v748 = vunpack.c.l.b16 %v614
        %v749 = vunpack.c.l.b16 %v615
        %v750 = vunpack.c.l.b16 %v616
        %v751 = vunpack.c.l.b16 %v617
        %v752 = vunpack.c.l.b16 %v618
        %v753 = vunpack.c.l.b16 %v619
        %v754 = vunpack.c.l.b16 %v620
        %v755 = vunpack.c.l.b16 %v621
        %v756 = vunpack.c.l.b16 %v622
        %v757 = vunpack.c.l.b16 %v623
        %v758 = vpack.c.b16 %v743, %v742
        %v759 = vpack.c.b16 %v745, %v744
        %v760 = vpack.c.b16 %v747, %v746
        %v761 = vpack.c.b16 %v749, %v748
        %v762 = vpack.c.b16 %v751, %v750
        %v763 = vpack.c.b16 %v753, %v752
        %v764 = vpack.c.b16 %v755, %v754
        %v765 = vpack.c.b16 %v757, %v756
        %774 = vmatprep.subr.bf16.mxu0 0
        %775 = vmatpush1.bf16.msra.mxu0 %v758
        %776 = vmatprep.subr.bf16.mxu0 0
        %777 = vmatpush1.bf16.msra.mxu0 %v759
        %778 = vmatprep.subr.bf16.mxu0 0
        %779 = vmatpush1.bf16.msra.mxu0 %v760
        %780 = vmatprep.subr.bf16.mxu0 0
        %781 = vmatpush1.bf16.msra.mxu0 %v761
        %782 = vmatprep.subr.bf16.mxu0 0
        %783 = vmatpush1.bf16.msra.mxu0 %v762
        %784 = vmatprep.subr.bf16.mxu0 0
        %785 = vmatpush1.bf16.msra.mxu0 %v763
        %786 = vmatprep.subr.bf16.mxu0 0
        %787 = vmatpush1.bf16.msra.mxu0 %v764
        %788 = vmatprep.subr.bf16.mxu0 0
        %789 = vmatpush1.bf16.msra.mxu0 %v765
        %790 = vmatprep.subr.bf16.mxu0 0
        %791 = vmatpush1.bf16.msra.mxu0 0
        %792 = vmatprep.subr.bf16.mxu0 0
        %793 = vmatpush1.bf16.msra.mxu0 0
        %794 = vmatprep.subr.bf16.mxu0 0
        %795 = vmatpush1.bf16.msra.mxu0 0
        %796 = vmatprep.subr.bf16.mxu0 0
        %797 = vmatpush1.bf16.msra.mxu0 0
        %798 = vmatprep.subr.bf16.mxu0 0
        %799 = vmatpush1.bf16.msra.mxu0 0
        %800 = vmatprep.subr.bf16.mxu0 0
        %801 = vmatpush1.bf16.msra.mxu0 0
        %802 = vmatprep.subr.bf16.mxu0 0
        %803 = vmatpush1.bf16.msra.mxu0 0
        %804 = vmatprep.subr.bf16.mxu0 0
        %805 = vmatpush1.bf16.msra.mxu0 0
        %806 = vmatprep.mubr.bf16.mxu0 0
        %807 = vmatmul.mubr.bf16.gmra.mrb[0].mxu0 %v718
        %v808 = vpop.f32.mrb[0].mxu0
        %v809 = vadd.f32 %v724, %v808
        %v810 = vpop.f32.mrb[0].mxu0
        %v811 = vpop.f32.mrb[0].mxu0
        %v812 = vadd.f32 %v724, %v811
        %v813 = vpop.f32.mrb[0].mxu0
        %814 = vmatprep.mubr.bf16.mxu0 0
        %815 = vmatmul.mubr.bf16.gmra.mrb[0].mxu0 %v719
        %v816 = vpop.f32.mrb[0].mxu0
        %v817 = vadd.f32 %v724, %v816
        %v818 = vpop.f32.mrb[0].mxu0
        %v819 = vpop.f32.mrb[0].mxu0
        %v820 = vadd.f32 %v724, %v819
        %v821 = vpop.f32.mrb[0].mxu0
        %822 = vdwg.mxu0
        %v823 = vmax.f32 %v809, 0.0
        %v824 = vmax.f32 %v812, 0.0
        %v825 = vmax.f32 %v817, 0.0
        %v826 = vmax.f32 %v820, 0.0
        %v827 = vpack.c.bf16 %v824, %v823
        %v828 = vpack.c.bf16 %v826, %v825
        %v830 = vlaneseq
        %v831 = vshrl.u32 %v830, 7
        %v832 = vsub.s32 0, %v831
        %v833 = vrot.slane %v641, %v832
        %v851 = vunpack.c.l.b16 %v625
        %v852 = vunpack.c.l.b16 %v626
        %v853 = vunpack.c.l.b16 %v627
        %v854 = vunpack.c.l.b16 %v628
        %v855 = vunpack.c.l.b16 %v629
        %v856 = vunpack.c.l.b16 %v630
        %v857 = vunpack.c.l.b16 %v631
        %v858 = vunpack.c.l.b16 %v632
        %v859 = vunpack.c.l.b16 %v633
        %v860 = vunpack.c.l.b16 %v634
        %v861 = vunpack.c.l.b16 %v635
        %v862 = vunpack.c.l.b16 %v636
        %v863 = vunpack.c.l.b16 %v637
        %v864 = vunpack.c.l.b16 %v638
        %v865 = vunpack.c.l.b16 %v639
        %v866 = vunpack.c.l.b16 %v640
        %v867 = vpack.c.b16 %v852, %v851
        %v868 = vpack.c.b16 %v854, %v853
        %v869 = vpack.c.b16 %v856, %v855
        %v870 = vpack.c.b16 %v858, %v857
        %v871 = vpack.c.b16 %v860, %v859
        %v872 = vpack.c.b16 %v862, %v861
        %v873 = vpack.c.b16 %v864, %v863
        %v874 = vpack.c.b16 %v866, %v865
        %883 = vmatprep.subr.bf16.mxu0 0
        %884 = vmatpush1.bf16.msra.mxu0 %v867
        %885 = vmatprep.subr.bf16.mxu0 0
        %886 = vmatpush1.bf16.msra.mxu0 %v868
        %887 = vmatprep.subr.bf16.mxu0 0
        %888 = vmatpush1.bf16.msra.mxu0 %v869
        %889 = vmatprep.subr.bf16.mxu0 0
        %890 = vmatpush1.bf16.msra.mxu0 %v870
        %891 = vmatprep.subr.bf16.mxu0 0
        %892 = vmatpush1.bf16.msra.mxu0 %v871
        %893 = vmatprep.subr.bf16.mxu0 0
        %894 = vmatpush1.bf16.msra.mxu0 %v872
        %895 = vmatprep.subr.bf16.mxu0 0
        %896 = vmatpush1.bf16.msra.mxu0 %v873
        %897 = vmatprep.subr.bf16.mxu0 0
        %898 = vmatpush1.bf16.msra.mxu0 %v874
        %899 = vmatprep.subr.bf16.mxu0 0
        %900 = vmatpush1.bf16.msra.mxu0 0
        %901 = vmatprep.subr.bf16.mxu0 0
        %902 = vmatpush1.bf16.msra.mxu0 0
        %903 = vmatprep.subr.bf16.mxu0 0
        %904 = vmatpush1.bf16.msra.mxu0 0
        %905 = vmatprep.subr.bf16.mxu0 0
        %906 = vmatpush1.bf16.msra.mxu0 0
        %907 = vmatprep.subr.bf16.mxu0 0
        %908 = vmatpush1.bf16.msra.mxu0 0
        %909 = vmatprep.subr.bf16.mxu0 0
        %910 = vmatpush1.bf16.msra.mxu0 0
        %911 = vmatprep.subr.bf16.mxu0 0
        %912 = vmatpush1.bf16.msra.mxu0 0
        %913 = vmatprep.subr.bf16.mxu0 0
        %914 = vmatpush1.bf16.msra.mxu0 0
        %915 = vmatprep.mubr.bf16.mxu0 0
        %916 = vmatmul.mubr.bf16.gmra.mrb[0].mxu0 %v827
        %v917 = vpop.f32.mrb[0].mxu0
        %v918 = vadd.f32 %v833, %v917
        %v919 = vpop.f32.mrb[0].mxu0
        %v920 = vpop.f32.mrb[0].mxu0
        %v921 = vadd.f32 %v833, %v920
        %v922 = vpop.f32.mrb[0].mxu0
        %923 = vmatprep.mubr.bf16.mxu0 0
        %924 = vmatmul.mubr.bf16.gmra.mrb[0].mxu0 %v828
        %v925 = vpop.f32.mrb[0].mxu0
        %v926 = vadd.f32 %v833, %v925
        %v927 = vpop.f32.mrb[0].mxu0
        %v928 = vpop.f32.mrb[0].mxu0
        %v929 = vadd.f32 %v833, %v928
        %v930 = vpop.f32.mrb[0].mxu0
        %931 = vdwg.mxu0
        %v932 = vadd.f32 %v602, %v918
        %v933 = vadd.f32 %v603, %v921
        %v934 = vadd.f32 %v604, %v926
        %v935 = vadd.f32 %v605, %v929
        %s936 = scalar_lea.vmem %s3, 1
        %v937 = vld [vmem:[%s936] sm:$0x1]
        %s938 = scalar_lea.vmem %s4, 1
        %v939 = vld [vmem:[%s938] sm:$0x1]
        %s940 = scalar_lea.vmem [#allocation7], 64
        %v941 = vld [vmem:[%s940] sm:$0xf]
        %v942 = vld [vmem:[%s940 + $0x4] sm:$0xf]
        %v943 = vld [vmem:[%s940 + $0x8] sm:$0xf]
        %v944 = vld [vmem:[%s940 + $0xc] sm:$0xf]
        %v945 = vld [vmem:[%s940 + $0x10] sm:$0xf]
        %v946 = vld [vmem:[%s940 + $0x14] sm:$0xf]
        %v947 = vld [vmem:[%s940 + $0x18] sm:$0xf]
        %v948 = vld [vmem:[%s940 + $0x1c] sm:$0xf]
        %v949 = vld [vmem:[%s940 + $0x20] sm:$0xf]
        %v950 = vld [vmem:[%s940 + $0x24] sm:$0xf]
        %v951 = vld [vmem:[%s940 + $0x28] sm:$0xf]
        %v952 = vld [vmem:[%s940 + $0x2c] sm:$0xf]
        %v953 = vld [vmem:[%s940 + $0x30] sm:$0xf]
        %v954 = vld [vmem:[%s940 + $0x34] sm:$0xf]
        %v955 = vld [vmem:[%s940 + $0x38] sm:$0xf]
        %v956 = vld [vmem:[%s940 + $0x3c] sm:$0xf]
        %s957 = scalar_lea.vmem %s6, 1
        %v958 = vld [vmem:[%s957] sm:$0x1]
        %s959 = scalar_lea.vmem [#allocation8], 64
        %v960 = vld [vmem:[%s959] sm:$0xf]
        %v961 = vld [vmem:[%s959 + $0x4] sm:$0xf]
        %v962 = vld [vmem:[%s959 + $0x8] sm:$0xf]
        %v963 = vld [vmem:[%s959 + $0xc] sm:$0xf]
        %v964 = vld [vmem:[%s959 + $0x10] sm:$0xf]
        %v965 = vld [vmem:[%s959 + $0x14] sm:$0xf]
        %v966 = vld [vmem:[%s959 + $0x18] sm:$0xf]
        %v967 = vld [vmem:[%s959 + $0x1c] sm:$0xf]
        %v968 = vld [vmem:[%s959 + $0x20] sm:$0xf]
        %v969 = vld [vmem:[%s959 + $0x24] sm:$0xf]
        %v970 = vld [vmem:[%s959 + $0x28] sm:$0xf]
        %v971 = vld [vmem:[%s959 + $0x2c] sm:$0xf]
        %v972 = vld [vmem:[%s959 + $0x30] sm:$0xf]
        %v973 = vld [vmem:[%s959 + $0x34] sm:$0xf]
        %v974 = vld [vmem:[%s959 + $0x38] sm:$0xf]
        %v975 = vld [vmem:[%s959 + $0x3c] sm:$0xf]
        %s976 = scalar_lea.vmem %s8, 1
        %v977 = vld [vmem:[%s976] sm:$0x1]
        %978 = vadd.xlane.f32.xlu0 %v932
        %v979 = vpop.xlane.xlu0 %978
        %980 = vadd.xlane.f32.xlu0 %v933
        %v981 = vpop.xlane.xlu0 %980
        %982 = vadd.xlane.f32.xlu0 %v934
        %v983 = vpop.xlane.xlu0 %982
        %984 = vadd.xlane.f32.xlu0 %v935
        %v985 = vpop.xlane.xlu0 %984
        %v986 = vmul.f32 %v979, 0.03125
        %v987 = vmul.f32 %v981, 0.03125
        %v988 = vmul.f32 %v983, 0.03125
        %v989 = vmul.f32 %v985, 0.03125
        %v990 = vsub.f32 %v932, %v986
        %v991 = vsub.f32 %v933, %v987
        %v992 = vsub.f32 %v934, %v988
        %v993 = vsub.f32 %v935, %v989
        %v994 = vmul.f32 %v990, %v990
        %v995 = vmul.f32 %v991, %v991
        %v996 = vmul.f32 %v992, %v992
        %v997 = vmul.f32 %v993, %v993
        %998 = vadd.xlane.f32.xlu0 %v994
        %v999 = vpop.xlane.xlu0 %998
        %1000 = vadd.xlane.f32.xlu0 %v995
        %v1001 = vpop.xlane.xlu0 %1000
        %1002 = vadd.xlane.f32.xlu0 %v996
        %v1003 = vpop.xlane.xlu0 %1002
        %1004 = vadd.xlane.f32.xlu0 %v997
        %v1005 = vpop.xlane.xlu0 %1004
        %v1006 = vmul.f32 %v986, 96.0
        %v1007 = vmul.f32 %v987, 96.0
        %v1008 = vmul.f32 %v988, 96.0
        %v1009 = vmul.f32 %v989, 96.0
        %v1010 = vmul.f32 %v1006, %v986
        %v1011 = vmul.f32 %v1007, %v987
        %v1012 = vmul.f32 %v1008, %v988
        %v1013 = vmul.f32 %v1009, %v989
        %v1014 = vsub.f32 %v999, %v1010
        %v1015 = vsub.f32 %v1001, %v1011
        %v1016 = vsub.f32 %v1003, %v1012
        %v1017 = vsub.f32 %v1005, %v1013
        %v1018 = vmul.f32 %v1014, 0.03125
        %v1019 = vmul.f32 %v1015, 0.03125
        %v1020 = vmul.f32 %v1016, 0.03125
        %v1021 = vmul.f32 %v1017, 0.03125
        %v1022 = vadd.f32 %v1018, 1e-05
        %v1023 = vadd.f32 %v1019, 1e-05
        %v1024 = vadd.f32 %v1020, 1e-05
        %v1025 = vadd.f32 %v1021, 1e-05
        %v1026 = vrsqrt.pop %v1022
        %v1027 = vrsqrt.pop %v1023
        %v1028 = vrsqrt.pop %v1024
        %v1029 = vrsqrt.pop %v1025
        %v1030 = vmul.f32 %v990, %v1026
        %v1031 = vmul.f32 %v991, %v1027
        %v1032 = vmul.f32 %v992, %v1028
        %v1033 = vmul.f32 %v993, %v1029
        %v1035 = vlaneseq
        %v1036 = vshrl.u32 %v1035, 7
        %v1037 = vsub.s32 0, %v1036
        %v1038 = vrot.slane %v937, %v1037
        %v1040 = vmul.f32 %v1030, %v1038
        %v1041 = vmul.f32 %v1031, %v1038
        %v1042 = vmul.f32 %v1032, %v1038
        %v1043 = vmul.f32 %v1033, %v1038
        %v1045 = vlaneseq
        %v1046 = vshrl.u32 %v1045, 7
        %v1047 = vsub.s32 0, %v1046
        %v1048 = vrot.slane %v939, %v1047
        %v1050 = vadd.f32 %v1040, %v1048
        %v1051 = vadd.f32 %v1041, %v1048
        %v1052 = vadd.f32 %v1042, %v1048
        %v1053 = vadd.f32 %v1043, %v1048
        %v1054 = vpack.c.bf16 %v1051, %v1050
        %v1055 = vpack.c.bf16 %v1053, %v1052
        %v1057 = vlaneseq
        %v1058 = vshrl.u32 %v1057, 7
        %v1059 = vsub.s32 0, %v1058
        %v1060 = vrot.slane %v958, %v1059
        %v1078 = vunpack.c.l.b16 %v941
        %v1079 = vunpack.c.l.b16 %v942
        %v1080 = vunpack.c.l.b16 %v943
        %v1081 = vunpack.c.l.b16 %v944
        %v1082 = vunpack.c.l.b16 %v945
        %v1083 = vunpack.c.l.b16 %v946
        %v1084 = vunpack.c.l.b16 %v947
        %v1085 = vunpack.c.l.b16 %v948
        %v1086 = vunpack.c.l.b16 %v949
        %v1087 = vunpack.c.l.b16 %v950
        %v1088 = vunpack.c.l.b16 %v951
        %v1089 = vunpack.c.l.b16 %v952
        %v1090 = vunpack.c.l.b16 %v953
        %v1091 = vunpack.c.l.b16 %v954
        %v1092 = vunpack.c.l.b16 %v955
        %v1093 = vunpack.c.l.b16 %v956
        %v1094 = vpack.c.b16 %v1079, %v1078
        %v1095 = vpack.c.b16 %v1081, %v1080
        %v1096 = vpack.c.b16 %v1083, %v1082
        %v1097 = vpack.c.b16 %v1085, %v1084
        %v1098 = vpack.c.b16 %v1087, %v1086
        %v1099 = vpack.c.b16 %v1089, %v1088
        %v1100 = vpack.c.b16 %v1091, %v1090
        %v1101 = vpack.c.b16 %v1093, %v1092
        %1110 = vmatprep.subr.bf16.mxu0 0
        %1111 = vmatpush1.bf16.msra.mxu0 %v1094
        %1112 = vmatprep.subr.bf16.mxu0 0
        %1113 = vmatpush1.bf16.msra.mxu0 %v1095
        %1114 = vmatprep.subr.bf16.mxu0 0
        %1115 = vmatpush1.bf16.msra.mxu0 %v1096
        %1116 = vmatprep.subr.bf16.mxu0 0
        %1117 = vmatpush1.bf16.msra.mxu0 %v1097
        %1118 = vmatprep.subr.bf16.mxu0 0
        %1119 = vmatpush1.bf16.msra.mxu0 %v1098
        %1120 = vmatprep.subr.bf16.mxu0 0
        %1121 = vmatpush1.bf16.msra.mxu0 %v1099
        %1122 = vmatprep.subr.bf16.mxu0 0
        %1123 = vmatpush1.bf16.msra.mxu0 %v1100
        %1124 = vmatprep.subr.bf16.mxu0 0
        %1125 = vmatpush1.bf16.msra.mxu0 %v1101
        %1126 = vmatprep.subr.bf16.mxu0 0
        %1127 = vmatpush1.bf16.msra.mxu0 0
        %1128 = vmatprep.subr.bf16.mxu0 0
        %1129 = vmatpush1.bf16.msra.mxu0 0
        %1130 = vmatprep.subr.bf16.mxu0 0
        %1131 = vmatpush1.bf16.msra.mxu0 0
        %1132 = vmatprep.subr.bf16.mxu0 0
        %1133 = vmatpush1.bf16.msra.mxu0 0
        %1134 = vmatprep.subr.bf16.mxu0 0
        %1135 = vmatpush1.bf16.msra.mxu0 0
        %1136 = vmatprep.subr.bf16.mxu0 0
        %1137 = vmatpush1.bf16.msra.mxu0 0
        %1138 = vmatprep.subr.bf16.mxu0 0
        %1139 = vmatpush1.bf16.msra.mxu0 0
        %1140 = vmatprep.subr.bf16.mxu0 0
        %1141 = vmatpush1.bf16.msra.mxu0 0
        %1142 = vmatprep.mubr.bf16.mxu0 0
        %1143 = vmatmul.mubr.bf16.gmra.mrb[0].mxu0 %v1054
        %v1144 = vpop.f32.mrb[0].mxu0
        %v1145 = vadd.f32 %v1060, %v1144
        %v1146 = vpop.f32.mrb[0].mxu0
        %v1147 = vpop.f32.mrb[0].mxu0
        %v1148 = vadd.f32 %v1060, %v1147
        %v1149 = vpop.f32.mrb[0].mxu0
        %1150 = vmatprep.mubr.bf16.mxu0 0
        %1151 = vmatmul.mubr.bf16.gmra.mrb[0].mxu0 %v1055
        %v1152 = vpop.f32.mrb[0].mxu0
        %v1153 = vadd.f32 %v1060, %v1152
        %v1154 = vpop.f32.mrb[0].mxu0
        %v1155 = vpop.f32.mrb[0].mxu0
        %v1156 = vadd.f32 %v1060, %v1155
        %v1157 = vpop.f32.mrb[0].mxu0
        %1158 = vdwg.mxu0
        %v1159 = vmax.f32 %v1145, 0.0
        %v1160 = vmax.f32 %v1148, 0.0
        %v1161 = vmax.f32 %v1153, 0.0
        %v1162 = vmax.f32 %v1156, 0.0
        %v1163 = vpack.c.bf16 %v1160, %v1159
        %v1164 = vpack.c.bf16 %v1162, %v1161
        %v1166 = vlaneseq
        %v1167 = vshrl.u32 %v1166, 7
        %v1168 = vsub.s32 0, %v1167
        %v1169 = vrot.slane %v977, %v1168
        %v1187 = vunpack.c.l.b16 %v960
        %v1188 = vunpack.c.l.b16 %v961
        %v1189 = vunpack.c.l.b16 %v962
        %v1190 = vunpack.c.l.b16 %v963
        %v1191 = vunpack.c.l.b16 %v964
        %v1192 = vunpack.c.l.b16 %v965
        %v1193 = vunpack.c.l.b16 %v966
        %v1194 = vunpack.c.l.b16 %v967
        %v1195 = vunpack.c.l.b16 %v968
        %v1196 = vunpack.c.l.b16 %v969
        %v1197 = vunpack.c.l.b16 %v970
        %v1198 = vunpack.c.l.b16 %v971
        %v1199 = vunpack.c.l.b16 %v972
        %v1200 = vunpack.c.l.b16 %v973
        %v1201 = vunpack.c.l.b16 %v974
        %v1202 = vunpack.c.l.b16 %v975
        %v1203 = vpack.c.b16 %v1188, %v1187
        %v1204 = vpack.c.b16 %v1190, %v1189
        %v1205 = vpack.c.b16 %v1192, %v1191
        %v1206 = vpack.c.b16 %v1194, %v1193
        %v1207 = vpack.c.b16 %v1196, %v1195
        %v1208 = vpack.c.b16 %v1198, %v1197
        %v1209 = vpack.c.b16 %v1200, %v1199
        %v1210 = vpack.c.b16 %v1202, %v1201
        %1219 = vmatprep.subr.bf16.mxu0 0
        %1220 = vmatpush1.bf16.msra.mxu0 %v1203
        %1221 = vmatprep.subr.bf16.mxu0 0
        %1222 = vmatpush1.bf16.msra.mxu0 %v1204
        %1223 = vmatprep.subr.bf16.mxu0 0
        %1224 = vmatpush1.bf16.msra.mxu0 %v1205
        %1225 = vmatprep.subr.bf16.mxu0 0
        %1226 = vmatpush1.bf16.msra.mxu0 %v1206
        %1227 = vmatprep.subr.bf16.mxu0 0
        %1228 = vmatpush1.bf16.msra.mxu0 %v1207
        %1229 = vmatprep.subr.bf16.mxu0 0
        %1230 = vmatpush1.bf16.msra.mxu0 %v1208
        %1231 = vmatprep.subr.bf16.mxu0 0
        %1232 = vmatpush1.bf16.msra.mxu0 %v1209
        %1233 = vmatprep.subr.bf16.mxu0 0
        %1234 = vmatpush1.bf16.msra.mxu0 %v1210
        %1235 = vmatprep.subr.bf16.mxu0 0
        %1236 = vmatpush1.bf16.msra.mxu0 0
        %1237 = vmatprep.subr.bf16.mxu0 0
        %1238 = vmatpush1.bf16.msra.mxu0 0
        %1239 = vmatprep.subr.bf16.mxu0 0
        %1240 = vmatpush1.bf16.msra.mxu0 0
        %1241 = vmatprep.subr.bf16.mxu0 0
        %1242 = vmatpush1.bf16.msra.mxu0 0
        %1243 = vmatprep.subr.bf16.mxu0 0
        %1244 = vmatpush1.bf16.msra.mxu0 0
        %1245 = vmatprep.subr.bf16.mxu0 0
        %1246 = vmatpush1.bf16.msra.mxu0 0
        %1247 = vmatprep.subr.bf16.mxu0 0
        %1248 = vmatpush1.bf16.msra.mxu0 0
        %1249 = vmatprep.subr.bf16.mxu0 0
        %1250 = vmatpush1.bf16.msra.mxu0 0
        %1251 = vmatprep.mubr.bf16.mxu0 0
        %1252 = vmatmul.mubr.bf16.gmra.mrb[0].mxu0 %v1163
        %v1253 = vpop.f32.mrb[0].mxu0
        %v1254 = vadd.f32 %v1169, %v1253
        %v1255 = vpop.f32.mrb[0].mxu0
        %v1256 = vpop.f32.mrb[0].mxu0
        %v1257 = vadd.f32 %v1169, %v1256
        %v1258 = vpop.f32.mrb[0].mxu0
        %1259 = vmatprep.mubr.bf16.mxu0 0
        %1260 = vmatmul.mubr.bf16.gmra.mrb[0].mxu0 %v1164
        %v1261 = vpop.f32.mrb[0].mxu0
        %v1262 = vadd.f32 %v1169, %v1261
        %v1263 = vpop.f32.mrb[0].mxu0
        %v1264 = vpop.f32.mrb[0].mxu0
        %v1265 = vadd.f32 %v1169, %v1264
        %v1266 = vpop.f32.mrb[0].mxu0
        %1267 = vdwg.mxu0
        %v1268 = vadd.f32 %v932, %v1254
        %v1269 = vadd.f32 %v933, %v1257
        %v1270 = vadd.f32 %v934, %v1262
        %v1271 = vadd.f32 %v935, %v1265
        %v1272 = vpack.c.bf16 %v1269, %v1268
        %v1273 = vpack.c.bf16 %v1271, %v1270
        %v1274 = vld [vmem:[#allocation10] sm:$0xf]
        %v1275 = vld [vmem:[#allocation10 + $0x4] sm:$0xf]
        %v1276 = vld [vmem:[#allocation10 + $0x8] sm:$0xf]
        %v1277 = vld [vmem:[#allocation10 + $0xc] sm:$0xf]
        %v1278 = vld [vmem:[#allocation10 + $0x10] sm:$0xf]
        %v1279 = vld [vmem:[#allocation10 + $0x14] sm:$0xf]
        %v1280 = vld [vmem:[#allocation10 + $0x18] sm:$0xf]
        %v1281 = vld [vmem:[#allocation10 + $0x1c] sm:$0xf]
        %v1282 = vld [vmem:[#allocation10 + $0x20] sm:$0xf]
        %v1283 = vld [vmem:[#allocation10 + $0x24] sm:$0xf]
        %v1284 = vld [vmem:[#allocation10 + $0x28] sm:$0xf]
        %v1285 = vld [vmem:[#allocation10 + $0x2c] sm:$0xf]
        %v1286 = vld [vmem:[#allocation10 + $0x30] sm:$0xf]
        %v1287 = vld [vmem:[#allocation10 + $0x34] sm:$0xf]
        %v1288 = vld [vmem:[#allocation10 + $0x38] sm:$0xf]
        %v1289 = vld [vmem:[#allocation10 + $0x3c] sm:$0xf]
        %v1290 = vld [vmem:[%s10] sm:$0x1]
        %v1292 = vlaneseq
        %v1293 = vshrl.u32 %v1292, 7
        %v1294 = vsub.s32 0, %v1293
        %v1295 = vrot.slane %v1290, %v1294
        %v1313 = vunpack.c.l.b16 %v1274
        %v1314 = vunpack.c.l.b16 %v1275
        %v1315 = vunpack.c.l.b16 %v1276
        %v1316 = vunpack.c.l.b16 %v1277
        %v1317 = vunpack.c.l.b16 %v1278
        %v1318 = vunpack.c.l.b16 %v1279
        %v1319 = vunpack.c.l.b16 %v1280
        %v1320 = vunpack.c.l.b16 %v1281
        %v1321 = vunpack.c.l.b16 %v1282
        %v1322 = vunpack.c.l.b16 %v1283
        %v1323 = vunpack.c.l.b16 %v1284
        %v1324 = vunpack.c.l.b16 %v1285
        %v1325 = vunpack.c.l.b16 %v1286
        %v1326 = vunpack.c.l.b16 %v1287
        %v1327 = vunpack.c.l.b16 %v1288
        %v1328 = vunpack.c.l.b16 %v1289
        %v1329 = vpack.c.b16 %v1314, %v1313
        %v1330 = vpack.c.b16 %v1316, %v1315
        %v1331 = vpack.c.b16 %v1318, %v1317
        %v1332 = vpack.c.b16 %v1320, %v1319
        %v1333 = vpack.c.b16 %v1322, %v1321
        %v1334 = vpack.c.b16 %v1324, %v1323
        %v1335 = vpack.c.b16 %v1326, %v1325
        %v1336 = vpack.c.b16 %v1328, %v1327
        %1345 = vmatprep.subr.bf16.mxu0 0
        %1346 = vmatpush1.bf16.msra.mxu0 %v1329
        %1347 = vmatprep.subr.bf16.mxu0 0
        %1348 = vmatpush1.bf16.msra.mxu0 %v1330
        %1349 = vmatprep.subr.bf16.mxu0 0
        %1350 = vmatpush1.bf16.msra.mxu0 %v1331
        %1351 = vmatprep.subr.bf16.mxu0 0
        %1352 = vmatpush1.bf16.msra.mxu0 %v1332
        %1353 = vmatprep.subr.bf16.mxu0 0
        %1354 = vmatpush1.bf16.msra.mxu0 %v1333
        %1355 = vmatprep.subr.bf16.mxu0 0
        %1356 = vmatpush1.bf16.msra.mxu0 %v1334
        %1357 = vmatprep.subr.bf16.mxu0 0
        %1358 = vmatpush1.bf16.msra.mxu0 %v1335
        %1359 = vmatprep.subr.bf16.mxu0 0
        %1360 = vmatpush1.bf16.msra.mxu0 %v1336
        %1361 = vmatprep.subr.bf16.mxu0 0
        %1362 = vmatpush1.bf16.msra.mxu0 0
        %1363 = vmatprep.subr.bf16.mxu0 0
        %1364 = vmatpush1.bf16.msra.mxu0 0
        %1365 = vmatprep.subr.bf16.mxu0 0
        %1366 = vmatpush1.bf16.msra.mxu0 0
        %1367 = vmatprep.subr.bf16.mxu0 0
        %1368 = vmatpush1.bf16.msra.mxu0 0
        %1369 = vmatprep.subr.bf16.mxu0 0
        %1370 = vmatpush1.bf16.msra.mxu0 0
        %1371 = vmatprep.subr.bf16.mxu0 0
        %1372 = vmatpush1.bf16.msra.mxu0 0
        %1373 = vmatprep.subr.bf16.mxu0 0
        %1374 = vmatpush1.bf16.msra.mxu0 0
        %1375 = vmatprep.subr.bf16.mxu0 0
        %1376 = vmatpush1.bf16.msra.mxu0 0
        %1377 = vmatprep.mubr.bf16.mxu0 0
        %1378 = vmatmul.mubr.bf16.gmra.mrb[0].mxu0 %v1272
        %v1379 = vpop.f32.mrb[0].mxu0
        %v1380 = vadd.f32 %v1295, %v1379
        %v1381 = vpop.f32.mrb[0].mxu0
        %v1382 = vpop.f32.mrb[0].mxu0
        %v1383 = vadd.f32 %v1295, %v1382
        %v1384 = vpop.f32.mrb[0].mxu0
        %1385 = vmatprep.mubr.bf16.mxu0 0
        %1386 = vmatmul.mubr.bf16.gmra.mrb[0].mxu0 %v1273
        %v1387 = vpop.f32.mrb[0].mxu0
        %v1388 = vadd.f32 %v1295, %v1387
        %v1389 = vpop.f32.mrb[0].mxu0
        %v1390 = vpop.f32.mrb[0].mxu0
        %v1391 = vadd.f32 %v1295, %v1390
        %v1392 = vpop.f32.mrb[0].mxu0
        %1393 = vdwg.mxu0
        %1394 = vst [vmem:[%s462] sm:$0xff] %v1380
        %1395 = vst [vmem:[%s462 + $0x8] sm:$0xff] %v1383
        %1396 = vst [vmem:[%s462 + $0x10] sm:$0xff] %v1388
        %1397 = vst [vmem:[%s462 + $0x18] sm:$0xff] %v1391
        %s1398 = sand.u32 %s274, 1
        %s1399 = scalar_lea.sflag [#allocation4], %s1398
        %s1400 = sand.u32 %s274, 1
        %s1401 = smul.addr %s1400, 32
        %s1402 = scalar_lea.vmem [#allocation11], %s1401
        // Predicated region
        $region85: #{tpu_custom_call.1} parent=63 // pred_check
          %p1403 = pneg %p284
        $region86: #{tpu_custom_call.1} parent=63 // pred_check_branch
          %1405 = sbr.rel (%p1403) target = $region88
        $region87: #{tpu_custom_call.1} parent=63 // pred_region
          %s1406 = smul.u32 4, %s30
          %s1408 = ssub.s32 512, 512
          %1409 = vsyncadd %s1399, %s1408
          %s1410 = smul.addr %s1406, 128
          %s1411 = scalar_lea.hbm %s11, %s1410
          %s1412 = sshll.u32 %s1402, 4
          %s1413 = int_to_ptr.vmem [resolvable:$true] %s1412
          %1418 = dma.vmem_to_hbm [thread:$0]  %s1413, 512, %s1411, %s1399, 128, 128, 8
        $region88: #{tpu_custom_call.1} parent=63 // pred_fallthru
          _
      $region64: #{tpu_custom_call.1} parent=5 // pred_fallthru
        _
      %p1419 = scmp.le.s32.totalorder 2, %s25
      // Predicated region
      $region89: #{tpu_custom_call.1} parent=5 // pred_check
        %p1420 = pneg %p1419
      $region90: #{tpu_custom_call.1} parent=5 // pred_check_branch
        %1422 = sbr.rel (%p1420) target = $region92
      $region91: #{tpu_custom_call.1} parent=5 // pred_region
        %s1423 = ssub.s32 %s25, 2
        // Predicated region
        $region93: #{tpu_custom_call.1} parent=91 // pred_check
          %p1424 = pneg %p290
        $region94: #{tpu_custom_call.1} parent=91 // pred_check_branch
          %1426 = sbr.rel (%p1424) target = $region96
        $region95: #{tpu_custom_call.1} parent=91 // pred_region
          %s1427 = sand.u32 %s275, 1
          %s1428 = scalar_lea.sflag [#allocation4], %s1427
          %s1429 = sand.u32 %s275, 1
          %s1430 = smul.addr %s1429, 32
          %s1431 = scalar_lea.vmem [#allocation11], %s1430
          %1432 = dma.done %s1428, 512
        $region96: #{tpu_custom_call.1} parent=91 // pred_fallthru
          _
      $region92: #{tpu_custom_call.1} parent=5 // pred_fallthru
        _
    $region6: #{tpu_custom_call.1} parent=1 // loop_footer
      %s29 = sadd.s32 1, %s25
    $region7: #{tpu_custom_call.1} parent=1 // loop_footer_branch
      %24 = sbr.rel target = $region3
    $region8: #{tpu_custom_call.1} parent=1 // loop_exit
      _
    %1433 = vsyncpa [#allocation3], 1
    %s1434 = scalar_lea.sflag [#allocation3], 1
    %1435 = vsyncpa %s1434, 1
    %1436 = vsyncpa [#allocation6], 1
    %1437 = vsyncpa [#allocation9], 1
    %1438 = vsyncpa [#allocation4], 1
    %s1439 = scalar_lea.sflag [#allocation4], 1
    %1440 = vsyncpa %s1439, 1

</llo_original>
